<compile_context>
chip_gen: v7x
topology: tpu7x:2x2x1
jax: 0.10.0
libtpu: 0.0.40
codegen_flags: <defaults>
</compile_context>

<pallas_src>
import functools

import jax
import jax.numpy as jnp
from jax.experimental import pallas as pl
from jax.experimental.pallas import tpu as pltpu


def _round_up(n, m):
    return ((n + m - 1) // m) * m


def identity_kernel(x_ref, wc_ref, bc_ref,
                    w1_ref, b1_ref,
                    w2_ref, b2_ref,
                    w3_ref, b3_ref,
                    out_ref):
    # --- conv1: (1,200) kernel over [B,1,S,200] == dot along EMB axis -------
    # x may be stored in bf16 (HBM traffic cut); upcast to f32 for the VPU
    # multiply + lane reduce (v5e has no bf16 VPU, and we want f32 accuracy).
    x = x_ref[...].astype(jnp.float32)                 # [TB, S, E]
    wc = wc_ref[...]                                   # [1, 1, E]  (f32)
    h0 = jnp.sum(x * wc, axis=-1) + bc_ref[0, 0]       # [TB, S]
    h0 = jnp.maximum(h0, 0.0)                          # ReLU (self.act)

    # --- fc1 + ReLU (dropout p=0.0 is a no-op) ------------------------------
    w1 = w1_ref[...].astype(jnp.float32)
    h1 = jnp.dot(h0, w1, preferred_element_type=jnp.float32)
    h1 = jnp.maximum(h1 + b1_ref[...], 0.0)            # [TB, 512]

    # --- fc2 + ReLU ----------------------------------------------------------
    w2 = w2_ref[...].astype(jnp.float32)
    h2 = jnp.dot(h1, w2, preferred_element_type=jnp.float32)
    h2 = jnp.maximum(h2 + b2_ref[...], 0.0)            # [TB, Hp]

    # --- fc3 -----------------------------------------------------------------
    w3 = w3_ref[...].astype(jnp.float32)
    out = jnp.dot(h2, w3, preferred_element_type=jnp.float32)
    out_ref[...] = out + b3_ref[...]                   # [TB, Op]


def prepare_params(params, *, weight_dtype=jnp.float32):
    """One-time parameter prep (pad/reshape/cast). Call once, reuse."""
    wc, bc, w1, b1, w2, b2, w3, b3 = params
    h_dim = w2.shape[1]
    out_dim = w3.shape[1]
    Hp = _round_up(h_dim, 128)      # 100 -> 128 : lane-dense fc2/fc3 tiles
    Op = _round_up(out_dim, 128)    # 10  -> 128 : unmasked output stores

    # Zero padding keeps the math exact: padded fc2 columns are relu(0+0)=0
    # and meet zero rows of the padded w3; padded output columns are sliced
    # off in identity_forward.
    wcp = wc.reshape(1, 1, -1).astype(jnp.float32)                 # conv weight (tiny): f32
    bcp = bc.reshape(1, 1).astype(jnp.float32)                     # conv bias scalar (SMEM)
    w1p = w1.astype(weight_dtype)                                  # [S, 512]
    b1r = b1.reshape(1, -1).astype(jnp.float32)                    # [1, 512]
    w2p = jnp.pad(w2, ((0, 0), (0, Hp - h_dim))).astype(weight_dtype)
    b2p = jnp.pad(b2.reshape(1, -1), ((0, 0), (0, Hp - h_dim))).astype(jnp.float32)
    w3p = jnp.pad(w3, ((0, Hp - h_dim), (0, Op - out_dim))).astype(weight_dtype)
    b3p = jnp.pad(b3.reshape(1, -1), ((0, 0), (0, Op - out_dim))).astype(jnp.float32)
    return (wcp, bcp, w1p, b1r, w2p, b2p, w3p, b3p)


def identity_forward(x, prepped, *, out_dim, batch_tile=None):
    """x: [B, S, E] (f32 or bf16 storage). prepped: output of prepare_params."""
    B, S, E = x.shape
    wcp, bcp, w1p, b1r, w2p, b2p, w3p, b3p = prepped
    Hp = w2p.shape[1]
    Op = w3p.shape[1]

    # Tile sizing: collapse the grid at small B (no per-step overhead); cap at
    # 128 so double-buffered x stays comfortably inside v7x's 64 MiB VMEM.
    if batch_tile is None:
        batch_tile = min(_round_up(B, 8), 128)
    TB = batch_tile
    Bp = _round_up(B, TB)
    if Bp != B:
        x = jnp.pad(x, ((0, Bp - B), (0, 0), (0, 0)))  # batch pad only (rare)

    def resident(shape):
        # Weights: constant block index => fetched once, stay VMEM-resident.
        return pl.BlockSpec(shape, lambda i, _s=shape: tuple(0 for _ in _s))

    # Advisory cost estimate so XLA can overlap this tiny custom call with the
    # trunk producing x.
    flops = 2 * Bp * (S * E + S * 512 + 512 * Hp + Hp * Op)
    param_bytes = sum(int(p.size) * p.dtype.itemsize
                      for p in (wcp, bcp, w1p, b1r, w2p, b2p, w3p, b3p))
    bytes_accessed = (Bp * S * E * x.dtype.itemsize + param_bytes + Bp * Op * 4)
    cost = pl.CostEstimate(flops=int(flops), transcendentals=0,
                           bytes_accessed=int(bytes_accessed))

    # Raise the scoped-VMEM limit only when the footprint actually needs it
    # (double-buffered x + resident weights + out); the B=16 default path does
    # not set it at all.
    x_tile_bytes = TB * S * E * x.dtype.itemsize
    out_tile_bytes = TB * Op * 4
    need = 2 * (x_tile_bytes + out_tile_bytes) + param_bytes + (2 << 20)
    cp_kwargs = dict(dimension_semantics=("parallel",))
    if need > (30 << 20):
        cp_kwargs["vmem_limit_bytes"] = int(need)

    out = pl.pallas_call(
        identity_kernel,
        out_shape=jax.ShapeDtypeStruct((Bp, Op), jnp.float32),
        grid=(Bp // TB,),
        in_specs=[
            # Full last dims (S, E) — E=200 equals the array dim, so no 128-pad
            # is required and no wrapper-side jnp.pad HBM pass is paid.
            pl.BlockSpec((TB, S, E), lambda i: (i, 0, 0)),        # x (batch-tiled)
            resident((1, 1, E)),                                  # conv1.weight
            pl.BlockSpec(memory_space=pltpu.MemorySpace.SMEM),    # conv1.bias (scalar)
            resident((S, 512)),                                   # fc1.weight.T
            resident((1, 512)),                                   # fc1.bias
            resident((512, Hp)),                                  # fc2.weight.T
            resident((1, Hp)),                                    # fc2.bias
            resident((Hp, Op)),                                   # fc3.weight.T
            resident((1, Op)),                                    # fc3.bias
        ],
        out_specs=pl.BlockSpec((TB, Op), lambda i: (i, 0)),
        compiler_params=pltpu.CompilerParams(**cp_kwargs),
        cost_estimate=cost,
    )(x, wcp, bcp, w1p, b1r, w2p, b2p, w3p, b3p)

    return out[:B, :out_dim]


def make_params(key, seq_len, emb, h_dim, out_dim):
    ks = jax.random.split(key, 8)
    scale = 0.05
    wc = scale * jax.random.normal(ks[0], (1, 1, emb), jnp.float32)       # conv1.weight
    bc = scale * jax.random.normal(ks[1], (1, 1), jnp.float32)            # conv1.bias
    w1 = scale * jax.random.normal(ks[2], (seq_len, 512), jnp.float32)    # fc1.weight.T
    b1 = scale * jax.random.normal(ks[3], (1, 512), jnp.float32)          # fc1.bias
    w2 = scale * jax.random.normal(ks[4], (512, h_dim), jnp.float32)      # fc2.weight.T
    b2 = scale * jax.random.normal(ks[5], (1, h_dim), jnp.float32)        # fc2.bias
    w3 = scale * jax.random.normal(ks[6], (h_dim, out_dim), jnp.float32)  # fc3.weight.T
    b3 = scale * jax.random.normal(ks[7], (1, out_dim), jnp.float32)      # fc3.bias
    return (wc, bc, w1, b1, w2, b2, w3, b3)


def reference_forward(x, params, *, storage_dtype=jnp.float32):
    """Pure-JAX reference. storage_dtype emulates bf16 storage (math in f32)."""
    wc, bc, w1, b1, w2, b2, w3, b3 = params
    cast = lambda a: a.astype(storage_dtype).astype(jnp.float32)
    x = cast(x)
    w1, w2, w3 = cast(w1), cast(w2), cast(w3)
    h0 = jnp.maximum(jnp.einsum("bse,e->bs", x, wc[0, 0]) + bc[0, 0], 0.0)
    h1 = jnp.maximum(h0 @ w1 + b1, 0.0)
    h2 = jnp.maximum(h1 @ w2 + b2, 0.0)
    return h2 @ w3 + b3


if __name__ == "__main__":
    B, SEQ_LEN, EMB = 16, 128, 200   # conv kernel width fixed at 200 by the module
    H_DIM, OUT_DIM = 100, 10

    key = jax.random.PRNGKey(0)
    kx, kp = jax.random.split(key)
    x = jax.random.normal(kx, (B, SEQ_LEN, EMB), jnp.float32)
    params = make_params(kp, SEQ_LEN, EMB, H_DIM, OUT_DIM)

    # ---- f32 storage path: exact match vs. the PyTorch-style f32 reference ----
    prepped_f32 = prepare_params(params, weight_dtype=jnp.float32)
    out_f32 = jax.block_until_ready(identity_forward(x, prepped_f32, out_dim=OUT_DIM))
    ref_f32 = reference_forward(x, params)
    assert out_f32.shape == (B, OUT_DIM)
    assert jnp.allclose(out_f32, ref_f32, atol=1e-4, rtol=1e-4)

    # ---- bf16 storage path: halves HBM bytes for x / fc weights; math stays f32
    # inside the kernel, so it matches a reference built from the same
    # bf16-stored tensors.
    prepped_bf16 = prepare_params(params, weight_dtype=jnp.bfloat16)
    x_bf16 = x.astype(jnp.bfloat16)
    out_bf16 = jax.block_until_ready(identity_forward(x_bf16, prepped_bf16, out_dim=OUT_DIM))
    ref_bf16 = reference_forward(x, params, storage_dtype=jnp.bfloat16)
    assert out_bf16.shape == (B, OUT_DIM)
    assert jnp.allclose(out_bf16, ref_bf16, atol=1e-3, rtol=1e-3)

    print("KERNEL_OK")
</pallas_src>

<mosaic_0001>
module attributes {stable_mosaic.version = 11 : i64} {
  func.func @identity_kernel(%arg0: i32, %arg1: memref<16x128x200xf32, #tpu.memory_space<vmem>>, %arg2: memref<1x1x200xf32, #tpu.memory_space<vmem>>, %arg3: memref<1x1xf32, #tpu.memory_space<smem>>, %arg4: memref<128x512xf32, #tpu.memory_space<vmem>>, %arg5: memref<1x512xf32, #tpu.memory_space<vmem>>, %arg6: memref<512x128xf32, #tpu.memory_space<vmem>>, %arg7: memref<1x128xf32, #tpu.memory_space<vmem>>, %arg8: memref<128x128xf32, #tpu.memory_space<vmem>>, %arg9: memref<1x128xf32, #tpu.memory_space<vmem>>, %arg10: memref<16x128xf32, #tpu.memory_space<vmem>>) attributes {dimension_semantics = [#tpu.dimension_semantics<parallel>], iteration_bounds = array<i64: 1>, scalar_prefetch = 0 : i64, scratch_operands = 0 : i64, tpu.core_type = #tpu.core_type<tc>, window_params = [{transform_indices = @transform_0, window_bounds = array<i64: 16, 128, 200>}, {pipeline_mode = #tpu.pipeline_mode<synchronous>, transform_indices = @transform_1, window_bounds = array<i64: 1, 1, 200>}, {transform_indices = @transform_2, window_bounds = array<i64: 1, 1>}, {pipeline_mode = #tpu.pipeline_mode<synchronous>, transform_indices = @transform_3, window_bounds = array<i64: 128, 512>}, {pipeline_mode = #tpu.pipeline_mode<synchronous>, transform_indices = @transform_4, window_bounds = array<i64: 1, 512>}, {pipeline_mode = #tpu.pipeline_mode<synchronous>, transform_indices = @transform_5, window_bounds = array<i64: 512, 128>}, {pipeline_mode = #tpu.pipeline_mode<synchronous>, transform_indices = @transform_6, window_bounds = array<i64: 1, 128>}, {pipeline_mode = #tpu.pipeline_mode<synchronous>, transform_indices = @transform_7, window_bounds = array<i64: 128, 128>}, {pipeline_mode = #tpu.pipeline_mode<synchronous>, transform_indices = @transform_8, window_bounds = array<i64: 1, 128>}, {transform_indices = @transform_9, window_bounds = array<i64: 16, 128>}]} {
    %c0 = arith.constant 0 : index
    %c0_0 = arith.constant 0 : index
    %c0_1 = arith.constant 0 : index
    %0 = vector.load %arg1[%c0, %c0_0, %c0_1] : memref<16x128x200xf32, #tpu.memory_space<vmem>>, vector<16x128x200xf32>
    %c0_2 = arith.constant 0 : index
    %c0_3 = arith.constant 0 : index
    %c0_4 = arith.constant 0 : index
    %1 = vector.load %arg2[%c0_2, %c0_3, %c0_4] : memref<1x1x200xf32, #tpu.memory_space<vmem>>, vector<1x1x200xf32>
    %2 = vector.broadcast %1 : vector<1x1x200xf32> to vector<16x128x200xf32>
    %3 = arith.mulf %0, %2 : vector<16x128x200xf32>
    %cst = arith.constant dense<0.000000e+00> : vector<16x128xf32>
    %4 = vector.multi_reduction <add>, %3, %cst [2] : vector<16x128x200xf32> to vector<16x128xf32>
    %c0_5 = arith.constant 0 : index
    %c0_6 = arith.constant 0 : index
    %5 = memref.load %arg3[%c0_5, %c0_6] : memref<1x1xf32, #tpu.memory_space<smem>>
    %6 = vector.broadcast %5 : f32 to vector<16x128xf32>
    %7 = arith.addf %4, %6 : vector<16x128xf32>
    %cst_7 = arith.constant 0.000000e+00 : f32
    %8 = vector.broadcast %cst_7 : f32 to vector<16x128xf32>
    %9 = arith.maximumf %7, %8 : vector<16x128xf32>
    %c0_8 = arith.constant 0 : index
    %c0_9 = arith.constant 0 : index
    %10 = vector.load %arg4[%c0_8, %c0_9] : memref<128x512xf32, #tpu.memory_space<vmem>>, vector<128x512xf32>
    %cst_10 = arith.constant dense<0.000000e+00> : vector<16x512xf32>
    %11 = tpu.matmul %9, %10, %cst_10 {dimension_numbers = #tpu.dot_dimension_numbers<[1], [0], [0], [1], [0, 0, 1, 1], [], []>} : vector<16x128xf32>, vector<128x512xf32>, vector<16x512xf32> -> vector<16x512xf32>
    %c0_11 = arith.constant 0 : index
    %c0_12 = arith.constant 0 : index
    %12 = vector.load %arg5[%c0_11, %c0_12] : memref<1x512xf32, #tpu.memory_space<vmem>>, vector<1x512xf32>
    %13 = vector.broadcast %12 : vector<1x512xf32> to vector<16x512xf32>
    %14 = arith.addf %11, %13 : vector<16x512xf32>
    %cst_13 = arith.constant 0.000000e+00 : f32
    %15 = vector.broadcast %cst_13 : f32 to vector<16x512xf32>
    %16 = arith.maximumf %14, %15 : vector<16x512xf32>
    %c0_14 = arith.constant 0 : index
    %c0_15 = arith.constant 0 : index
    %17 = vector.load %arg6[%c0_14, %c0_15] : memref<512x128xf32, #tpu.memory_space<vmem>>, vector<512x128xf32>
    %cst_16 = arith.constant dense<0.000000e+00> : vector<16x128xf32>
    %18 = tpu.matmul %16, %17, %cst_16 {dimension_numbers = #tpu.dot_dimension_numbers<[1], [0], [0], [1], [0, 0, 1, 1], [], []>} : vector<16x512xf32>, vector<512x128xf32>, vector<16x128xf32> -> vector<16x128xf32>
    %c0_17 = arith.constant 0 : index
    %c0_18 = arith.constant 0 : index
    %19 = vector.load %arg7[%c0_17, %c0_18] : memref<1x128xf32, #tpu.memory_space<vmem>>, vector<1x128xf32>
    %20 = vector.broadcast %19 : vector<1x128xf32> to vector<16x128xf32>
    %21 = arith.addf %18, %20 : vector<16x128xf32>
    %cst_19 = arith.constant 0.000000e+00 : f32
    %22 = vector.broadcast %cst_19 : f32 to vector<16x128xf32>
    %23 = arith.maximumf %21, %22 : vector<16x128xf32>
    %c0_20 = arith.constant 0 : index
    %c0_21 = arith.constant 0 : index
    %24 = vector.load %arg8[%c0_20, %c0_21] : memref<128x128xf32, #tpu.memory_space<vmem>>, vector<128x128xf32>
    %cst_22 = arith.constant dense<0.000000e+00> : vector<16x128xf32>
    %25 = tpu.matmul %23, %24, %cst_22 {dimension_numbers = #tpu.dot_dimension_numbers<[1], [0], [0], [1], [0, 0, 1, 1], [], []>} : vector<16x128xf32>, vector<128x128xf32>, vector<16x128xf32> -> vector<16x128xf32>
    %c0_23 = arith.constant 0 : index
    %c0_24 = arith.constant 0 : index
    %26 = vector.load %arg9[%c0_23, %c0_24] : memref<1x128xf32, #tpu.memory_space<vmem>>, vector<1x128xf32>
    %27 = vector.broadcast %26 : vector<1x128xf32> to vector<16x128xf32>
    %28 = arith.addf %25, %27 : vector<16x128xf32>
    %c0_25 = arith.constant 0 : index
    %c0_26 = arith.constant 0 : index
    %29 = vector.load %arg10[%c0_25, %c0_26] : memref<16x128xf32, #tpu.memory_space<vmem>>, vector<16x128xf32>
    tpu.vector_store %arg10[%c0_25, %c0_26], %28 {strides = array<i32>} : memref<16x128xf32, #tpu.memory_space<vmem>>, vector<16x128xf32>,
    return
  }
  func.func @transform_0(%arg0: i32) -> (i32, i32, i32) {
    %c0_i32 = arith.constant 0 : i32
    %c0_i32_0 = arith.constant 0 : i32
    %c0_i32_1 = arith.constant 0 : i32
    return %arg0, %c0_i32, %c0_i32_0 : i32, i32, i32
  }
  func.func @transform_1(%arg0: i32) -> (i32, i32, i32) {
    %c0_i32 = arith.constant 0 : i32
    %c0_i32_0 = arith.constant 0 : i32
    %c0_i32_1 = arith.constant 0 : i32
    %c0_i32_2 = arith.constant 0 : i32
    return %c0_i32, %c0_i32_0, %c0_i32_1 : i32, i32, i32
  }
  func.func @transform_2(%arg0: i32) -> (i32, i32) {
    %c0_i32 = arith.constant 0 : i32
    %c0_i32_0 = arith.constant 0 : i32
    %c0_i32_1 = arith.constant 0 : i32
    return %c0_i32, %c0_i32_0 : i32, i32
  }
  func.func @transform_3(%arg0: i32) -> (i32, i32) {
    %c0_i32 = arith.constant 0 : i32
    %c0_i32_0 = arith.constant 0 : i32
    %c0_i32_1 = arith.constant 0 : i32
    return %c0_i32, %c0_i32_0 : i32, i32
  }
  func.func @transform_4(%arg0: i32) -> (i32, i32) {
    %c0_i32 = arith.constant 0 : i32
    %c0_i32_0 = arith.constant 0 : i32
    %c0_i32_1 = arith.constant 0 : i32
    return %c0_i32, %c0_i32_0 : i32, i32
  }
  func.func @transform_5(%arg0: i32) -> (i32, i32) {
    %c0_i32 = arith.constant 0 : i32
    %c0_i32_0 = arith.constant 0 : i32
    %c0_i32_1 = arith.constant 0 : i32
    return %c0_i32, %c0_i32_0 : i32, i32
  }
  func.func @transform_6(%arg0: i32) -> (i32, i32) {
    %c0_i32 = arith.constant 0 : i32
    %c0_i32_0 = arith.constant 0 : i32
    %c0_i32_1 = arith.constant 0 : i32
    return %c0_i32, %c0_i32_0 : i32, i32
  }
  func.func @transform_7(%arg0: i32) -> (i32, i32) {
    %c0_i32 = arith.constant 0 : i32
    %c0_i32_0 = arith.constant 0 : i32
    %c0_i32_1 = arith.constant 0 : i32
    return %c0_i32, %c0_i32_0 : i32, i32
  }
  func.func @transform_8(%arg0: i32) -> (i32, i32) {
    %c0_i32 = arith.constant 0 : i32
    %c0_i32_0 = arith.constant 0 : i32
    %c0_i32_1 = arith.constant 0 : i32
    return %c0_i32, %c0_i32_0 : i32, i32
  }
  func.func @transform_9(%arg0: i32) -> (i32, i32) {
    %c0_i32 = arith.constant 0 : i32
    %c0_i32_0 = arith.constant 0 : i32
    return %arg0, %c0_i32 : i32, i32
  }
}

</mosaic_0001>

<llo_original>
// kernel: tpu_custom_call.1
$region0: #{tpu_custom_call.1}
  #allocation0 [shape = 'u32[]', space=smem, size = 0x4, offset = 0x4, fixed_abs, tag = 'smem constant byte address 0x4 - core index']
  #allocation1 [shape = 'u32[144,128]{1,0:T(1,128)}', space=vmem, size = 0x12000, scoped, tag = 'internal scratch']
  #allocation2 [shape = 'f32[1,1]{1,0:T(1,128)S(6)}', space=smem, size = 0x200, scoped, tag = 'scoped memory for tpu_custom_call.1']
  %s0 = inlined_call_operand.vmem [shape: f32[16,128,200], index: 0, kind: input, shape index: {}]
  %s1 = inlined_call_operand.vmem [shape: f32[1,1,200], index: 1, kind: input, shape index: {}]
  %s2 = inlined_call_operand.<no memory space> [shape: f32[1,1], index: 2, kind: input, shape index: {}]
  %s3 = inlined_call_operand.vmem [shape: f32[128,512], index: 3, kind: input, shape index: {}]
  %s4 = inlined_call_operand.vmem [shape: f32[1,512], index: 4, kind: input, shape index: {}]
  %s5 = inlined_call_operand.vmem [shape: f32[512,128], index: 5, kind: input, shape index: {}]
  %s6 = inlined_call_operand.vmem [shape: f32[1,128], index: 6, kind: input, shape index: {}]
  %s7 = inlined_call_operand.vmem [shape: f32[128,128], index: 7, kind: input, shape index: {}]
  %s8 = inlined_call_operand.vmem [shape: f32[1,128], index: 8, kind: input, shape index: {}]
  %s9 = inlined_call_operand.hbm [shape: f32[16,128], index: 9, kind: output, shape index: {}]
  %s10 = sld [smem:[#allocation0]]
  $region46: #{tpu_custom_call.1} parent=0
    _
  %s12 = ssub.s32 1, %s10
  %s13 = scalar_select 0, %s12, %s10
  %14 = sst [smem:[#allocation2]] %s2
  $region1: #{tpu_custom_call.1} parent=0
    #allocation3 [shape = 'u8[8192]{0}', space=vmem, size = 0x2000, scoped, tag = 'output window, operand 0, single buffered']
    #allocation4 [shape = 's32[1]{0}', space=sflag, size = 0x4, scoped, tag = 'scoped memory for tpu_custom_call.1']
    %15 = vsyncpa [#allocation4], 0
    // Predicated region
    $region2: #{tpu_custom_call.1} parent=1 // pred_check
      _
    $region3: #{tpu_custom_call.1} parent=1 // pred_check_branch
      %17 = sbr.rel (0) target = $region5
    $region4: #{tpu_custom_call.1} parent=1 // pred_region
      _
    $region5: #{tpu_custom_call.1} parent=1 // pred_fallthru
      _
    // Predicated region
    $region6: #{tpu_custom_call.1} parent=1 // pred_check
      _
    $region7: #{tpu_custom_call.1} parent=1 // pred_check_branch
      %19 = sbr.rel (0) target = $region9
    $region8: #{tpu_custom_call.1} parent=1 // pred_region
      _
    $region9: #{tpu_custom_call.1} parent=1 // pred_fallthru
      _
    // Predicated region
    $region10: #{tpu_custom_call.1} parent=1 // pred_check
      _
    $region11: #{tpu_custom_call.1} parent=1 // pred_check_branch
      %21 = sbr.rel (0) target = $region13
    $region12: #{tpu_custom_call.1} parent=1 // pred_region
      _
    $region13: #{tpu_custom_call.1} parent=1 // pred_fallthru
      _
    // Predicated region
    $region14: #{tpu_custom_call.1} parent=1 // pred_check
      _
    $region15: #{tpu_custom_call.1} parent=1 // pred_check_branch
      %23 = sbr.rel (0) target = $region17
    $region16: #{tpu_custom_call.1} parent=1 // pred_region
      _
    $region17: #{tpu_custom_call.1} parent=1 // pred_fallthru
      _
    // Predicated region
    $region18: #{tpu_custom_call.1} parent=1 // pred_check
      _
    $region19: #{tpu_custom_call.1} parent=1 // pred_check_branch
      %25 = sbr.rel (0) target = $region21
    $region20: #{tpu_custom_call.1} parent=1 // pred_region
      _
    $region21: #{tpu_custom_call.1} parent=1 // pred_fallthru
      _
    // Predicated region
    $region22: #{tpu_custom_call.1} parent=1 // pred_check
      _
    $region23: #{tpu_custom_call.1} parent=1 // pred_check_branch
      %27 = sbr.rel (0) target = $region25
    $region24: #{tpu_custom_call.1} parent=1 // pred_region
      _
    $region25: #{tpu_custom_call.1} parent=1 // pred_fallthru
      _
    // Predicated region
    $region26: #{tpu_custom_call.1} parent=1 // pred_check
      _
    $region27: #{tpu_custom_call.1} parent=1 // pred_check_branch
      %29 = sbr.rel (0) target = $region29
    $region28: #{tpu_custom_call.1} parent=1 // pred_region
      _
    $region29: #{tpu_custom_call.1} parent=1 // pred_fallthru
      _
    // Predicated region
    $region30: #{tpu_custom_call.1} parent=1 // pred_check
      _
    $region31: #{tpu_custom_call.1} parent=1 // pred_check_branch
      %31 = sbr.rel (0) target = $region33
    $region32: #{tpu_custom_call.1} parent=1 // pred_region
      _
    $region33: #{tpu_custom_call.1} parent=1 // pred_fallthru
      _
    // Predicated region
    $region34: #{tpu_custom_call.1} parent=1 // pred_check
      _
    $region35: #{tpu_custom_call.1} parent=1 // pred_check_branch
      %33 = sbr.rel (0) target = $region37
    $region36: #{tpu_custom_call.1} parent=1 // pred_region
      _
    $region37: #{tpu_custom_call.1} parent=1 // pred_fallthru
      _
    %v34 = vld [vmem:[%s0] sm:$0xff]
    %v35 = vld [vmem:[%s0 + $0x8] sm:$0xff]
    %v36 = vld [vmem:[%s0 + $0x10] sm:$0xff]
    %v37 = vld [vmem:[%s0 + $0x18] sm:$0xff]
    %v38 = vld [vmem:[%s0 + $0x20] sm:$0xff]
    %v39 = vld [vmem:[%s0 + $0x28] sm:$0xff]
    %v40 = vld [vmem:[%s0 + $0x30] sm:$0xff]
    %v41 = vld [vmem:[%s0 + $0x38] sm:$0xff]
    %v42 = vld [vmem:[%s0 + $0x40] sm:$0xff]
    %v43 = vld [vmem:[%s0 + $0x48] sm:$0xff]
    %v44 = vld [vmem:[%s0 + $0x50] sm:$0xff]
    %v45 = vld [vmem:[%s0 + $0x58] sm:$0xff]
    %v46 = vld [vmem:[%s0 + $0x60] sm:$0xff]
    %v47 = vld [vmem:[%s0 + $0x68] sm:$0xff]
    %v48 = vld [vmem:[%s0 + $0x70] sm:$0xff]
    %v49 = vld [vmem:[%s0 + $0x78] sm:$0xff]
    %v50 = vld [vmem:[%s0 + $0x80] sm:$0xff]
    %v51 = vld [vmem:[%s0 + $0x88] sm:$0xff]
    %v52 = vld [vmem:[%s0 + $0x90] sm:$0xff]
    %v53 = vld [vmem:[%s0 + $0x98] sm:$0xff]
    %v54 = vld [vmem:[%s0 + $0xa0] sm:$0xff]
    %v55 = vld [vmem:[%s0 + $0xa8] sm:$0xff]
    %v56 = vld [vmem:[%s0 + $0xb0] sm:$0xff]
    %v57 = vld [vmem:[%s0 + $0xb8] sm:$0xff]
    %v58 = vld [vmem:[%s0 + $0xc0] sm:$0xff]
    %v59 = vld [vmem:[%s0 + $0xc8] sm:$0xff]
    %v60 = vld [vmem:[%s0 + $0xd0] sm:$0xff]
    %v61 = vld [vmem:[%s0 + $0xd8] sm:$0xff]
    %v62 = vld [vmem:[%s0 + $0xe0] sm:$0xff]
    %v63 = vld [vmem:[%s0 + $0xe8] sm:$0xff]
    %v64 = vld [vmem:[%s0 + $0xf0] sm:$0xff]
    %v65 = vld [vmem:[%s0 + $0xf8] sm:$0xff]
    %v66 = vld [vmem:[%s0 + $0x100] sm:$0xff]
    %v67 = vld [vmem:[%s0 + $0x108] sm:$0xff]
    %v68 = vld [vmem:[%s0 + $0x110] sm:$0xff]
    %v69 = vld [vmem:[%s0 + $0x118] sm:$0xff]
    %v70 = vld [vmem:[%s0 + $0x120] sm:$0xff]
    %v71 = vld [vmem:[%s0 + $0x128] sm:$0xff]
    %v72 = vld [vmem:[%s0 + $0x130] sm:$0xff]
    %v73 = vld [vmem:[%s0 + $0x138] sm:$0xff]
    %v74 = vld [vmem:[%s0 + $0x140] sm:$0xff]
    %v75 = vld [vmem:[%s0 + $0x148] sm:$0xff]
    %v76 = vld [vmem:[%s0 + $0x150] sm:$0xff]
    %v77 = vld [vmem:[%s0 + $0x158] sm:$0xff]
    %v78 = vld [vmem:[%s0 + $0x160] sm:$0xff]
    %v79 = vld [vmem:[%s0 + $0x168] sm:$0xff]
    %v80 = vld [vmem:[%s0 + $0x170] sm:$0xff]
    %v81 = vld [vmem:[%s0 + $0x178] sm:$0xff]
    %v82 = vld [vmem:[%s0 + $0x180] sm:$0xff]
    %v83 = vld [vmem:[%s0 + $0x188] sm:$0xff]
    %v84 = vld [vmem:[%s0 + $0x190] sm:$0xff]
    %v85 = vld [vmem:[%s0 + $0x198] sm:$0xff]
    %v86 = vld [vmem:[%s0 + $0x1a0] sm:$0xff]
    %v87 = vld [vmem:[%s0 + $0x1a8] sm:$0xff]
    %v88 = vld [vmem:[%s0 + $0x1b0] sm:$0xff]
    %v89 = vld [vmem:[%s0 + $0x1b8] sm:$0xff]
    %v90 = vld [vmem:[%s0 + $0x1c0] sm:$0xff]
    %v91 = vld [vmem:[%s0 + $0x1c8] sm:$0xff]
    %v92 = vld [vmem:[%s0 + $0x1d0] sm:$0xff]
    %v93 = vld [vmem:[%s0 + $0x1d8] sm:$0xff]
    %v94 = vld [vmem:[%s0 + $0x1e0] sm:$0xff]
    %v95 = vld [vmem:[%s0 + $0x1e8] sm:$0xff]
    %v96 = vld [vmem:[%s0 + $0x1f0] sm:$0xff]
    %v97 = vld [vmem:[%s0 + $0x1f8] sm:$0xff]
    %v98 = vld [vmem:[%s0 + $0x200] sm:$0xff]
    %v99 = vld [vmem:[%s0 + $0x208] sm:$0xff]
    %v100 = vld [vmem:[%s0 + $0x210] sm:$0xff]
    %v101 = vld [vmem:[%s0 + $0x218] sm:$0xff]
    %v102 = vld [vmem:[%s0 + $0x220] sm:$0xff]
    %v103 = vld [vmem:[%s0 + $0x228] sm:$0xff]
    %v104 = vld [vmem:[%s0 + $0x230] sm:$0xff]
    %v105 = vld [vmem:[%s0 + $0x238] sm:$0xff]
    %v106 = vld [vmem:[%s0 + $0x240] sm:$0xff]
    %v107 = vld [vmem:[%s0 + $0x248] sm:$0xff]
    %v108 = vld [vmem:[%s0 + $0x250] sm:$0xff]
    %v109 = vld [vmem:[%s0 + $0x258] sm:$0xff]
    %v110 = vld [vmem:[%s0 + $0x260] sm:$0xff]
    %v111 = vld [vmem:[%s0 + $0x268] sm:$0xff]
    %v112 = vld [vmem:[%s0 + $0x270] sm:$0xff]
    %v113 = vld [vmem:[%s0 + $0x278] sm:$0xff]
    %v114 = vld [vmem:[%s0 + $0x280] sm:$0xff]
    %v115 = vld [vmem:[%s0 + $0x288] sm:$0xff]
    %v116 = vld [vmem:[%s0 + $0x290] sm:$0xff]
    %v117 = vld [vmem:[%s0 + $0x298] sm:$0xff]
    %v118 = vld [vmem:[%s0 + $0x2a0] sm:$0xff]
    %v119 = vld [vmem:[%s0 + $0x2a8] sm:$0xff]
    %v120 = vld [vmem:[%s0 + $0x2b0] sm:$0xff]
    %v121 = vld [vmem:[%s0 + $0x2b8] sm:$0xff]
    %v122 = vld [vmem:[%s0 + $0x2c0] sm:$0xff]
    %v123 = vld [vmem:[%s0 + $0x2c8] sm:$0xff]
    %v124 = vld [vmem:[%s0 + $0x2d0] sm:$0xff]
    %v125 = vld [vmem:[%s0 + $0x2d8] sm:$0xff]
    %v126 = vld [vmem:[%s0 + $0x2e0] sm:$0xff]
    %v127 = vld [vmem:[%s0 + $0x2e8] sm:$0xff]
    %v128 = vld [vmem:[%s0 + $0x2f0] sm:$0xff]
    %v129 = vld [vmem:[%s0 + $0x2f8] sm:$0xff]
    %v130 = vld [vmem:[%s0 + $0x300] sm:$0xff]
    %v131 = vld [vmem:[%s0 + $0x308] sm:$0xff]
    %v132 = vld [vmem:[%s0 + $0x310] sm:$0xff]
    %v133 = vld [vmem:[%s0 + $0x318] sm:$0xff]
    %v134 = vld [vmem:[%s0 + $0x320] sm:$0xff]
    %v135 = vld [vmem:[%s0 + $0x328] sm:$0xff]
    %v136 = vld [vmem:[%s0 + $0x330] sm:$0xff]
    %v137 = vld [vmem:[%s0 + $0x338] sm:$0xff]
    %v138 = vld [vmem:[%s0 + $0x340] sm:$0xff]
    %v139 = vld [vmem:[%s0 + $0x348] sm:$0xff]
    %v140 = vld [vmem:[%s0 + $0x350] sm:$0xff]
    %v141 = vld [vmem:[%s0 + $0x358] sm:$0xff]
    %v142 = vld [vmem:[%s0 + $0x360] sm:$0xff]
    %v143 = vld [vmem:[%s0 + $0x368] sm:$0xff]
    %v144 = vld [vmem:[%s0 + $0x370] sm:$0xff]
    %v145 = vld [vmem:[%s0 + $0x378] sm:$0xff]
    %v146 = vld [vmem:[%s0 + $0x380] sm:$0xff]
    %v147 = vld [vmem:[%s0 + $0x388] sm:$0xff]
    %v148 = vld [vmem:[%s0 + $0x390] sm:$0xff]
    %v149 = vld [vmem:[%s0 + $0x398] sm:$0xff]
    %v150 = vld [vmem:[%s0 + $0x3a0] sm:$0xff]
    %v151 = vld [vmem:[%s0 + $0x3a8] sm:$0xff]
    %v152 = vld [vmem:[%s0 + $0x3b0] sm:$0xff]
    %v153 = vld [vmem:[%s0 + $0x3b8] sm:$0xff]
    %v154 = vld [vmem:[%s0 + $0x3c0] sm:$0xff]
    %v155 = vld [vmem:[%s0 + $0x3c8] sm:$0xff]
    %v156 = vld [vmem:[%s0 + $0x3d0] sm:$0xff]
    %v157 = vld [vmem:[%s0 + $0x3d8] sm:$0xff]
    %v158 = vld [vmem:[%s0 + $0x3e0] sm:$0xff]
    %v159 = vld [vmem:[%s0 + $0x3e8] sm:$0xff]
    %v160 = vld [vmem:[%s0 + $0x3f0] sm:$0xff]
    %v161 = vld [vmem:[%s0 + $0x3f8] sm:$0xff]
    %v162 = vld [vmem:[%s0 + $0x400] sm:$0xff]
    %v163 = vld [vmem:[%s0 + $0x408] sm:$0xff]
    %v164 = vld [vmem:[%s0 + $0x410] sm:$0xff]
    %v165 = vld [vmem:[%s0 + $0x418] sm:$0xff]
    %v166 = vld [vmem:[%s0 + $0x420] sm:$0xff]
    %v167 = vld [vmem:[%s0 + $0x428] sm:$0xff]
    %v168 = vld [vmem:[%s0 + $0x430] sm:$0xff]
    %v169 = vld [vmem:[%s0 + $0x438] sm:$0xff]
    %v170 = vld [vmem:[%s0 + $0x440] sm:$0xff]
    %v171 = vld [vmem:[%s0 + $0x448] sm:$0xff]
    %v172 = vld [vmem:[%s0 + $0x450] sm:$0xff]
    %v173 = vld [vmem:[%s0 + $0x458] sm:$0xff]
    %v174 = vld [vmem:[%s0 + $0x460] sm:$0xff]
    %v175 = vld [vmem:[%s0 + $0x468] sm:$0xff]
    %v176 = vld [vmem:[%s0 + $0x470] sm:$0xff]
    %v177 = vld [vmem:[%s0 + $0x478] sm:$0xff]
    %v178 = vld [vmem:[%s0 + $0x480] sm:$0xff]
    %v179 = vld [vmem:[%s0 + $0x488] sm:$0xff]
    %v180 = vld [vmem:[%s0 + $0x490] sm:$0xff]
    %v181 = vld [vmem:[%s0 + $0x498] sm:$0xff]
    %v182 = vld [vmem:[%s0 + $0x4a0] sm:$0xff]
    %v183 = vld [vmem:[%s0 + $0x4a8] sm:$0xff]
    %v184 = vld [vmem:[%s0 + $0x4b0] sm:$0xff]
    %v185 = vld [vmem:[%s0 + $0x4b8] sm:$0xff]
    %v186 = vld [vmem:[%s0 + $0x4c0] sm:$0xff]
    %v187 = vld [vmem:[%s0 + $0x4c8] sm:$0xff]
    %v188 = vld [vmem:[%s0 + $0x4d0] sm:$0xff]
    %v189 = vld [vmem:[%s0 + $0x4d8] sm:$0xff]
    %v190 = vld [vmem:[%s0 + $0x4e0] sm:$0xff]
    %v191 = vld [vmem:[%s0 + $0x4e8] sm:$0xff]
    %v192 = vld [vmem:[%s0 + $0x4f0] sm:$0xff]
    %v193 = vld [vmem:[%s0 + $0x4f8] sm:$0xff]
    %v194 = vld [vmem:[%s0 + $0x500] sm:$0xff]
    %v195 = vld [vmem:[%s0 + $0x508] sm:$0xff]
    %v196 = vld [vmem:[%s0 + $0x510] sm:$0xff]
    %v197 = vld [vmem:[%s0 + $0x518] sm:$0xff]
    %v198 = vld [vmem:[%s0 + $0x520] sm:$0xff]
    %v199 = vld [vmem:[%s0 + $0x528] sm:$0xff]
    %v200 = vld [vmem:[%s0 + $0x530] sm:$0xff]
    %v201 = vld [vmem:[%s0 + $0x538] sm:$0xff]
    %v202 = vld [vmem:[%s0 + $0x540] sm:$0xff]
    %v203 = vld [vmem:[%s0 + $0x548] sm:$0xff]
    %v204 = vld [vmem:[%s0 + $0x550] sm:$0xff]
    %v205 = vld [vmem:[%s0 + $0x558] sm:$0xff]
    %v206 = vld [vmem:[%s0 + $0x560] sm:$0xff]
    %v207 = vld [vmem:[%s0 + $0x568] sm:$0xff]
    %v208 = vld [vmem:[%s0 + $0x570] sm:$0xff]
    %v209 = vld [vmem:[%s0 + $0x578] sm:$0xff]
    %v210 = vld [vmem:[%s0 + $0x580] sm:$0xff]
    %v211 = vld [vmem:[%s0 + $0x588] sm:$0xff]
    %v212 = vld [vmem:[%s0 + $0x590] sm:$0xff]
    %v213 = vld [vmem:[%s0 + $0x598] sm:$0xff]
    %v214 = vld [vmem:[%s0 + $0x5a0] sm:$0xff]
    %v215 = vld [vmem:[%s0 + $0x5a8] sm:$0xff]
    %v216 = vld [vmem:[%s0 + $0x5b0] sm:$0xff]
    %v217 = vld [vmem:[%s0 + $0x5b8] sm:$0xff]
    %v218 = vld [vmem:[%s0 + $0x5c0] sm:$0xff]
    %v219 = vld [vmem:[%s0 + $0x5c8] sm:$0xff]
    %v220 = vld [vmem:[%s0 + $0x5d0] sm:$0xff]
    %v221 = vld [vmem:[%s0 + $0x5d8] sm:$0xff]
    %v222 = vld [vmem:[%s0 + $0x5e0] sm:$0xff]
    %v223 = vld [vmem:[%s0 + $0x5e8] sm:$0xff]
    %v224 = vld [vmem:[%s0 + $0x5f0] sm:$0xff]
    %v225 = vld [vmem:[%s0 + $0x5f8] sm:$0xff]
    %v226 = vld [vmem:[%s0 + $0x600] sm:$0xff]
    %v227 = vld [vmem:[%s0 + $0x608] sm:$0xff]
    %v228 = vld [vmem:[%s0 + $0x610] sm:$0xff]
    %v229 = vld [vmem:[%s0 + $0x618] sm:$0xff]
    %v230 = vld [vmem:[%s0 + $0x620] sm:$0xff]
    %v231 = vld [vmem:[%s0 + $0x628] sm:$0xff]
    %v232 = vld [vmem:[%s0 + $0x630] sm:$0xff]
    %v233 = vld [vmem:[%s0 + $0x638] sm:$0xff]
    %v234 = vld [vmem:[%s0 + $0x640] sm:$0xff]
    %v235 = vld [vmem:[%s0 + $0x648] sm:$0xff]
    %v236 = vld [vmem:[%s0 + $0x650] sm:$0xff]
    %v237 = vld [vmem:[%s0 + $0x658] sm:$0xff]
    %v238 = vld [vmem:[%s0 + $0x660] sm:$0xff]
    %v239 = vld [vmem:[%s0 + $0x668] sm:$0xff]
    %v240 = vld [vmem:[%s0 + $0x670] sm:$0xff]
    %v241 = vld [vmem:[%s0 + $0x678] sm:$0xff]
    %v242 = vld [vmem:[%s0 + $0x680] sm:$0xff]
    %v243 = vld [vmem:[%s0 + $0x688] sm:$0xff]
    %v244 = vld [vmem:[%s0 + $0x690] sm:$0xff]
    %v245 = vld [vmem:[%s0 + $0x698] sm:$0xff]
    %v246 = vld [vmem:[%s0 + $0x6a0] sm:$0xff]
    %v247 = vld [vmem:[%s0 + $0x6a8] sm:$0xff]
    %v248 = vld [vmem:[%s0 + $0x6b0] sm:$0xff]
    %v249 = vld [vmem:[%s0 + $0x6b8] sm:$0xff]
    %v250 = vld [vmem:[%s0 + $0x6c0] sm:$0xff]
    %v251 = vld [vmem:[%s0 + $0x6c8] sm:$0xff]
    %v252 = vld [vmem:[%s0 + $0x6d0] sm:$0xff]
    %v253 = vld [vmem:[%s0 + $0x6d8] sm:$0xff]
    %v254 = vld [vmem:[%s0 + $0x6e0] sm:$0xff]
    %v255 = vld [vmem:[%s0 + $0x6e8] sm:$0xff]
    %v256 = vld [vmem:[%s0 + $0x6f0] sm:$0xff]
    %v257 = vld [vmem:[%s0 + $0x6f8] sm:$0xff]
    %v258 = vld [vmem:[%s0 + $0x700] sm:$0xff]
    %v259 = vld [vmem:[%s0 + $0x708] sm:$0xff]
    %v260 = vld [vmem:[%s0 + $0x710] sm:$0xff]
    %v261 = vld [vmem:[%s0 + $0x718] sm:$0xff]
    %v262 = vld [vmem:[%s0 + $0x720] sm:$0xff]
    %v263 = vld [vmem:[%s0 + $0x728] sm:$0xff]
    %v264 = vld [vmem:[%s0 + $0x730] sm:$0xff]
    %v265 = vld [vmem:[%s0 + $0x738] sm:$0xff]
    %v266 = vld [vmem:[%s0 + $0x740] sm:$0xff]
    %v267 = vld [vmem:[%s0 + $0x748] sm:$0xff]
    %v268 = vld [vmem:[%s0 + $0x750] sm:$0xff]
    %v269 = vld [vmem:[%s0 + $0x758] sm:$0xff]
    %v270 = vld [vmem:[%s0 + $0x760] sm:$0xff]
    %v271 = vld [vmem:[%s0 + $0x768] sm:$0xff]
    %v272 = vld [vmem:[%s0 + $0x770] sm:$0xff]
    %v273 = vld [vmem:[%s0 + $0x778] sm:$0xff]
    %v274 = vld [vmem:[%s0 + $0x780] sm:$0xff]
    %v275 = vld [vmem:[%s0 + $0x788] sm:$0xff]
    %v276 = vld [vmem:[%s0 + $0x790] sm:$0xff]
    %v277 = vld [vmem:[%s0 + $0x798] sm:$0xff]
    %v278 = vld [vmem:[%s0 + $0x7a0] sm:$0xff]
    %v279 = vld [vmem:[%s0 + $0x7a8] sm:$0xff]
    %v280 = vld [vmem:[%s0 + $0x7b0] sm:$0xff]
    %v281 = vld [vmem:[%s0 + $0x7b8] sm:$0xff]
    %v282 = vld [vmem:[%s0 + $0x7c0] sm:$0xff]
    %v283 = vld [vmem:[%s0 + $0x7c8] sm:$0xff]
    %v284 = vld [vmem:[%s0 + $0x7d0] sm:$0xff]
    %v285 = vld [vmem:[%s0 + $0x7d8] sm:$0xff]
    %v286 = vld [vmem:[%s0 + $0x7e0] sm:$0xff]
    %v287 = vld [vmem:[%s0 + $0x7e8] sm:$0xff]
    %v288 = vld [vmem:[%s0 + $0x7f0] sm:$0xff]
    %v289 = vld [vmem:[%s0 + $0x7f8] sm:$0xff]
    %v290 = vld [vmem:[%s0 + $0x800] sm:$0xff]
    %v291 = vld [vmem:[%s0 + $0x808] sm:$0xff]
    %v292 = vld [vmem:[%s0 + $0x810] sm:$0xff]
    %v293 = vld [vmem:[%s0 + $0x818] sm:$0xff]
    %v294 = vld [vmem:[%s0 + $0x820] sm:$0xff]
    %v295 = vld [vmem:[%s0 + $0x828] sm:$0xff]
    %v296 = vld [vmem:[%s0 + $0x830] sm:$0xff]
    %v297 = vld [vmem:[%s0 + $0x838] sm:$0xff]
    %v298 = vld [vmem:[%s0 + $0x840] sm:$0xff]
    %v299 = vld [vmem:[%s0 + $0x848] sm:$0xff]
    %v300 = vld [vmem:[%s0 + $0x850] sm:$0xff]
    %v301 = vld [vmem:[%s0 + $0x858] sm:$0xff]
    %v302 = vld [vmem:[%s0 + $0x860] sm:$0xff]
    %v303 = vld [vmem:[%s0 + $0x868] sm:$0xff]
    %v304 = vld [vmem:[%s0 + $0x870] sm:$0xff]
    %v305 = vld [vmem:[%s0 + $0x878] sm:$0xff]
    %v306 = vld [vmem:[%s0 + $0x880] sm:$0xff]
    %v307 = vld [vmem:[%s0 + $0x888] sm:$0xff]
    %v308 = vld [vmem:[%s0 + $0x890] sm:$0xff]
    %v309 = vld [vmem:[%s0 + $0x898] sm:$0xff]
    %v310 = vld [vmem:[%s0 + $0x8a0] sm:$0xff]
    %v311 = vld [vmem:[%s0 + $0x8a8] sm:$0xff]
    %v312 = vld [vmem:[%s0 + $0x8b0] sm:$0xff]
    %v313 = vld [vmem:[%s0 + $0x8b8] sm:$0xff]
    %v314 = vld [vmem:[%s0 + $0x8c0] sm:$0xff]
    %v315 = vld [vmem:[%s0 + $0x8c8] sm:$0xff]
    %v316 = vld [vmem:[%s0 + $0x8d0] sm:$0xff]
    %v317 = vld [vmem:[%s0 + $0x8d8] sm:$0xff]
    %v318 = vld [vmem:[%s0 + $0x8e0] sm:$0xff]
    %v319 = vld [vmem:[%s0 + $0x8e8] sm:$0xff]
    %v320 = vld [vmem:[%s0 + $0x8f0] sm:$0xff]
    %v321 = vld [vmem:[%s0 + $0x8f8] sm:$0xff]
    %v322 = vld [vmem:[%s0 + $0x900] sm:$0xff]
    %v323 = vld [vmem:[%s0 + $0x908] sm:$0xff]
    %v324 = vld [vmem:[%s0 + $0x910] sm:$0xff]
    %v325 = vld [vmem:[%s0 + $0x918] sm:$0xff]
    %v326 = vld [vmem:[%s0 + $0x920] sm:$0xff]
    %v327 = vld [vmem:[%s0 + $0x928] sm:$0xff]
    %v328 = vld [vmem:[%s0 + $0x930] sm:$0xff]
    %v329 = vld [vmem:[%s0 + $0x938] sm:$0xff]
    %v330 = vld [vmem:[%s0 + $0x940] sm:$0xff]
    %v331 = vld [vmem:[%s0 + $0x948] sm:$0xff]
    %v332 = vld [vmem:[%s0 + $0x950] sm:$0xff]
    %v333 = vld [vmem:[%s0 + $0x958] sm:$0xff]
    %v334 = vld [vmem:[%s0 + $0x960] sm:$0xff]
    %v335 = vld [vmem:[%s0 + $0x968] sm:$0xff]
    %v336 = vld [vmem:[%s0 + $0x970] sm:$0xff]
    %v337 = vld [vmem:[%s0 + $0x978] sm:$0xff]
    %v338 = vld [vmem:[%s0 + $0x980] sm:$0xff]
    %v339 = vld [vmem:[%s0 + $0x988] sm:$0xff]
    %v340 = vld [vmem:[%s0 + $0x990] sm:$0xff]
    %v341 = vld [vmem:[%s0 + $0x998] sm:$0xff]
    %v342 = vld [vmem:[%s0 + $0x9a0] sm:$0xff]
    %v343 = vld [vmem:[%s0 + $0x9a8] sm:$0xff]
    %v344 = vld [vmem:[%s0 + $0x9b0] sm:$0xff]
    %v345 = vld [vmem:[%s0 + $0x9b8] sm:$0xff]
    %v346 = vld [vmem:[%s0 + $0x9c0] sm:$0xff]
    %v347 = vld [vmem:[%s0 + $0x9c8] sm:$0xff]
    %v348 = vld [vmem:[%s0 + $0x9d0] sm:$0xff]
    %v349 = vld [vmem:[%s0 + $0x9d8] sm:$0xff]
    %v350 = vld [vmem:[%s0 + $0x9e0] sm:$0xff]
    %v351 = vld [vmem:[%s0 + $0x9e8] sm:$0xff]
    %v352 = vld [vmem:[%s0 + $0x9f0] sm:$0xff]
    %v353 = vld [vmem:[%s0 + $0x9f8] sm:$0xff]
    %v354 = vld [vmem:[%s0 + $0xa00] sm:$0xff]
    %v355 = vld [vmem:[%s0 + $0xa08] sm:$0xff]
    %v356 = vld [vmem:[%s0 + $0xa10] sm:$0xff]
    %v357 = vld [vmem:[%s0 + $0xa18] sm:$0xff]
    %v358 = vld [vmem:[%s0 + $0xa20] sm:$0xff]
    %v359 = vld [vmem:[%s0 + $0xa28] sm:$0xff]
    %v360 = vld [vmem:[%s0 + $0xa30] sm:$0xff]
    %v361 = vld [vmem:[%s0 + $0xa38] sm:$0xff]
    %v362 = vld [vmem:[%s0 + $0xa40] sm:$0xff]
    %v363 = vld [vmem:[%s0 + $0xa48] sm:$0xff]
    %v364 = vld [vmem:[%s0 + $0xa50] sm:$0xff]
    %v365 = vld [vmem:[%s0 + $0xa58] sm:$0xff]
    %v366 = vld [vmem:[%s0 + $0xa60] sm:$0xff]
    %v367 = vld [vmem:[%s0 + $0xa68] sm:$0xff]
    %v368 = vld [vmem:[%s0 + $0xa70] sm:$0xff]
    %v369 = vld [vmem:[%s0 + $0xa78] sm:$0xff]
    %v370 = vld [vmem:[%s0 + $0xa80] sm:$0xff]
    %v371 = vld [vmem:[%s0 + $0xa88] sm:$0xff]
    %v372 = vld [vmem:[%s0 + $0xa90] sm:$0xff]
    %v373 = vld [vmem:[%s0 + $0xa98] sm:$0xff]
    %v374 = vld [vmem:[%s0 + $0xaa0] sm:$0xff]
    %v375 = vld [vmem:[%s0 + $0xaa8] sm:$0xff]
    %v376 = vld [vmem:[%s0 + $0xab0] sm:$0xff]
    %v377 = vld [vmem:[%s0 + $0xab8] sm:$0xff]
    %v378 = vld [vmem:[%s0 + $0xac0] sm:$0xff]
    %v379 = vld [vmem:[%s0 + $0xac8] sm:$0xff]
    %v380 = vld [vmem:[%s0 + $0xad0] sm:$0xff]
    %v381 = vld [vmem:[%s0 + $0xad8] sm:$0xff]
    %v382 = vld [vmem:[%s0 + $0xae0] sm:$0xff]
    %v383 = vld [vmem:[%s0 + $0xae8] sm:$0xff]
    %v384 = vld [vmem:[%s0 + $0xaf0] sm:$0xff]
    %v385 = vld [vmem:[%s0 + $0xaf8] sm:$0xff]
    %v386 = vld [vmem:[%s0 + $0xb00] sm:$0xff]
    %v387 = vld [vmem:[%s0 + $0xb08] sm:$0xff]
    %v388 = vld [vmem:[%s0 + $0xb10] sm:$0xff]
    %v389 = vld [vmem:[%s0 + $0xb18] sm:$0xff]
    %v390 = vld [vmem:[%s0 + $0xb20] sm:$0xff]
    %v391 = vld [vmem:[%s0 + $0xb28] sm:$0xff]
    %v392 = vld [vmem:[%s0 + $0xb30] sm:$0xff]
    %v393 = vld [vmem:[%s0 + $0xb38] sm:$0xff]
    %v394 = vld [vmem:[%s0 + $0xb40] sm:$0xff]
    %v395 = vld [vmem:[%s0 + $0xb48] sm:$0xff]
    %v396 = vld [vmem:[%s0 + $0xb50] sm:$0xff]
    %v397 = vld [vmem:[%s0 + $0xb58] sm:$0xff]
    %v398 = vld [vmem:[%s0 + $0xb60] sm:$0xff]
    %v399 = vld [vmem:[%s0 + $0xb68] sm:$0xff]
    %v400 = vld [vmem:[%s0 + $0xb70] sm:$0xff]
    %v401 = vld [vmem:[%s0 + $0xb78] sm:$0xff]
    %v402 = vld [vmem:[%s0 + $0xb80] sm:$0xff]
    %v403 = vld [vmem:[%s0 + $0xb88] sm:$0xff]
    %v404 = vld [vmem:[%s0 + $0xb90] sm:$0xff]
    %v405 = vld [vmem:[%s0 + $0xb98] sm:$0xff]
    %v406 = vld [vmem:[%s0 + $0xba0] sm:$0xff]
    %v407 = vld [vmem:[%s0 + $0xba8] sm:$0xff]
    %v408 = vld [vmem:[%s0 + $0xbb0] sm:$0xff]
    %v409 = vld [vmem:[%s0 + $0xbb8] sm:$0xff]
    %v410 = vld [vmem:[%s0 + $0xbc0] sm:$0xff]
    %v411 = vld [vmem:[%s0 + $0xbc8] sm:$0xff]
    %v412 = vld [vmem:[%s0 + $0xbd0] sm:$0xff]
    %v413 = vld [vmem:[%s0 + $0xbd8] sm:$0xff]
    %v414 = vld [vmem:[%s0 + $0xbe0] sm:$0xff]
    %v415 = vld [vmem:[%s0 + $0xbe8] sm:$0xff]
    %v416 = vld [vmem:[%s0 + $0xbf0] sm:$0xff]
    %v417 = vld [vmem:[%s0 + $0xbf8] sm:$0xff]
    %v418 = vld [vmem:[%s0 + $0xc00] sm:$0xff]
    %v419 = vld [vmem:[%s0 + $0xc08] sm:$0xff]
    %v420 = vld [vmem:[%s0 + $0xc10] sm:$0xff]
    %v421 = vld [vmem:[%s0 + $0xc18] sm:$0xff]
    %v422 = vld [vmem:[%s0 + $0xc20] sm:$0xff]
    %v423 = vld [vmem:[%s0 + $0xc28] sm:$0xff]
    %v424 = vld [vmem:[%s0 + $0xc30] sm:$0xff]
    %v425 = vld [vmem:[%s0 + $0xc38] sm:$0xff]
    %v426 = vld [vmem:[%s0 + $0xc40] sm:$0xff]
    %v427 = vld [vmem:[%s0 + $0xc48] sm:$0xff]
    %v428 = vld [vmem:[%s0 + $0xc50] sm:$0xff]
    %v429 = vld [vmem:[%s0 + $0xc58] sm:$0xff]
    %v430 = vld [vmem:[%s0 + $0xc60] sm:$0xff]
    %v431 = vld [vmem:[%s0 + $0xc68] sm:$0xff]
    %v432 = vld [vmem:[%s0 + $0xc70] sm:$0xff]
    %v433 = vld [vmem:[%s0 + $0xc78] sm:$0xff]
    %v434 = vld [vmem:[%s0 + $0xc80] sm:$0xff]
    %v435 = vld [vmem:[%s0 + $0xc88] sm:$0xff]
    %v436 = vld [vmem:[%s0 + $0xc90] sm:$0xff]
    %v437 = vld [vmem:[%s0 + $0xc98] sm:$0xff]
    %v438 = vld [vmem:[%s0 + $0xca0] sm:$0xff]
    %v439 = vld [vmem:[%s0 + $0xca8] sm:$0xff]
    %v440 = vld [vmem:[%s0 + $0xcb0] sm:$0xff]
    %v441 = vld [vmem:[%s0 + $0xcb8] sm:$0xff]
    %v442 = vld [vmem:[%s0 + $0xcc0] sm:$0xff]
    %v443 = vld [vmem:[%s0 + $0xcc8] sm:$0xff]
    %v444 = vld [vmem:[%s0 + $0xcd0] sm:$0xff]
    %v445 = vld [vmem:[%s0 + $0xcd8] sm:$0xff]
    %v446 = vld [vmem:[%s0 + $0xce0] sm:$0xff]
    %v447 = vld [vmem:[%s0 + $0xce8] sm:$0xff]
    %v448 = vld [vmem:[%s0 + $0xcf0] sm:$0xff]
    %v449 = vld [vmem:[%s0 + $0xcf8] sm:$0xff]
    %v450 = vld [vmem:[%s0 + $0xd00] sm:$0xff]
    %v451 = vld [vmem:[%s0 + $0xd08] sm:$0xff]
    %v452 = vld [vmem:[%s0 + $0xd10] sm:$0xff]
    %v453 = vld [vmem:[%s0 + $0xd18] sm:$0xff]
    %v454 = vld [vmem:[%s0 + $0xd20] sm:$0xff]
    %v455 = vld [vmem:[%s0 + $0xd28] sm:$0xff]
    %v456 = vld [vmem:[%s0 + $0xd30] sm:$0xff]
    %v457 = vld [vmem:[%s0 + $0xd38] sm:$0xff]
    %v458 = vld [vmem:[%s0 + $0xd40] sm:$0xff]
    %v459 = vld [vmem:[%s0 + $0xd48] sm:$0xff]
    %v460 = vld [vmem:[%s0 + $0xd50] sm:$0xff]
    %v461 = vld [vmem:[%s0 + $0xd58] sm:$0xff]
    %v462 = vld [vmem:[%s0 + $0xd60] sm:$0xff]
    %v463 = vld [vmem:[%s0 + $0xd68] sm:$0xff]
    %v464 = vld [vmem:[%s0 + $0xd70] sm:$0xff]
    %v465 = vld [vmem:[%s0 + $0xd78] sm:$0xff]
    %v466 = vld [vmem:[%s0 + $0xd80] sm:$0xff]
    %v467 = vld [vmem:[%s0 + $0xd88] sm:$0xff]
    %v468 = vld [vmem:[%s0 + $0xd90] sm:$0xff]
    %v469 = vld [vmem:[%s0 + $0xd98] sm:$0xff]
    %v470 = vld [vmem:[%s0 + $0xda0] sm:$0xff]
    %v471 = vld [vmem:[%s0 + $0xda8] sm:$0xff]
    %v472 = vld [vmem:[%s0 + $0xdb0] sm:$0xff]
    %v473 = vld [vmem:[%s0 + $0xdb8] sm:$0xff]
    %v474 = vld [vmem:[%s0 + $0xdc0] sm:$0xff]
    %v475 = vld [vmem:[%s0 + $0xdc8] sm:$0xff]
    %v476 = vld [vmem:[%s0 + $0xdd0] sm:$0xff]
    %v477 = vld [vmem:[%s0 + $0xdd8] sm:$0xff]
    %v478 = vld [vmem:[%s0 + $0xde0] sm:$0xff]
    %v479 = vld [vmem:[%s0 + $0xde8] sm:$0xff]
    %v480 = vld [vmem:[%s0 + $0xdf0] sm:$0xff]
    %v481 = vld [vmem:[%s0 + $0xdf8] sm:$0xff]
    %v482 = vld [vmem:[%s0 + $0xe00] sm:$0xff]
    %v483 = vld [vmem:[%s0 + $0xe08] sm:$0xff]
    %v484 = vld [vmem:[%s0 + $0xe10] sm:$0xff]
    %v485 = vld [vmem:[%s0 + $0xe18] sm:$0xff]
    %v486 = vld [vmem:[%s0 + $0xe20] sm:$0xff]
    %v487 = vld [vmem:[%s0 + $0xe28] sm:$0xff]
    %v488 = vld [vmem:[%s0 + $0xe30] sm:$0xff]
    %v489 = vld [vmem:[%s0 + $0xe38] sm:$0xff]
    %v490 = vld [vmem:[%s0 + $0xe40] sm:$0xff]
    %v491 = vld [vmem:[%s0 + $0xe48] sm:$0xff]
    %v492 = vld [vmem:[%s0 + $0xe50] sm:$0xff]
    %v493 = vld [vmem:[%s0 + $0xe58] sm:$0xff]
    %v494 = vld [vmem:[%s0 + $0xe60] sm:$0xff]
    %v495 = vld [vmem:[%s0 + $0xe68] sm:$0xff]
    %v496 = vld [vmem:[%s0 + $0xe70] sm:$0xff]
    %v497 = vld [vmem:[%s0 + $0xe78] sm:$0xff]
    %v498 = vld [vmem:[%s0 + $0xe80] sm:$0xff]
    %v499 = vld [vmem:[%s0 + $0xe88] sm:$0xff]
    %v500 = vld [vmem:[%s0 + $0xe90] sm:$0xff]
    %v501 = vld [vmem:[%s0 + $0xe98] sm:$0xff]
    %v502 = vld [vmem:[%s0 + $0xea0] sm:$0xff]
    %v503 = vld [vmem:[%s0 + $0xea8] sm:$0xff]
    %v504 = vld [vmem:[%s0 + $0xeb0] sm:$0xff]
    %v505 = vld [vmem:[%s0 + $0xeb8] sm:$0xff]
    %v506 = vld [vmem:[%s0 + $0xec0] sm:$0xff]
    %v507 = vld [vmem:[%s0 + $0xec8] sm:$0xff]
    %v508 = vld [vmem:[%s0 + $0xed0] sm:$0xff]
    %v509 = vld [vmem:[%s0 + $0xed8] sm:$0xff]
    %v510 = vld [vmem:[%s0 + $0xee0] sm:$0xff]
    %v511 = vld [vmem:[%s0 + $0xee8] sm:$0xff]
    %v512 = vld [vmem:[%s0 + $0xef0] sm:$0xff]
    %v513 = vld [vmem:[%s0 + $0xef8] sm:$0xff]
    %v514 = vld [vmem:[%s0 + $0xf00] sm:$0xff]
    %v515 = vld [vmem:[%s0 + $0xf08] sm:$0xff]
    %v516 = vld [vmem:[%s0 + $0xf10] sm:$0xff]
    %v517 = vld [vmem:[%s0 + $0xf18] sm:$0xff]
    %v518 = vld [vmem:[%s0 + $0xf20] sm:$0xff]
    %v519 = vld [vmem:[%s0 + $0xf28] sm:$0xff]
    %v520 = vld [vmem:[%s0 + $0xf30] sm:$0xff]
    %v521 = vld [vmem:[%s0 + $0xf38] sm:$0xff]
    %v522 = vld [vmem:[%s0 + $0xf40] sm:$0xff]
    %v523 = vld [vmem:[%s0 + $0xf48] sm:$0xff]
    %v524 = vld [vmem:[%s0 + $0xf50] sm:$0xff]
    %v525 = vld [vmem:[%s0 + $0xf58] sm:$0xff]
    %v526 = vld [vmem:[%s0 + $0xf60] sm:$0xff]
    %v527 = vld [vmem:[%s0 + $0xf68] sm:$0xff]
    %v528 = vld [vmem:[%s0 + $0xf70] sm:$0xff]
    %v529 = vld [vmem:[%s0 + $0xf78] sm:$0xff]
    %v530 = vld [vmem:[%s0 + $0xf80] sm:$0xff]
    %v531 = vld [vmem:[%s0 + $0xf88] sm:$0xff]
    %v532 = vld [vmem:[%s0 + $0xf90] sm:$0xff]
    %v533 = vld [vmem:[%s0 + $0xf98] sm:$0xff]
    %v534 = vld [vmem:[%s0 + $0xfa0] sm:$0xff]
    %v535 = vld [vmem:[%s0 + $0xfa8] sm:$0xff]
    %v536 = vld [vmem:[%s0 + $0xfb0] sm:$0xff]
    %v537 = vld [vmem:[%s0 + $0xfb8] sm:$0xff]
    %v538 = vld [vmem:[%s0 + $0xfc0] sm:$0xff]
    %v539 = vld [vmem:[%s0 + $0xfc8] sm:$0xff]
    %v540 = vld [vmem:[%s0 + $0xfd0] sm:$0xff]
    %v541 = vld [vmem:[%s0 + $0xfd8] sm:$0xff]
    %v542 = vld [vmem:[%s0 + $0xfe0] sm:$0xff]
    %v543 = vld [vmem:[%s0 + $0xfe8] sm:$0xff]
    %v544 = vld [vmem:[%s0 + $0xff0] sm:$0xff]
    %v545 = vld [vmem:[%s0 + $0xff8] sm:$0xff]
    %v546 = vld [vmem:[%s1] sm:$0x3]
    %v548 = vlaneseq
    %v549 = vshrl.u32 %v548, 7
    %v550 = vsub.s32 0, %v549
    %v551 = vrot.slane %v546, %v550
    %v552 = vlaneseq
    %v553 = vshrl.u32 %v552, 7
    %v554 = vsub.s32 1, %v553
    %v555 = vrot.slane %v546, %v554
    %v558 = vmul.f32 %v34, %v551
    %v559 = vmul.f32 %v35, %v555
    %v560 = vmul.f32 %v36, %v551
    %v561 = vmul.f32 %v37, %v555
    %v562 = vmul.f32 %v38, %v551
    %v563 = vmul.f32 %v39, %v555
    %v564 = vmul.f32 %v40, %v551
    %v565 = vmul.f32 %v41, %v555
    %v566 = vmul.f32 %v42, %v551
    %v567 = vmul.f32 %v43, %v555
    %v568 = vmul.f32 %v44, %v551
    %v569 = vmul.f32 %v45, %v555
    %v570 = vmul.f32 %v46, %v551
    %v571 = vmul.f32 %v47, %v555
    %v572 = vmul.f32 %v48, %v551
    %v573 = vmul.f32 %v49, %v555
    %v574 = vmul.f32 %v50, %v551
    %v575 = vmul.f32 %v51, %v555
    %v576 = vmul.f32 %v52, %v551
    %v577 = vmul.f32 %v53, %v555
    %v578 = vmul.f32 %v54, %v551
    %v579 = vmul.f32 %v55, %v555
    %v580 = vmul.f32 %v56, %v551
    %v581 = vmul.f32 %v57, %v555
    %v582 = vmul.f32 %v58, %v551
    %v583 = vmul.f32 %v59, %v555
    %v584 = vmul.f32 %v60, %v551
    %v585 = vmul.f32 %v61, %v555
    %v586 = vmul.f32 %v62, %v551
    %v587 = vmul.f32 %v63, %v555
    %v588 = vmul.f32 %v64, %v551
    %v589 = vmul.f32 %v65, %v555
    %v590 = vmul.f32 %v66, %v551
    %v591 = vmul.f32 %v67, %v555
    %v592 = vmul.f32 %v68, %v551
    %v593 = vmul.f32 %v69, %v555
    %v594 = vmul.f32 %v70, %v551
    %v595 = vmul.f32 %v71, %v555
    %v596 = vmul.f32 %v72, %v551
    %v597 = vmul.f32 %v73, %v555
    %v598 = vmul.f32 %v74, %v551
    %v599 = vmul.f32 %v75, %v555
    %v600 = vmul.f32 %v76, %v551
    %v601 = vmul.f32 %v77, %v555
    %v602 = vmul.f32 %v78, %v551
    %v603 = vmul.f32 %v79, %v555
    %v604 = vmul.f32 %v80, %v551
    %v605 = vmul.f32 %v81, %v555
    %v606 = vmul.f32 %v82, %v551
    %v607 = vmul.f32 %v83, %v555
    %v608 = vmul.f32 %v84, %v551
    %v609 = vmul.f32 %v85, %v555
    %v610 = vmul.f32 %v86, %v551
    %v611 = vmul.f32 %v87, %v555
    %v612 = vmul.f32 %v88, %v551
    %v613 = vmul.f32 %v89, %v555
    %v614 = vmul.f32 %v90, %v551
    %v615 = vmul.f32 %v91, %v555
    %v616 = vmul.f32 %v92, %v551
    %v617 = vmul.f32 %v93, %v555
    %v618 = vmul.f32 %v94, %v551
    %v619 = vmul.f32 %v95, %v555
    %v620 = vmul.f32 %v96, %v551
    %v621 = vmul.f32 %v97, %v555
    %v622 = vmul.f32 %v98, %v551
    %v623 = vmul.f32 %v99, %v555
    %v624 = vmul.f32 %v100, %v551
    %v625 = vmul.f32 %v101, %v555
    %v626 = vmul.f32 %v102, %v551
    %v627 = vmul.f32 %v103, %v555
    %v628 = vmul.f32 %v104, %v551
    %v629 = vmul.f32 %v105, %v555
    %v630 = vmul.f32 %v106, %v551
    %v631 = vmul.f32 %v107, %v555
    %v632 = vmul.f32 %v108, %v551
    %v633 = vmul.f32 %v109, %v555
    %v634 = vmul.f32 %v110, %v551
    %v635 = vmul.f32 %v111, %v555
    %v636 = vmul.f32 %v112, %v551
    %v637 = vmul.f32 %v113, %v555
    %v638 = vmul.f32 %v114, %v551
    %v639 = vmul.f32 %v115, %v555
    %v640 = vmul.f32 %v116, %v551
    %v641 = vmul.f32 %v117, %v555
    %v642 = vmul.f32 %v118, %v551
    %v643 = vmul.f32 %v119, %v555
    %v644 = vmul.f32 %v120, %v551
    %v645 = vmul.f32 %v121, %v555
    %v646 = vmul.f32 %v122, %v551
    %v647 = vmul.f32 %v123, %v555
    %v648 = vmul.f32 %v124, %v551
    %v649 = vmul.f32 %v125, %v555
    %v650 = vmul.f32 %v126, %v551
    %v651 = vmul.f32 %v127, %v555
    %v652 = vmul.f32 %v128, %v551
    %v653 = vmul.f32 %v129, %v555
    %v654 = vmul.f32 %v130, %v551
    %v655 = vmul.f32 %v131, %v555
    %v656 = vmul.f32 %v132, %v551
    %v657 = vmul.f32 %v133, %v555
    %v658 = vmul.f32 %v134, %v551
    %v659 = vmul.f32 %v135, %v555
    %v660 = vmul.f32 %v136, %v551
    %v661 = vmul.f32 %v137, %v555
    %v662 = vmul.f32 %v138, %v551
    %v663 = vmul.f32 %v139, %v555
    %v664 = vmul.f32 %v140, %v551
    %v665 = vmul.f32 %v141, %v555
    %v666 = vmul.f32 %v142, %v551
    %v667 = vmul.f32 %v143, %v555
    %v668 = vmul.f32 %v144, %v551
    %v669 = vmul.f32 %v145, %v555
    %v670 = vmul.f32 %v146, %v551
    %v671 = vmul.f32 %v147, %v555
    %v672 = vmul.f32 %v148, %v551
    %v673 = vmul.f32 %v149, %v555
    %v674 = vmul.f32 %v150, %v551
    %v675 = vmul.f32 %v151, %v555
    %v676 = vmul.f32 %v152, %v551
    %v677 = vmul.f32 %v153, %v555
    %v678 = vmul.f32 %v154, %v551
    %v679 = vmul.f32 %v155, %v555
    %v680 = vmul.f32 %v156, %v551
    %v681 = vmul.f32 %v157, %v555
    %v682 = vmul.f32 %v158, %v551
    %v683 = vmul.f32 %v159, %v555
    %v684 = vmul.f32 %v160, %v551
    %v685 = vmul.f32 %v161, %v555
    %v686 = vmul.f32 %v162, %v551
    %v687 = vmul.f32 %v163, %v555
    %v688 = vmul.f32 %v164, %v551
    %v689 = vmul.f32 %v165, %v555
    %v690 = vmul.f32 %v166, %v551
    %v691 = vmul.f32 %v167, %v555
    %v692 = vmul.f32 %v168, %v551
    %v693 = vmul.f32 %v169, %v555
    %v694 = vmul.f32 %v170, %v551
    %v695 = vmul.f32 %v171, %v555
    %v696 = vmul.f32 %v172, %v551
    %v697 = vmul.f32 %v173, %v555
    %v698 = vmul.f32 %v174, %v551
    %v699 = vmul.f32 %v175, %v555
    %v700 = vmul.f32 %v176, %v551
    %v701 = vmul.f32 %v177, %v555
    %v702 = vmul.f32 %v178, %v551
    %v703 = vmul.f32 %v179, %v555
    %v704 = vmul.f32 %v180, %v551
    %v705 = vmul.f32 %v181, %v555
    %v706 = vmul.f32 %v182, %v551
    %v707 = vmul.f32 %v183, %v555
    %v708 = vmul.f32 %v184, %v551
    %v709 = vmul.f32 %v185, %v555
    %v710 = vmul.f32 %v186, %v551
    %v711 = vmul.f32 %v187, %v555
    %v712 = vmul.f32 %v188, %v551
    %v713 = vmul.f32 %v189, %v555
    %v714 = vmul.f32 %v190, %v551
    %v715 = vmul.f32 %v191, %v555
    %v716 = vmul.f32 %v192, %v551
    %v717 = vmul.f32 %v193, %v555
    %v718 = vmul.f32 %v194, %v551
    %v719 = vmul.f32 %v195, %v555
    %v720 = vmul.f32 %v196, %v551
    %v721 = vmul.f32 %v197, %v555
    %v722 = vmul.f32 %v198, %v551
    %v723 = vmul.f32 %v199, %v555
    %v724 = vmul.f32 %v200, %v551
    %v725 = vmul.f32 %v201, %v555
    %v726 = vmul.f32 %v202, %v551
    %v727 = vmul.f32 %v203, %v555
    %v728 = vmul.f32 %v204, %v551
    %v729 = vmul.f32 %v205, %v555
    %v730 = vmul.f32 %v206, %v551
    %v731 = vmul.f32 %v207, %v555
    %v732 = vmul.f32 %v208, %v551
    %v733 = vmul.f32 %v209, %v555
    %v734 = vmul.f32 %v210, %v551
    %v735 = vmul.f32 %v211, %v555
    %v736 = vmul.f32 %v212, %v551
    %v737 = vmul.f32 %v213, %v555
    %v738 = vmul.f32 %v214, %v551
    %v739 = vmul.f32 %v215, %v555
    %v740 = vmul.f32 %v216, %v551
    %v741 = vmul.f32 %v217, %v555
    %v742 = vmul.f32 %v218, %v551
    %v743 = vmul.f32 %v219, %v555
    %v744 = vmul.f32 %v220, %v551
    %v745 = vmul.f32 %v221, %v555
    %v746 = vmul.f32 %v222, %v551
    %v747 = vmul.f32 %v223, %v555
    %v748 = vmul.f32 %v224, %v551
    %v749 = vmul.f32 %v225, %v555
    %v750 = vmul.f32 %v226, %v551
    %v751 = vmul.f32 %v227, %v555
    %v752 = vmul.f32 %v228, %v551
    %v753 = vmul.f32 %v229, %v555
    %v754 = vmul.f32 %v230, %v551
    %v755 = vmul.f32 %v231, %v555
    %v756 = vmul.f32 %v232, %v551
    %v757 = vmul.f32 %v233, %v555
    %v758 = vmul.f32 %v234, %v551
    %v759 = vmul.f32 %v235, %v555
    %v760 = vmul.f32 %v236, %v551
    %v761 = vmul.f32 %v237, %v555
    %v762 = vmul.f32 %v238, %v551
    %v763 = vmul.f32 %v239, %v555
    %v764 = vmul.f32 %v240, %v551
    %v765 = vmul.f32 %v241, %v555
    %v766 = vmul.f32 %v242, %v551
    %v767 = vmul.f32 %v243, %v555
    %v768 = vmul.f32 %v244, %v551
    %v769 = vmul.f32 %v245, %v555
    %v770 = vmul.f32 %v246, %v551
    %v771 = vmul.f32 %v247, %v555
    %v772 = vmul.f32 %v248, %v551
    %v773 = vmul.f32 %v249, %v555
    %v774 = vmul.f32 %v250, %v551
    %v775 = vmul.f32 %v251, %v555
    %v776 = vmul.f32 %v252, %v551
    %v777 = vmul.f32 %v253, %v555
    %v778 = vmul.f32 %v254, %v551
    %v779 = vmul.f32 %v255, %v555
    %v780 = vmul.f32 %v256, %v551
    %v781 = vmul.f32 %v257, %v555
    %v782 = vmul.f32 %v258, %v551
    %v783 = vmul.f32 %v259, %v555
    %v784 = vmul.f32 %v260, %v551
    %v785 = vmul.f32 %v261, %v555
    %v786 = vmul.f32 %v262, %v551
    %v787 = vmul.f32 %v263, %v555
    %v788 = vmul.f32 %v264, %v551
    %v789 = vmul.f32 %v265, %v555
    %v790 = vmul.f32 %v266, %v551
    %v791 = vmul.f32 %v267, %v555
    %v792 = vmul.f32 %v268, %v551
    %v793 = vmul.f32 %v269, %v555
    %v794 = vmul.f32 %v270, %v551
    %v795 = vmul.f32 %v271, %v555
    %v796 = vmul.f32 %v272, %v551
    %v797 = vmul.f32 %v273, %v555
    %v798 = vmul.f32 %v274, %v551
    %v799 = vmul.f32 %v275, %v555
    %v800 = vmul.f32 %v276, %v551
    %v801 = vmul.f32 %v277, %v555
    %v802 = vmul.f32 %v278, %v551
    %v803 = vmul.f32 %v279, %v555
    %v804 = vmul.f32 %v280, %v551
    %v805 = vmul.f32 %v281, %v555
    %v806 = vmul.f32 %v282, %v551
    %v807 = vmul.f32 %v283, %v555
    %v808 = vmul.f32 %v284, %v551
    %v809 = vmul.f32 %v285, %v555
    %v810 = vmul.f32 %v286, %v551
    %v811 = vmul.f32 %v287, %v555
    %v812 = vmul.f32 %v288, %v551
    %v813 = vmul.f32 %v289, %v555
    %v814 = vmul.f32 %v290, %v551
    %v815 = vmul.f32 %v291, %v555
    %v816 = vmul.f32 %v292, %v551
    %v817 = vmul.f32 %v293, %v555
    %v818 = vmul.f32 %v294, %v551
    %v819 = vmul.f32 %v295, %v555
    %v820 = vmul.f32 %v296, %v551
    %v821 = vmul.f32 %v297, %v555
    %v822 = vmul.f32 %v298, %v551
    %v823 = vmul.f32 %v299, %v555
    %v824 = vmul.f32 %v300, %v551
    %v825 = vmul.f32 %v301, %v555
    %v826 = vmul.f32 %v302, %v551
    %v827 = vmul.f32 %v303, %v555
    %v828 = vmul.f32 %v304, %v551
    %v829 = vmul.f32 %v305, %v555
    %v830 = vmul.f32 %v306, %v551
    %v831 = vmul.f32 %v307, %v555
    %v832 = vmul.f32 %v308, %v551
    %v833 = vmul.f32 %v309, %v555
    %v834 = vmul.f32 %v310, %v551
    %v835 = vmul.f32 %v311, %v555
    %v836 = vmul.f32 %v312, %v551
    %v837 = vmul.f32 %v313, %v555
    %v838 = vmul.f32 %v314, %v551
    %v839 = vmul.f32 %v315, %v555
    %v840 = vmul.f32 %v316, %v551
    %v841 = vmul.f32 %v317, %v555
    %v842 = vmul.f32 %v318, %v551
    %v843 = vmul.f32 %v319, %v555
    %v844 = vmul.f32 %v320, %v551
    %v845 = vmul.f32 %v321, %v555
    %v846 = vmul.f32 %v322, %v551
    %v847 = vmul.f32 %v323, %v555
    %v848 = vmul.f32 %v324, %v551
    %v849 = vmul.f32 %v325, %v555
    %v850 = vmul.f32 %v326, %v551
    %v851 = vmul.f32 %v327, %v555
    %v852 = vmul.f32 %v328, %v551
    %v853 = vmul.f32 %v329, %v555
    %v854 = vmul.f32 %v330, %v551
    %v855 = vmul.f32 %v331, %v555
    %v856 = vmul.f32 %v332, %v551
    %v857 = vmul.f32 %v333, %v555
    %v858 = vmul.f32 %v334, %v551
    %v859 = vmul.f32 %v335, %v555
    %v860 = vmul.f32 %v336, %v551
    %v861 = vmul.f32 %v337, %v555
    %v862 = vmul.f32 %v338, %v551
    %v863 = vmul.f32 %v339, %v555
    %v864 = vmul.f32 %v340, %v551
    %v865 = vmul.f32 %v341, %v555
    %v866 = vmul.f32 %v342, %v551
    %v867 = vmul.f32 %v343, %v555
    %v868 = vmul.f32 %v344, %v551
    %v869 = vmul.f32 %v345, %v555
    %v870 = vmul.f32 %v346, %v551
    %v871 = vmul.f32 %v347, %v555
    %v872 = vmul.f32 %v348, %v551
    %v873 = vmul.f32 %v349, %v555
    %v874 = vmul.f32 %v350, %v551
    %v875 = vmul.f32 %v351, %v555
    %v876 = vmul.f32 %v352, %v551
    %v877 = vmul.f32 %v353, %v555
    %v878 = vmul.f32 %v354, %v551
    %v879 = vmul.f32 %v355, %v555
    %v880 = vmul.f32 %v356, %v551
    %v881 = vmul.f32 %v357, %v555
    %v882 = vmul.f32 %v358, %v551
    %v883 = vmul.f32 %v359, %v555
    %v884 = vmul.f32 %v360, %v551
    %v885 = vmul.f32 %v361, %v555
    %v886 = vmul.f32 %v362, %v551
    %v887 = vmul.f32 %v363, %v555
    %v888 = vmul.f32 %v364, %v551
    %v889 = vmul.f32 %v365, %v555
    %v890 = vmul.f32 %v366, %v551
    %v891 = vmul.f32 %v367, %v555
    %v892 = vmul.f32 %v368, %v551
    %v893 = vmul.f32 %v369, %v555
    %v894 = vmul.f32 %v370, %v551
    %v895 = vmul.f32 %v371, %v555
    %v896 = vmul.f32 %v372, %v551
    %v897 = vmul.f32 %v373, %v555
    %v898 = vmul.f32 %v374, %v551
    %v899 = vmul.f32 %v375, %v555
    %v900 = vmul.f32 %v376, %v551
    %v901 = vmul.f32 %v377, %v555
    %v902 = vmul.f32 %v378, %v551
    %v903 = vmul.f32 %v379, %v555
    %v904 = vmul.f32 %v380, %v551
    %v905 = vmul.f32 %v381, %v555
    %v906 = vmul.f32 %v382, %v551
    %v907 = vmul.f32 %v383, %v555
    %v908 = vmul.f32 %v384, %v551
    %v909 = vmul.f32 %v385, %v555
    %v910 = vmul.f32 %v386, %v551
    %v911 = vmul.f32 %v387, %v555
    %v912 = vmul.f32 %v388, %v551
    %v913 = vmul.f32 %v389, %v555
    %v914 = vmul.f32 %v390, %v551
    %v915 = vmul.f32 %v391, %v555
    %v916 = vmul.f32 %v392, %v551
    %v917 = vmul.f32 %v393, %v555
    %v918 = vmul.f32 %v394, %v551
    %v919 = vmul.f32 %v395, %v555
    %v920 = vmul.f32 %v396, %v551
    %v921 = vmul.f32 %v397, %v555
    %v922 = vmul.f32 %v398, %v551
    %v923 = vmul.f32 %v399, %v555
    %v924 = vmul.f32 %v400, %v551
    %v925 = vmul.f32 %v401, %v555
    %v926 = vmul.f32 %v402, %v551
    %v927 = vmul.f32 %v403, %v555
    %v928 = vmul.f32 %v404, %v551
    %v929 = vmul.f32 %v405, %v555
    %v930 = vmul.f32 %v406, %v551
    %v931 = vmul.f32 %v407, %v555
    %v932 = vmul.f32 %v408, %v551
    %v933 = vmul.f32 %v409, %v555
    %v934 = vmul.f32 %v410, %v551
    %v935 = vmul.f32 %v411, %v555
    %v936 = vmul.f32 %v412, %v551
    %v937 = vmul.f32 %v413, %v555
    %v938 = vmul.f32 %v414, %v551
    %v939 = vmul.f32 %v415, %v555
    %v940 = vmul.f32 %v416, %v551
    %v941 = vmul.f32 %v417, %v555
    %v942 = vmul.f32 %v418, %v551
    %v943 = vmul.f32 %v419, %v555
    %v944 = vmul.f32 %v420, %v551
    %v945 = vmul.f32 %v421, %v555
    %v946 = vmul.f32 %v422, %v551
    %v947 = vmul.f32 %v423, %v555
    %v948 = vmul.f32 %v424, %v551
    %v949 = vmul.f32 %v425, %v555
    %v950 = vmul.f32 %v426, %v551
    %v951 = vmul.f32 %v427, %v555
    %v952 = vmul.f32 %v428, %v551
    %v953 = vmul.f32 %v429, %v555
    %v954 = vmul.f32 %v430, %v551
    %v955 = vmul.f32 %v431, %v555
    %v956 = vmul.f32 %v432, %v551
    %v957 = vmul.f32 %v433, %v555
    %v958 = vmul.f32 %v434, %v551
    %v959 = vmul.f32 %v435, %v555
    %v960 = vmul.f32 %v436, %v551
    %v961 = vmul.f32 %v437, %v555
    %v962 = vmul.f32 %v438, %v551
    %v963 = vmul.f32 %v439, %v555
    %v964 = vmul.f32 %v440, %v551
    %v965 = vmul.f32 %v441, %v555
    %v966 = vmul.f32 %v442, %v551
    %v967 = vmul.f32 %v443, %v555
    %v968 = vmul.f32 %v444, %v551
    %v969 = vmul.f32 %v445, %v555
    %v970 = vmul.f32 %v446, %v551
    %v971 = vmul.f32 %v447, %v555
    %v972 = vmul.f32 %v448, %v551
    %v973 = vmul.f32 %v449, %v555
    %v974 = vmul.f32 %v450, %v551
    %v975 = vmul.f32 %v451, %v555
    %v976 = vmul.f32 %v452, %v551
    %v977 = vmul.f32 %v453, %v555
    %v978 = vmul.f32 %v454, %v551
    %v979 = vmul.f32 %v455, %v555
    %v980 = vmul.f32 %v456, %v551
    %v981 = vmul.f32 %v457, %v555
    %v982 = vmul.f32 %v458, %v551
    %v983 = vmul.f32 %v459, %v555
    %v984 = vmul.f32 %v460, %v551
    %v985 = vmul.f32 %v461, %v555
    %v986 = vmul.f32 %v462, %v551
    %v987 = vmul.f32 %v463, %v555
    %v988 = vmul.f32 %v464, %v551
    %v989 = vmul.f32 %v465, %v555
    %v990 = vmul.f32 %v466, %v551
    %v991 = vmul.f32 %v467, %v555
    %v992 = vmul.f32 %v468, %v551
    %v993 = vmul.f32 %v469, %v555
    %v994 = vmul.f32 %v470, %v551
    %v995 = vmul.f32 %v471, %v555
    %v996 = vmul.f32 %v472, %v551
    %v997 = vmul.f32 %v473, %v555
    %v998 = vmul.f32 %v474, %v551
    %v999 = vmul.f32 %v475, %v555
    %v1000 = vmul.f32 %v476, %v551
    %v1001 = vmul.f32 %v477, %v555
    %v1002 = vmul.f32 %v478, %v551
    %v1003 = vmul.f32 %v479, %v555
    %v1004 = vmul.f32 %v480, %v551
    %v1005 = vmul.f32 %v481, %v555
    %v1006 = vmul.f32 %v482, %v551
    %v1007 = vmul.f32 %v483, %v555
    %v1008 = vmul.f32 %v484, %v551
    %v1009 = vmul.f32 %v485, %v555
    %v1010 = vmul.f32 %v486, %v551
    %v1011 = vmul.f32 %v487, %v555
    %v1012 = vmul.f32 %v488, %v551
    %v1013 = vmul.f32 %v489, %v555
    %v1014 = vmul.f32 %v490, %v551
    %v1015 = vmul.f32 %v491, %v555
    %v1016 = vmul.f32 %v492, %v551
    %v1017 = vmul.f32 %v493, %v555
    %v1018 = vmul.f32 %v494, %v551
    %v1019 = vmul.f32 %v495, %v555
    %v1020 = vmul.f32 %v496, %v551
    %v1021 = vmul.f32 %v497, %v555
    %v1022 = vmul.f32 %v498, %v551
    %v1023 = vmul.f32 %v499, %v555
    %v1024 = vmul.f32 %v500, %v551
    %v1025 = vmul.f32 %v501, %v555
    %v1026 = vmul.f32 %v502, %v551
    %v1027 = vmul.f32 %v503, %v555
    %v1028 = vmul.f32 %v504, %v551
    %v1029 = vmul.f32 %v505, %v555
    %v1030 = vmul.f32 %v506, %v551
    %v1031 = vmul.f32 %v507, %v555
    %v1032 = vmul.f32 %v508, %v551
    %v1033 = vmul.f32 %v509, %v555
    %v1034 = vmul.f32 %v510, %v551
    %v1035 = vmul.f32 %v511, %v555
    %v1036 = vmul.f32 %v512, %v551
    %v1037 = vmul.f32 %v513, %v555
    %v1038 = vmul.f32 %v514, %v551
    %v1039 = vmul.f32 %v515, %v555
    %v1040 = vmul.f32 %v516, %v551
    %v1041 = vmul.f32 %v517, %v555
    %v1042 = vmul.f32 %v518, %v551
    %v1043 = vmul.f32 %v519, %v555
    %v1044 = vmul.f32 %v520, %v551
    %v1045 = vmul.f32 %v521, %v555
    %v1046 = vmul.f32 %v522, %v551
    %v1047 = vmul.f32 %v523, %v555
    %v1048 = vmul.f32 %v524, %v551
    %v1049 = vmul.f32 %v525, %v555
    %v1050 = vmul.f32 %v526, %v551
    %v1051 = vmul.f32 %v527, %v555
    %v1052 = vmul.f32 %v528, %v551
    %v1053 = vmul.f32 %v529, %v555
    %v1054 = vmul.f32 %v530, %v551
    %v1055 = vmul.f32 %v531, %v555
    %v1056 = vmul.f32 %v532, %v551
    %v1057 = vmul.f32 %v533, %v555
    %v1058 = vmul.f32 %v534, %v551
    %v1059 = vmul.f32 %v535, %v555
    %v1060 = vmul.f32 %v536, %v551
    %v1061 = vmul.f32 %v537, %v555
    %v1062 = vmul.f32 %v538, %v551
    %v1063 = vmul.f32 %v539, %v555
    %v1064 = vmul.f32 %v540, %v551
    %v1065 = vmul.f32 %v541, %v555
    %v1066 = vmul.f32 %v542, %v551
    %v1067 = vmul.f32 %v543, %v555
    %v1068 = vmul.f32 %v544, %v551
    %v1069 = vmul.f32 %v545, %v555
    %vm1070 = vcmask 588800
    %v1071 = vsel %vm1070, %v559, 0.0
    %v1072 = vadd.f32 %v558, %v1071
    %1073 = vadd.xlane.f32.xlu0 %v1072
    %v1074 = vpop.xlane.xlu0 %1073
    %v1075 = vsel %vm1070, %v561, 0.0
    %v1076 = vadd.f32 %v560, %v1075
    %1077 = vadd.xlane.f32.xlu0 %v1076
    %v1078 = vpop.xlane.xlu0 %1077
    %v1079 = vsel %vm1070, %v563, 0.0
    %v1080 = vadd.f32 %v562, %v1079
    %1081 = vadd.xlane.f32.xlu0 %v1080
    %v1082 = vpop.xlane.xlu0 %1081
    %v1083 = vsel %vm1070, %v565, 0.0
    %v1084 = vadd.f32 %v564, %v1083
    %1085 = vadd.xlane.f32.xlu0 %v1084
    %v1086 = vpop.xlane.xlu0 %1085
    %v1087 = vsel %vm1070, %v567, 0.0
    %v1088 = vadd.f32 %v566, %v1087
    %1089 = vadd.xlane.f32.xlu0 %v1088
    %v1090 = vpop.xlane.xlu0 %1089
    %v1091 = vsel %vm1070, %v569, 0.0
    %v1092 = vadd.f32 %v568, %v1091
    %1093 = vadd.xlane.f32.xlu0 %v1092
    %v1094 = vpop.xlane.xlu0 %1093
    %v1095 = vsel %vm1070, %v571, 0.0
    %v1096 = vadd.f32 %v570, %v1095
    %1097 = vadd.xlane.f32.xlu0 %v1096
    %v1098 = vpop.xlane.xlu0 %1097
    %v1099 = vsel %vm1070, %v573, 0.0
    %v1100 = vadd.f32 %v572, %v1099
    %1101 = vadd.xlane.f32.xlu0 %v1100
    %v1102 = vpop.xlane.xlu0 %1101
    %v1103 = vsel %vm1070, %v575, 0.0
    %v1104 = vadd.f32 %v574, %v1103
    %1105 = vadd.xlane.f32.xlu0 %v1104
    %v1106 = vpop.xlane.xlu0 %1105
    %v1107 = vsel %vm1070, %v577, 0.0
    %v1108 = vadd.f32 %v576, %v1107
    %1109 = vadd.xlane.f32.xlu0 %v1108
    %v1110 = vpop.xlane.xlu0 %1109
    %v1111 = vsel %vm1070, %v579, 0.0
    %v1112 = vadd.f32 %v578, %v1111
    %1113 = vadd.xlane.f32.xlu0 %v1112
    %v1114 = vpop.xlane.xlu0 %1113
    %v1115 = vsel %vm1070, %v581, 0.0
    %v1116 = vadd.f32 %v580, %v1115
    %1117 = vadd.xlane.f32.xlu0 %v1116
    %v1118 = vpop.xlane.xlu0 %1117
    %v1119 = vsel %vm1070, %v583, 0.0
    %v1120 = vadd.f32 %v582, %v1119
    %1121 = vadd.xlane.f32.xlu0 %v1120
    %v1122 = vpop.xlane.xlu0 %1121
    %v1123 = vsel %vm1070, %v585, 0.0
    %v1124 = vadd.f32 %v584, %v1123
    %1125 = vadd.xlane.f32.xlu0 %v1124
    %v1126 = vpop.xlane.xlu0 %1125
    %v1127 = vsel %vm1070, %v587, 0.0
    %v1128 = vadd.f32 %v586, %v1127
    %1129 = vadd.xlane.f32.xlu0 %v1128
    %v1130 = vpop.xlane.xlu0 %1129
    %v1131 = vsel %vm1070, %v589, 0.0
    %v1132 = vadd.f32 %v588, %v1131
    %1133 = vadd.xlane.f32.xlu0 %v1132
    %v1134 = vpop.xlane.xlu0 %1133
    %v1135 = vsel %vm1070, %v591, 0.0
    %v1136 = vadd.f32 %v590, %v1135
    %1137 = vadd.xlane.f32.xlu0 %v1136
    %v1138 = vpop.xlane.xlu0 %1137
    %v1139 = vsel %vm1070, %v593, 0.0
    %v1140 = vadd.f32 %v592, %v1139
    %1141 = vadd.xlane.f32.xlu0 %v1140
    %v1142 = vpop.xlane.xlu0 %1141
    %v1143 = vsel %vm1070, %v595, 0.0
    %v1144 = vadd.f32 %v594, %v1143
    %1145 = vadd.xlane.f32.xlu0 %v1144
    %v1146 = vpop.xlane.xlu0 %1145
    %v1147 = vsel %vm1070, %v597, 0.0
    %v1148 = vadd.f32 %v596, %v1147
    %1149 = vadd.xlane.f32.xlu0 %v1148
    %v1150 = vpop.xlane.xlu0 %1149
    %v1151 = vsel %vm1070, %v599, 0.0
    %v1152 = vadd.f32 %v598, %v1151
    %1153 = vadd.xlane.f32.xlu0 %v1152
    %v1154 = vpop.xlane.xlu0 %1153
    %v1155 = vsel %vm1070, %v601, 0.0
    %v1156 = vadd.f32 %v600, %v1155
    %1157 = vadd.xlane.f32.xlu0 %v1156
    %v1158 = vpop.xlane.xlu0 %1157
    %v1159 = vsel %vm1070, %v603, 0.0
    %v1160 = vadd.f32 %v602, %v1159
    %1161 = vadd.xlane.f32.xlu0 %v1160
    %v1162 = vpop.xlane.xlu0 %1161
    %v1163 = vsel %vm1070, %v605, 0.0
    %v1164 = vadd.f32 %v604, %v1163
    %1165 = vadd.xlane.f32.xlu0 %v1164
    %v1166 = vpop.xlane.xlu0 %1165
    %v1167 = vsel %vm1070, %v607, 0.0
    %v1168 = vadd.f32 %v606, %v1167
    %1169 = vadd.xlane.f32.xlu0 %v1168
    %v1170 = vpop.xlane.xlu0 %1169
    %v1171 = vsel %vm1070, %v609, 0.0
    %v1172 = vadd.f32 %v608, %v1171
    %1173 = vadd.xlane.f32.xlu0 %v1172
    %v1174 = vpop.xlane.xlu0 %1173
    %v1175 = vsel %vm1070, %v611, 0.0
    %v1176 = vadd.f32 %v610, %v1175
    %1177 = vadd.xlane.f32.xlu0 %v1176
    %v1178 = vpop.xlane.xlu0 %1177
    %v1179 = vsel %vm1070, %v613, 0.0
    %v1180 = vadd.f32 %v612, %v1179
    %1181 = vadd.xlane.f32.xlu0 %v1180
    %v1182 = vpop.xlane.xlu0 %1181
    %v1183 = vsel %vm1070, %v615, 0.0
    %v1184 = vadd.f32 %v614, %v1183
    %1185 = vadd.xlane.f32.xlu0 %v1184
    %v1186 = vpop.xlane.xlu0 %1185
    %v1187 = vsel %vm1070, %v617, 0.0
    %v1188 = vadd.f32 %v616, %v1187
    %1189 = vadd.xlane.f32.xlu0 %v1188
    %v1190 = vpop.xlane.xlu0 %1189
    %v1191 = vsel %vm1070, %v619, 0.0
    %v1192 = vadd.f32 %v618, %v1191
    %1193 = vadd.xlane.f32.xlu0 %v1192
    %v1194 = vpop.xlane.xlu0 %1193
    %v1195 = vsel %vm1070, %v621, 0.0
    %v1196 = vadd.f32 %v620, %v1195
    %1197 = vadd.xlane.f32.xlu0 %v1196
    %v1198 = vpop.xlane.xlu0 %1197
    %v1199 = vsel %vm1070, %v623, 0.0
    %v1200 = vadd.f32 %v622, %v1199
    %1201 = vadd.xlane.f32.xlu0 %v1200
    %v1202 = vpop.xlane.xlu0 %1201
    %v1203 = vsel %vm1070, %v625, 0.0
    %v1204 = vadd.f32 %v624, %v1203
    %1205 = vadd.xlane.f32.xlu0 %v1204
    %v1206 = vpop.xlane.xlu0 %1205
    %v1207 = vsel %vm1070, %v627, 0.0
    %v1208 = vadd.f32 %v626, %v1207
    %1209 = vadd.xlane.f32.xlu0 %v1208
    %v1210 = vpop.xlane.xlu0 %1209
    %v1211 = vsel %vm1070, %v629, 0.0
    %v1212 = vadd.f32 %v628, %v1211
    %1213 = vadd.xlane.f32.xlu0 %v1212
    %v1214 = vpop.xlane.xlu0 %1213
    %v1215 = vsel %vm1070, %v631, 0.0
    %v1216 = vadd.f32 %v630, %v1215
    %1217 = vadd.xlane.f32.xlu0 %v1216
    %v1218 = vpop.xlane.xlu0 %1217
    %v1219 = vsel %vm1070, %v633, 0.0
    %v1220 = vadd.f32 %v632, %v1219
    %1221 = vadd.xlane.f32.xlu0 %v1220
    %v1222 = vpop.xlane.xlu0 %1221
    %v1223 = vsel %vm1070, %v635, 0.0
    %v1224 = vadd.f32 %v634, %v1223
    %1225 = vadd.xlane.f32.xlu0 %v1224
    %v1226 = vpop.xlane.xlu0 %1225
    %v1227 = vsel %vm1070, %v637, 0.0
    %v1228 = vadd.f32 %v636, %v1227
    %1229 = vadd.xlane.f32.xlu0 %v1228
    %v1230 = vpop.xlane.xlu0 %1229
    %v1231 = vsel %vm1070, %v639, 0.0
    %v1232 = vadd.f32 %v638, %v1231
    %1233 = vadd.xlane.f32.xlu0 %v1232
    %v1234 = vpop.xlane.xlu0 %1233
    %v1235 = vsel %vm1070, %v641, 0.0
    %v1236 = vadd.f32 %v640, %v1235
    %1237 = vadd.xlane.f32.xlu0 %v1236
    %v1238 = vpop.xlane.xlu0 %1237
    %v1239 = vsel %vm1070, %v643, 0.0
    %v1240 = vadd.f32 %v642, %v1239
    %1241 = vadd.xlane.f32.xlu0 %v1240
    %v1242 = vpop.xlane.xlu0 %1241
    %v1243 = vsel %vm1070, %v645, 0.0
    %v1244 = vadd.f32 %v644, %v1243
    %1245 = vadd.xlane.f32.xlu0 %v1244
    %v1246 = vpop.xlane.xlu0 %1245
    %v1247 = vsel %vm1070, %v647, 0.0
    %v1248 = vadd.f32 %v646, %v1247
    %1249 = vadd.xlane.f32.xlu0 %v1248
    %v1250 = vpop.xlane.xlu0 %1249
    %v1251 = vsel %vm1070, %v649, 0.0
    %v1252 = vadd.f32 %v648, %v1251
    %1253 = vadd.xlane.f32.xlu0 %v1252
    %v1254 = vpop.xlane.xlu0 %1253
    %v1255 = vsel %vm1070, %v651, 0.0
    %v1256 = vadd.f32 %v650, %v1255
    %1257 = vadd.xlane.f32.xlu0 %v1256
    %v1258 = vpop.xlane.xlu0 %1257
    %v1259 = vsel %vm1070, %v653, 0.0
    %v1260 = vadd.f32 %v652, %v1259
    %1261 = vadd.xlane.f32.xlu0 %v1260
    %v1262 = vpop.xlane.xlu0 %1261
    %v1263 = vsel %vm1070, %v655, 0.0
    %v1264 = vadd.f32 %v654, %v1263
    %1265 = vadd.xlane.f32.xlu0 %v1264
    %v1266 = vpop.xlane.xlu0 %1265
    %v1267 = vsel %vm1070, %v657, 0.0
    %v1268 = vadd.f32 %v656, %v1267
    %1269 = vadd.xlane.f32.xlu0 %v1268
    %v1270 = vpop.xlane.xlu0 %1269
    %v1271 = vsel %vm1070, %v659, 0.0
    %v1272 = vadd.f32 %v658, %v1271
    %1273 = vadd.xlane.f32.xlu0 %v1272
    %v1274 = vpop.xlane.xlu0 %1273
    %v1275 = vsel %vm1070, %v661, 0.0
    %v1276 = vadd.f32 %v660, %v1275
    %1277 = vadd.xlane.f32.xlu0 %v1276
    %v1278 = vpop.xlane.xlu0 %1277
    %v1279 = vsel %vm1070, %v663, 0.0
    %v1280 = vadd.f32 %v662, %v1279
    %1281 = vadd.xlane.f32.xlu0 %v1280
    %v1282 = vpop.xlane.xlu0 %1281
    %v1283 = vsel %vm1070, %v665, 0.0
    %v1284 = vadd.f32 %v664, %v1283
    %1285 = vadd.xlane.f32.xlu0 %v1284
    %v1286 = vpop.xlane.xlu0 %1285
    %v1287 = vsel %vm1070, %v667, 0.0
    %v1288 = vadd.f32 %v666, %v1287
    %1289 = vadd.xlane.f32.xlu0 %v1288
    %v1290 = vpop.xlane.xlu0 %1289
    %v1291 = vsel %vm1070, %v669, 0.0
    %v1292 = vadd.f32 %v668, %v1291
    %1293 = vadd.xlane.f32.xlu0 %v1292
    %v1294 = vpop.xlane.xlu0 %1293
    %v1295 = vsel %vm1070, %v671, 0.0
    %v1296 = vadd.f32 %v670, %v1295
    %1297 = vadd.xlane.f32.xlu0 %v1296
    %v1298 = vpop.xlane.xlu0 %1297
    %v1299 = vsel %vm1070, %v673, 0.0
    %v1300 = vadd.f32 %v672, %v1299
    %1301 = vadd.xlane.f32.xlu0 %v1300
    %v1302 = vpop.xlane.xlu0 %1301
    %v1303 = vsel %vm1070, %v675, 0.0
    %v1304 = vadd.f32 %v674, %v1303
    %1305 = vadd.xlane.f32.xlu0 %v1304
    %v1306 = vpop.xlane.xlu0 %1305
    %v1307 = vsel %vm1070, %v677, 0.0
    %v1308 = vadd.f32 %v676, %v1307
    %1309 = vadd.xlane.f32.xlu0 %v1308
    %v1310 = vpop.xlane.xlu0 %1309
    %v1311 = vsel %vm1070, %v679, 0.0
    %v1312 = vadd.f32 %v678, %v1311
    %1313 = vadd.xlane.f32.xlu0 %v1312
    %v1314 = vpop.xlane.xlu0 %1313
    %v1315 = vsel %vm1070, %v681, 0.0
    %v1316 = vadd.f32 %v680, %v1315
    %1317 = vadd.xlane.f32.xlu0 %v1316
    %v1318 = vpop.xlane.xlu0 %1317
    %v1319 = vsel %vm1070, %v683, 0.0
    %v1320 = vadd.f32 %v682, %v1319
    %1321 = vadd.xlane.f32.xlu0 %v1320
    %v1322 = vpop.xlane.xlu0 %1321
    %v1323 = vsel %vm1070, %v685, 0.0
    %v1324 = vadd.f32 %v684, %v1323
    %1325 = vadd.xlane.f32.xlu0 %v1324
    %v1326 = vpop.xlane.xlu0 %1325
    %v1327 = vsel %vm1070, %v687, 0.0
    %v1328 = vadd.f32 %v686, %v1327
    %1329 = vadd.xlane.f32.xlu0 %v1328
    %v1330 = vpop.xlane.xlu0 %1329
    %v1331 = vsel %vm1070, %v689, 0.0
    %v1332 = vadd.f32 %v688, %v1331
    %1333 = vadd.xlane.f32.xlu0 %v1332
    %v1334 = vpop.xlane.xlu0 %1333
    %v1335 = vsel %vm1070, %v691, 0.0
    %v1336 = vadd.f32 %v690, %v1335
    %1337 = vadd.xlane.f32.xlu0 %v1336
    %v1338 = vpop.xlane.xlu0 %1337
    %v1339 = vsel %vm1070, %v693, 0.0
    %v1340 = vadd.f32 %v692, %v1339
    %1341 = vadd.xlane.f32.xlu0 %v1340
    %v1342 = vpop.xlane.xlu0 %1341
    %v1343 = vsel %vm1070, %v695, 0.0
    %v1344 = vadd.f32 %v694, %v1343
    %1345 = vadd.xlane.f32.xlu0 %v1344
    %v1346 = vpop.xlane.xlu0 %1345
    %v1347 = vsel %vm1070, %v697, 0.0
    %v1348 = vadd.f32 %v696, %v1347
    %1349 = vadd.xlane.f32.xlu0 %v1348
    %v1350 = vpop.xlane.xlu0 %1349
    %v1351 = vsel %vm1070, %v699, 0.0
    %v1352 = vadd.f32 %v698, %v1351
    %1353 = vadd.xlane.f32.xlu0 %v1352
    %v1354 = vpop.xlane.xlu0 %1353
    %v1355 = vsel %vm1070, %v701, 0.0
    %v1356 = vadd.f32 %v700, %v1355
    %1357 = vadd.xlane.f32.xlu0 %v1356
    %v1358 = vpop.xlane.xlu0 %1357
    %v1359 = vsel %vm1070, %v703, 0.0
    %v1360 = vadd.f32 %v702, %v1359
    %1361 = vadd.xlane.f32.xlu0 %v1360
    %v1362 = vpop.xlane.xlu0 %1361
    %v1363 = vsel %vm1070, %v705, 0.0
    %v1364 = vadd.f32 %v704, %v1363
    %1365 = vadd.xlane.f32.xlu0 %v1364
    %v1366 = vpop.xlane.xlu0 %1365
    %v1367 = vsel %vm1070, %v707, 0.0
    %v1368 = vadd.f32 %v706, %v1367
    %1369 = vadd.xlane.f32.xlu0 %v1368
    %v1370 = vpop.xlane.xlu0 %1369
    %v1371 = vsel %vm1070, %v709, 0.0
    %v1372 = vadd.f32 %v708, %v1371
    %1373 = vadd.xlane.f32.xlu0 %v1372
    %v1374 = vpop.xlane.xlu0 %1373
    %v1375 = vsel %vm1070, %v711, 0.0
    %v1376 = vadd.f32 %v710, %v1375
    %1377 = vadd.xlane.f32.xlu0 %v1376
    %v1378 = vpop.xlane.xlu0 %1377
    %v1379 = vsel %vm1070, %v713, 0.0
    %v1380 = vadd.f32 %v712, %v1379
    %1381 = vadd.xlane.f32.xlu0 %v1380
    %v1382 = vpop.xlane.xlu0 %1381
    %v1383 = vsel %vm1070, %v715, 0.0
    %v1384 = vadd.f32 %v714, %v1383
    %1385 = vadd.xlane.f32.xlu0 %v1384
    %v1386 = vpop.xlane.xlu0 %1385
    %v1387 = vsel %vm1070, %v717, 0.0
    %v1388 = vadd.f32 %v716, %v1387
    %1389 = vadd.xlane.f32.xlu0 %v1388
    %v1390 = vpop.xlane.xlu0 %1389
    %v1391 = vsel %vm1070, %v719, 0.0
    %v1392 = vadd.f32 %v718, %v1391
    %1393 = vadd.xlane.f32.xlu0 %v1392
    %v1394 = vpop.xlane.xlu0 %1393
    %v1395 = vsel %vm1070, %v721, 0.0
    %v1396 = vadd.f32 %v720, %v1395
    %1397 = vadd.xlane.f32.xlu0 %v1396
    %v1398 = vpop.xlane.xlu0 %1397
    %v1399 = vsel %vm1070, %v723, 0.0
    %v1400 = vadd.f32 %v722, %v1399
    %1401 = vadd.xlane.f32.xlu0 %v1400
    %v1402 = vpop.xlane.xlu0 %1401
    %v1403 = vsel %vm1070, %v725, 0.0
    %v1404 = vadd.f32 %v724, %v1403
    %1405 = vadd.xlane.f32.xlu0 %v1404
    %v1406 = vpop.xlane.xlu0 %1405
    %v1407 = vsel %vm1070, %v727, 0.0
    %v1408 = vadd.f32 %v726, %v1407
    %1409 = vadd.xlane.f32.xlu0 %v1408
    %v1410 = vpop.xlane.xlu0 %1409
    %v1411 = vsel %vm1070, %v729, 0.0
    %v1412 = vadd.f32 %v728, %v1411
    %1413 = vadd.xlane.f32.xlu0 %v1412
    %v1414 = vpop.xlane.xlu0 %1413
    %v1415 = vsel %vm1070, %v731, 0.0
    %v1416 = vadd.f32 %v730, %v1415
    %1417 = vadd.xlane.f32.xlu0 %v1416
    %v1418 = vpop.xlane.xlu0 %1417
    %v1419 = vsel %vm1070, %v733, 0.0
    %v1420 = vadd.f32 %v732, %v1419
    %1421 = vadd.xlane.f32.xlu0 %v1420
    %v1422 = vpop.xlane.xlu0 %1421
    %v1423 = vsel %vm1070, %v735, 0.0
    %v1424 = vadd.f32 %v734, %v1423
    %1425 = vadd.xlane.f32.xlu0 %v1424
    %v1426 = vpop.xlane.xlu0 %1425
    %v1427 = vsel %vm1070, %v737, 0.0
    %v1428 = vadd.f32 %v736, %v1427
    %1429 = vadd.xlane.f32.xlu0 %v1428
    %v1430 = vpop.xlane.xlu0 %1429
    %v1431 = vsel %vm1070, %v739, 0.0
    %v1432 = vadd.f32 %v738, %v1431
    %1433 = vadd.xlane.f32.xlu0 %v1432
    %v1434 = vpop.xlane.xlu0 %1433
    %v1435 = vsel %vm1070, %v741, 0.0
    %v1436 = vadd.f32 %v740, %v1435
    %1437 = vadd.xlane.f32.xlu0 %v1436
    %v1438 = vpop.xlane.xlu0 %1437
    %v1439 = vsel %vm1070, %v743, 0.0
    %v1440 = vadd.f32 %v742, %v1439
    %1441 = vadd.xlane.f32.xlu0 %v1440
    %v1442 = vpop.xlane.xlu0 %1441
    %v1443 = vsel %vm1070, %v745, 0.0
    %v1444 = vadd.f32 %v744, %v1443
    %1445 = vadd.xlane.f32.xlu0 %v1444
    %v1446 = vpop.xlane.xlu0 %1445
    %v1447 = vsel %vm1070, %v747, 0.0
    %v1448 = vadd.f32 %v746, %v1447
    %1449 = vadd.xlane.f32.xlu0 %v1448
    %v1450 = vpop.xlane.xlu0 %1449
    %v1451 = vsel %vm1070, %v749, 0.0
    %v1452 = vadd.f32 %v748, %v1451
    %1453 = vadd.xlane.f32.xlu0 %v1452
    %v1454 = vpop.xlane.xlu0 %1453
    %v1455 = vsel %vm1070, %v751, 0.0
    %v1456 = vadd.f32 %v750, %v1455
    %1457 = vadd.xlane.f32.xlu0 %v1456
    %v1458 = vpop.xlane.xlu0 %1457
    %v1459 = vsel %vm1070, %v753, 0.0
    %v1460 = vadd.f32 %v752, %v1459
    %1461 = vadd.xlane.f32.xlu0 %v1460
    %v1462 = vpop.xlane.xlu0 %1461
    %v1463 = vsel %vm1070, %v755, 0.0
    %v1464 = vadd.f32 %v754, %v1463
    %1465 = vadd.xlane.f32.xlu0 %v1464
    %v1466 = vpop.xlane.xlu0 %1465
    %v1467 = vsel %vm1070, %v757, 0.0
    %v1468 = vadd.f32 %v756, %v1467
    %1469 = vadd.xlane.f32.xlu0 %v1468
    %v1470 = vpop.xlane.xlu0 %1469
    %v1471 = vsel %vm1070, %v759, 0.0
    %v1472 = vadd.f32 %v758, %v1471
    %1473 = vadd.xlane.f32.xlu0 %v1472
    %v1474 = vpop.xlane.xlu0 %1473
    %v1475 = vsel %vm1070, %v761, 0.0
    %v1476 = vadd.f32 %v760, %v1475
    %1477 = vadd.xlane.f32.xlu0 %v1476
    %v1478 = vpop.xlane.xlu0 %1477
    %v1479 = vsel %vm1070, %v763, 0.0
    %v1480 = vadd.f32 %v762, %v1479
    %1481 = vadd.xlane.f32.xlu0 %v1480
    %v1482 = vpop.xlane.xlu0 %1481
    %v1483 = vsel %vm1070, %v765, 0.0
    %v1484 = vadd.f32 %v764, %v1483
    %1485 = vadd.xlane.f32.xlu0 %v1484
    %v1486 = vpop.xlane.xlu0 %1485
    %v1487 = vsel %vm1070, %v767, 0.0
    %v1488 = vadd.f32 %v766, %v1487
    %1489 = vadd.xlane.f32.xlu0 %v1488
    %v1490 = vpop.xlane.xlu0 %1489
    %v1491 = vsel %vm1070, %v769, 0.0
    %v1492 = vadd.f32 %v768, %v1491
    %1493 = vadd.xlane.f32.xlu0 %v1492
    %v1494 = vpop.xlane.xlu0 %1493
    %v1495 = vsel %vm1070, %v771, 0.0
    %v1496 = vadd.f32 %v770, %v1495
    %1497 = vadd.xlane.f32.xlu0 %v1496
    %v1498 = vpop.xlane.xlu0 %1497
    %v1499 = vsel %vm1070, %v773, 0.0
    %v1500 = vadd.f32 %v772, %v1499
    %1501 = vadd.xlane.f32.xlu0 %v1500
    %v1502 = vpop.xlane.xlu0 %1501
    %v1503 = vsel %vm1070, %v775, 0.0
    %v1504 = vadd.f32 %v774, %v1503
    %1505 = vadd.xlane.f32.xlu0 %v1504
    %v1506 = vpop.xlane.xlu0 %1505
    %v1507 = vsel %vm1070, %v777, 0.0
    %v1508 = vadd.f32 %v776, %v1507
    %1509 = vadd.xlane.f32.xlu0 %v1508
    %v1510 = vpop.xlane.xlu0 %1509
    %v1511 = vsel %vm1070, %v779, 0.0
    %v1512 = vadd.f32 %v778, %v1511
    %1513 = vadd.xlane.f32.xlu0 %v1512
    %v1514 = vpop.xlane.xlu0 %1513
    %v1515 = vsel %vm1070, %v781, 0.0
    %v1516 = vadd.f32 %v780, %v1515
    %1517 = vadd.xlane.f32.xlu0 %v1516
    %v1518 = vpop.xlane.xlu0 %1517
    %v1519 = vsel %vm1070, %v783, 0.0
    %v1520 = vadd.f32 %v782, %v1519
    %1521 = vadd.xlane.f32.xlu0 %v1520
    %v1522 = vpop.xlane.xlu0 %1521
    %v1523 = vsel %vm1070, %v785, 0.0
    %v1524 = vadd.f32 %v784, %v1523
    %1525 = vadd.xlane.f32.xlu0 %v1524
    %v1526 = vpop.xlane.xlu0 %1525
    %v1527 = vsel %vm1070, %v787, 0.0
    %v1528 = vadd.f32 %v786, %v1527
    %1529 = vadd.xlane.f32.xlu0 %v1528
    %v1530 = vpop.xlane.xlu0 %1529
    %v1531 = vsel %vm1070, %v789, 0.0
    %v1532 = vadd.f32 %v788, %v1531
    %1533 = vadd.xlane.f32.xlu0 %v1532
    %v1534 = vpop.xlane.xlu0 %1533
    %v1535 = vsel %vm1070, %v791, 0.0
    %v1536 = vadd.f32 %v790, %v1535
    %1537 = vadd.xlane.f32.xlu0 %v1536
    %v1538 = vpop.xlane.xlu0 %1537
    %v1539 = vsel %vm1070, %v793, 0.0
    %v1540 = vadd.f32 %v792, %v1539
    %1541 = vadd.xlane.f32.xlu0 %v1540
    %v1542 = vpop.xlane.xlu0 %1541
    %v1543 = vsel %vm1070, %v795, 0.0
    %v1544 = vadd.f32 %v794, %v1543
    %1545 = vadd.xlane.f32.xlu0 %v1544
    %v1546 = vpop.xlane.xlu0 %1545
    %v1547 = vsel %vm1070, %v797, 0.0
    %v1548 = vadd.f32 %v796, %v1547
    %1549 = vadd.xlane.f32.xlu0 %v1548
    %v1550 = vpop.xlane.xlu0 %1549
    %v1551 = vsel %vm1070, %v799, 0.0
    %v1552 = vadd.f32 %v798, %v1551
    %1553 = vadd.xlane.f32.xlu0 %v1552
    %v1554 = vpop.xlane.xlu0 %1553
    %v1555 = vsel %vm1070, %v801, 0.0
    %v1556 = vadd.f32 %v800, %v1555
    %1557 = vadd.xlane.f32.xlu0 %v1556
    %v1558 = vpop.xlane.xlu0 %1557
    %v1559 = vsel %vm1070, %v803, 0.0
    %v1560 = vadd.f32 %v802, %v1559
    %1561 = vadd.xlane.f32.xlu0 %v1560
    %v1562 = vpop.xlane.xlu0 %1561
    %v1563 = vsel %vm1070, %v805, 0.0
    %v1564 = vadd.f32 %v804, %v1563
    %1565 = vadd.xlane.f32.xlu0 %v1564
    %v1566 = vpop.xlane.xlu0 %1565
    %v1567 = vsel %vm1070, %v807, 0.0
    %v1568 = vadd.f32 %v806, %v1567
    %1569 = vadd.xlane.f32.xlu0 %v1568
    %v1570 = vpop.xlane.xlu0 %1569
    %v1571 = vsel %vm1070, %v809, 0.0
    %v1572 = vadd.f32 %v808, %v1571
    %1573 = vadd.xlane.f32.xlu0 %v1572
    %v1574 = vpop.xlane.xlu0 %1573
    %v1575 = vsel %vm1070, %v811, 0.0
    %v1576 = vadd.f32 %v810, %v1575
    %1577 = vadd.xlane.f32.xlu0 %v1576
    %v1578 = vpop.xlane.xlu0 %1577
    %v1579 = vsel %vm1070, %v813, 0.0
    %v1580 = vadd.f32 %v812, %v1579
    %1581 = vadd.xlane.f32.xlu0 %v1580
    %v1582 = vpop.xlane.xlu0 %1581
    %v1583 = vsel %vm1070, %v815, 0.0
    %v1584 = vadd.f32 %v814, %v1583
    %1585 = vadd.xlane.f32.xlu0 %v1584
    %v1586 = vpop.xlane.xlu0 %1585
    %v1587 = vsel %vm1070, %v817, 0.0
    %v1588 = vadd.f32 %v816, %v1587
    %1589 = vadd.xlane.f32.xlu0 %v1588
    %v1590 = vpop.xlane.xlu0 %1589
    %v1591 = vsel %vm1070, %v819, 0.0
    %v1592 = vadd.f32 %v818, %v1591
    %1593 = vadd.xlane.f32.xlu0 %v1592
    %v1594 = vpop.xlane.xlu0 %1593
    %v1595 = vsel %vm1070, %v821, 0.0
    %v1596 = vadd.f32 %v820, %v1595
    %1597 = vadd.xlane.f32.xlu0 %v1596
    %v1598 = vpop.xlane.xlu0 %1597
    %v1599 = vsel %vm1070, %v823, 0.0
    %v1600 = vadd.f32 %v822, %v1599
    %1601 = vadd.xlane.f32.xlu0 %v1600
    %v1602 = vpop.xlane.xlu0 %1601
    %v1603 = vsel %vm1070, %v825, 0.0
    %v1604 = vadd.f32 %v824, %v1603
    %1605 = vadd.xlane.f32.xlu0 %v1604
    %v1606 = vpop.xlane.xlu0 %1605
    %v1607 = vsel %vm1070, %v827, 0.0
    %v1608 = vadd.f32 %v826, %v1607
    %1609 = vadd.xlane.f32.xlu0 %v1608
    %v1610 = vpop.xlane.xlu0 %1609
    %v1611 = vsel %vm1070, %v829, 0.0
    %v1612 = vadd.f32 %v828, %v1611
    %1613 = vadd.xlane.f32.xlu0 %v1612
    %v1614 = vpop.xlane.xlu0 %1613
    %v1615 = vsel %vm1070, %v831, 0.0
    %v1616 = vadd.f32 %v830, %v1615
    %1617 = vadd.xlane.f32.xlu0 %v1616
    %v1618 = vpop.xlane.xlu0 %1617
    %v1619 = vsel %vm1070, %v833, 0.0
    %v1620 = vadd.f32 %v832, %v1619
    %1621 = vadd.xlane.f32.xlu0 %v1620
    %v1622 = vpop.xlane.xlu0 %1621
    %v1623 = vsel %vm1070, %v835, 0.0
    %v1624 = vadd.f32 %v834, %v1623
    %1625 = vadd.xlane.f32.xlu0 %v1624
    %v1626 = vpop.xlane.xlu0 %1625
    %v1627 = vsel %vm1070, %v837, 0.0
    %v1628 = vadd.f32 %v836, %v1627
    %1629 = vadd.xlane.f32.xlu0 %v1628
    %v1630 = vpop.xlane.xlu0 %1629
    %v1631 = vsel %vm1070, %v839, 0.0
    %v1632 = vadd.f32 %v838, %v1631
    %1633 = vadd.xlane.f32.xlu0 %v1632
    %v1634 = vpop.xlane.xlu0 %1633
    %v1635 = vsel %vm1070, %v841, 0.0
    %v1636 = vadd.f32 %v840, %v1635
    %1637 = vadd.xlane.f32.xlu0 %v1636
    %v1638 = vpop.xlane.xlu0 %1637
    %v1639 = vsel %vm1070, %v843, 0.0
    %v1640 = vadd.f32 %v842, %v1639
    %1641 = vadd.xlane.f32.xlu0 %v1640
    %v1642 = vpop.xlane.xlu0 %1641
    %v1643 = vsel %vm1070, %v845, 0.0
    %v1644 = vadd.f32 %v844, %v1643
    %1645 = vadd.xlane.f32.xlu0 %v1644
    %v1646 = vpop.xlane.xlu0 %1645
    %v1647 = vsel %vm1070, %v847, 0.0
    %v1648 = vadd.f32 %v846, %v1647
    %1649 = vadd.xlane.f32.xlu0 %v1648
    %v1650 = vpop.xlane.xlu0 %1649
    %v1651 = vsel %vm1070, %v849, 0.0
    %v1652 = vadd.f32 %v848, %v1651
    %1653 = vadd.xlane.f32.xlu0 %v1652
    %v1654 = vpop.xlane.xlu0 %1653
    %v1655 = vsel %vm1070, %v851, 0.0
    %v1656 = vadd.f32 %v850, %v1655
    %1657 = vadd.xlane.f32.xlu0 %v1656
    %v1658 = vpop.xlane.xlu0 %1657
    %v1659 = vsel %vm1070, %v853, 0.0
    %v1660 = vadd.f32 %v852, %v1659
    %1661 = vadd.xlane.f32.xlu0 %v1660
    %v1662 = vpop.xlane.xlu0 %1661
    %v1663 = vsel %vm1070, %v855, 0.0
    %v1664 = vadd.f32 %v854, %v1663
    %1665 = vadd.xlane.f32.xlu0 %v1664
    %v1666 = vpop.xlane.xlu0 %1665
    %v1667 = vsel %vm1070, %v857, 0.0
    %v1668 = vadd.f32 %v856, %v1667
    %1669 = vadd.xlane.f32.xlu0 %v1668
    %v1670 = vpop.xlane.xlu0 %1669
    %v1671 = vsel %vm1070, %v859, 0.0
    %v1672 = vadd.f32 %v858, %v1671
    %1673 = vadd.xlane.f32.xlu0 %v1672
    %v1674 = vpop.xlane.xlu0 %1673
    %v1675 = vsel %vm1070, %v861, 0.0
    %v1676 = vadd.f32 %v860, %v1675
    %1677 = vadd.xlane.f32.xlu0 %v1676
    %v1678 = vpop.xlane.xlu0 %1677
    %v1679 = vsel %vm1070, %v863, 0.0
    %v1680 = vadd.f32 %v862, %v1679
    %1681 = vadd.xlane.f32.xlu0 %v1680
    %v1682 = vpop.xlane.xlu0 %1681
    %v1683 = vsel %vm1070, %v865, 0.0
    %v1684 = vadd.f32 %v864, %v1683
    %1685 = vadd.xlane.f32.xlu0 %v1684
    %v1686 = vpop.xlane.xlu0 %1685
    %v1687 = vsel %vm1070, %v867, 0.0
    %v1688 = vadd.f32 %v866, %v1687
    %1689 = vadd.xlane.f32.xlu0 %v1688
    %v1690 = vpop.xlane.xlu0 %1689
    %v1691 = vsel %vm1070, %v869, 0.0
    %v1692 = vadd.f32 %v868, %v1691
    %1693 = vadd.xlane.f32.xlu0 %v1692
    %v1694 = vpop.xlane.xlu0 %1693
    %v1695 = vsel %vm1070, %v871, 0.0
    %v1696 = vadd.f32 %v870, %v1695
    %1697 = vadd.xlane.f32.xlu0 %v1696
    %v1698 = vpop.xlane.xlu0 %1697
    %v1699 = vsel %vm1070, %v873, 0.0
    %v1700 = vadd.f32 %v872, %v1699
    %1701 = vadd.xlane.f32.xlu0 %v1700
    %v1702 = vpop.xlane.xlu0 %1701
    %v1703 = vsel %vm1070, %v875, 0.0
    %v1704 = vadd.f32 %v874, %v1703
    %1705 = vadd.xlane.f32.xlu0 %v1704
    %v1706 = vpop.xlane.xlu0 %1705
    %v1707 = vsel %vm1070, %v877, 0.0
    %v1708 = vadd.f32 %v876, %v1707
    %1709 = vadd.xlane.f32.xlu0 %v1708
    %v1710 = vpop.xlane.xlu0 %1709
    %v1711 = vsel %vm1070, %v879, 0.0
    %v1712 = vadd.f32 %v878, %v1711
    %1713 = vadd.xlane.f32.xlu0 %v1712
    %v1714 = vpop.xlane.xlu0 %1713
    %v1715 = vsel %vm1070, %v881, 0.0
    %v1716 = vadd.f32 %v880, %v1715
    %1717 = vadd.xlane.f32.xlu0 %v1716
    %v1718 = vpop.xlane.xlu0 %1717
    %v1719 = vsel %vm1070, %v883, 0.0
    %v1720 = vadd.f32 %v882, %v1719
    %1721 = vadd.xlane.f32.xlu0 %v1720
    %v1722 = vpop.xlane.xlu0 %1721
    %v1723 = vsel %vm1070, %v885, 0.0
    %v1724 = vadd.f32 %v884, %v1723
    %1725 = vadd.xlane.f32.xlu0 %v1724
    %v1726 = vpop.xlane.xlu0 %1725
    %v1727 = vsel %vm1070, %v887, 0.0
    %v1728 = vadd.f32 %v886, %v1727
    %1729 = vadd.xlane.f32.xlu0 %v1728
    %v1730 = vpop.xlane.xlu0 %1729
    %v1731 = vsel %vm1070, %v889, 0.0
    %v1732 = vadd.f32 %v888, %v1731
    %1733 = vadd.xlane.f32.xlu0 %v1732
    %v1734 = vpop.xlane.xlu0 %1733
    %v1735 = vsel %vm1070, %v891, 0.0
    %v1736 = vadd.f32 %v890, %v1735
    %1737 = vadd.xlane.f32.xlu0 %v1736
    %v1738 = vpop.xlane.xlu0 %1737
    %v1739 = vsel %vm1070, %v893, 0.0
    %v1740 = vadd.f32 %v892, %v1739
    %1741 = vadd.xlane.f32.xlu0 %v1740
    %v1742 = vpop.xlane.xlu0 %1741
    %v1743 = vsel %vm1070, %v895, 0.0
    %v1744 = vadd.f32 %v894, %v1743
    %1745 = vadd.xlane.f32.xlu0 %v1744
    %v1746 = vpop.xlane.xlu0 %1745
    %v1747 = vsel %vm1070, %v897, 0.0
    %v1748 = vadd.f32 %v896, %v1747
    %1749 = vadd.xlane.f32.xlu0 %v1748
    %v1750 = vpop.xlane.xlu0 %1749
    %v1751 = vsel %vm1070, %v899, 0.0
    %v1752 = vadd.f32 %v898, %v1751
    %1753 = vadd.xlane.f32.xlu0 %v1752
    %v1754 = vpop.xlane.xlu0 %1753
    %v1755 = vsel %vm1070, %v901, 0.0
    %v1756 = vadd.f32 %v900, %v1755
    %1757 = vadd.xlane.f32.xlu0 %v1756
    %v1758 = vpop.xlane.xlu0 %1757
    %v1759 = vsel %vm1070, %v903, 0.0
    %v1760 = vadd.f32 %v902, %v1759
    %1761 = vadd.xlane.f32.xlu0 %v1760
    %v1762 = vpop.xlane.xlu0 %1761
    %v1763 = vsel %vm1070, %v905, 0.0
    %v1764 = vadd.f32 %v904, %v1763
    %1765 = vadd.xlane.f32.xlu0 %v1764
    %v1766 = vpop.xlane.xlu0 %1765
    %v1767 = vsel %vm1070, %v907, 0.0
    %v1768 = vadd.f32 %v906, %v1767
    %1769 = vadd.xlane.f32.xlu0 %v1768
    %v1770 = vpop.xlane.xlu0 %1769
    %v1771 = vsel %vm1070, %v909, 0.0
    %v1772 = vadd.f32 %v908, %v1771
    %1773 = vadd.xlane.f32.xlu0 %v1772
    %v1774 = vpop.xlane.xlu0 %1773
    %v1775 = vsel %vm1070, %v911, 0.0
    %v1776 = vadd.f32 %v910, %v1775
    %1777 = vadd.xlane.f32.xlu0 %v1776
    %v1778 = vpop.xlane.xlu0 %1777
    %v1779 = vsel %vm1070, %v913, 0.0
    %v1780 = vadd.f32 %v912, %v1779
    %1781 = vadd.xlane.f32.xlu0 %v1780
    %v1782 = vpop.xlane.xlu0 %1781
    %v1783 = vsel %vm1070, %v915, 0.0
    %v1784 = vadd.f32 %v914, %v1783
    %1785 = vadd.xlane.f32.xlu0 %v1784
    %v1786 = vpop.xlane.xlu0 %1785
    %v1787 = vsel %vm1070, %v917, 0.0
    %v1788 = vadd.f32 %v916, %v1787
    %1789 = vadd.xlane.f32.xlu0 %v1788
    %v1790 = vpop.xlane.xlu0 %1789
    %v1791 = vsel %vm1070, %v919, 0.0
    %v1792 = vadd.f32 %v918, %v1791
    %1793 = vadd.xlane.f32.xlu0 %v1792
    %v1794 = vpop.xlane.xlu0 %1793
    %v1795 = vsel %vm1070, %v921, 0.0
    %v1796 = vadd.f32 %v920, %v1795
    %1797 = vadd.xlane.f32.xlu0 %v1796
    %v1798 = vpop.xlane.xlu0 %1797
    %v1799 = vsel %vm1070, %v923, 0.0
    %v1800 = vadd.f32 %v922, %v1799
    %1801 = vadd.xlane.f32.xlu0 %v1800
    %v1802 = vpop.xlane.xlu0 %1801
    %v1803 = vsel %vm1070, %v925, 0.0
    %v1804 = vadd.f32 %v924, %v1803
    %1805 = vadd.xlane.f32.xlu0 %v1804
    %v1806 = vpop.xlane.xlu0 %1805
    %v1807 = vsel %vm1070, %v927, 0.0
    %v1808 = vadd.f32 %v926, %v1807
    %1809 = vadd.xlane.f32.xlu0 %v1808
    %v1810 = vpop.xlane.xlu0 %1809
    %v1811 = vsel %vm1070, %v929, 0.0
    %v1812 = vadd.f32 %v928, %v1811
    %1813 = vadd.xlane.f32.xlu0 %v1812
    %v1814 = vpop.xlane.xlu0 %1813
    %v1815 = vsel %vm1070, %v931, 0.0
    %v1816 = vadd.f32 %v930, %v1815
    %1817 = vadd.xlane.f32.xlu0 %v1816
    %v1818 = vpop.xlane.xlu0 %1817
    %v1819 = vsel %vm1070, %v933, 0.0
    %v1820 = vadd.f32 %v932, %v1819
    %1821 = vadd.xlane.f32.xlu0 %v1820
    %v1822 = vpop.xlane.xlu0 %1821
    %v1823 = vsel %vm1070, %v935, 0.0
    %v1824 = vadd.f32 %v934, %v1823
    %1825 = vadd.xlane.f32.xlu0 %v1824
    %v1826 = vpop.xlane.xlu0 %1825
    %v1827 = vsel %vm1070, %v937, 0.0
    %v1828 = vadd.f32 %v936, %v1827
    %1829 = vadd.xlane.f32.xlu0 %v1828
    %v1830 = vpop.xlane.xlu0 %1829
    %v1831 = vsel %vm1070, %v939, 0.0
    %v1832 = vadd.f32 %v938, %v1831
    %1833 = vadd.xlane.f32.xlu0 %v1832
    %v1834 = vpop.xlane.xlu0 %1833
    %v1835 = vsel %vm1070, %v941, 0.0
    %v1836 = vadd.f32 %v940, %v1835
    %1837 = vadd.xlane.f32.xlu0 %v1836
    %v1838 = vpop.xlane.xlu0 %1837
    %v1839 = vsel %vm1070, %v943, 0.0
    %v1840 = vadd.f32 %v942, %v1839
    %1841 = vadd.xlane.f32.xlu0 %v1840
    %v1842 = vpop.xlane.xlu0 %1841
    %v1843 = vsel %vm1070, %v945, 0.0
    %v1844 = vadd.f32 %v944, %v1843
    %1845 = vadd.xlane.f32.xlu0 %v1844
    %v1846 = vpop.xlane.xlu0 %1845
    %v1847 = vsel %vm1070, %v947, 0.0
    %v1848 = vadd.f32 %v946, %v1847
    %1849 = vadd.xlane.f32.xlu0 %v1848
    %v1850 = vpop.xlane.xlu0 %1849
    %v1851 = vsel %vm1070, %v949, 0.0
    %v1852 = vadd.f32 %v948, %v1851
    %1853 = vadd.xlane.f32.xlu0 %v1852
    %v1854 = vpop.xlane.xlu0 %1853
    %v1855 = vsel %vm1070, %v951, 0.0
    %v1856 = vadd.f32 %v950, %v1855
    %1857 = vadd.xlane.f32.xlu0 %v1856
    %v1858 = vpop.xlane.xlu0 %1857
    %v1859 = vsel %vm1070, %v953, 0.0
    %v1860 = vadd.f32 %v952, %v1859
    %1861 = vadd.xlane.f32.xlu0 %v1860
    %v1862 = vpop.xlane.xlu0 %1861
    %v1863 = vsel %vm1070, %v955, 0.0
    %v1864 = vadd.f32 %v954, %v1863
    %1865 = vadd.xlane.f32.xlu0 %v1864
    %v1866 = vpop.xlane.xlu0 %1865
    %v1867 = vsel %vm1070, %v957, 0.0
    %v1868 = vadd.f32 %v956, %v1867
    %1869 = vadd.xlane.f32.xlu0 %v1868
    %v1870 = vpop.xlane.xlu0 %1869
    %v1871 = vsel %vm1070, %v959, 0.0
    %v1872 = vadd.f32 %v958, %v1871
    %1873 = vadd.xlane.f32.xlu0 %v1872
    %v1874 = vpop.xlane.xlu0 %1873
    %v1875 = vsel %vm1070, %v961, 0.0
    %v1876 = vadd.f32 %v960, %v1875
    %1877 = vadd.xlane.f32.xlu0 %v1876
    %v1878 = vpop.xlane.xlu0 %1877
    %v1879 = vsel %vm1070, %v963, 0.0
    %v1880 = vadd.f32 %v962, %v1879
    %1881 = vadd.xlane.f32.xlu0 %v1880
    %v1882 = vpop.xlane.xlu0 %1881
    %v1883 = vsel %vm1070, %v965, 0.0
    %v1884 = vadd.f32 %v964, %v1883
    %1885 = vadd.xlane.f32.xlu0 %v1884
    %v1886 = vpop.xlane.xlu0 %1885
    %v1887 = vsel %vm1070, %v967, 0.0
    %v1888 = vadd.f32 %v966, %v1887
    %1889 = vadd.xlane.f32.xlu0 %v1888
    %v1890 = vpop.xlane.xlu0 %1889
    %v1891 = vsel %vm1070, %v969, 0.0
    %v1892 = vadd.f32 %v968, %v1891
    %1893 = vadd.xlane.f32.xlu0 %v1892
    %v1894 = vpop.xlane.xlu0 %1893
    %v1895 = vsel %vm1070, %v971, 0.0
    %v1896 = vadd.f32 %v970, %v1895
    %1897 = vadd.xlane.f32.xlu0 %v1896
    %v1898 = vpop.xlane.xlu0 %1897
    %v1899 = vsel %vm1070, %v973, 0.0
    %v1900 = vadd.f32 %v972, %v1899
    %1901 = vadd.xlane.f32.xlu0 %v1900
    %v1902 = vpop.xlane.xlu0 %1901
    %v1903 = vsel %vm1070, %v975, 0.0
    %v1904 = vadd.f32 %v974, %v1903
    %1905 = vadd.xlane.f32.xlu0 %v1904
    %v1906 = vpop.xlane.xlu0 %1905
    %v1907 = vsel %vm1070, %v977, 0.0
    %v1908 = vadd.f32 %v976, %v1907
    %1909 = vadd.xlane.f32.xlu0 %v1908
    %v1910 = vpop.xlane.xlu0 %1909
    %v1911 = vsel %vm1070, %v979, 0.0
    %v1912 = vadd.f32 %v978, %v1911
    %1913 = vadd.xlane.f32.xlu0 %v1912
    %v1914 = vpop.xlane.xlu0 %1913
    %v1915 = vsel %vm1070, %v981, 0.0
    %v1916 = vadd.f32 %v980, %v1915
    %1917 = vadd.xlane.f32.xlu0 %v1916
    %v1918 = vpop.xlane.xlu0 %1917
    %v1919 = vsel %vm1070, %v983, 0.0
    %v1920 = vadd.f32 %v982, %v1919
    %1921 = vadd.xlane.f32.xlu0 %v1920
    %v1922 = vpop.xlane.xlu0 %1921
    %v1923 = vsel %vm1070, %v985, 0.0
    %v1924 = vadd.f32 %v984, %v1923
    %1925 = vadd.xlane.f32.xlu0 %v1924
    %v1926 = vpop.xlane.xlu0 %1925
    %v1927 = vsel %vm1070, %v987, 0.0
    %v1928 = vadd.f32 %v986, %v1927
    %1929 = vadd.xlane.f32.xlu0 %v1928
    %v1930 = vpop.xlane.xlu0 %1929
    %v1931 = vsel %vm1070, %v989, 0.0
    %v1932 = vadd.f32 %v988, %v1931
    %1933 = vadd.xlane.f32.xlu0 %v1932
    %v1934 = vpop.xlane.xlu0 %1933
    %v1935 = vsel %vm1070, %v991, 0.0
    %v1936 = vadd.f32 %v990, %v1935
    %1937 = vadd.xlane.f32.xlu0 %v1936
    %v1938 = vpop.xlane.xlu0 %1937
    %v1939 = vsel %vm1070, %v993, 0.0
    %v1940 = vadd.f32 %v992, %v1939
    %1941 = vadd.xlane.f32.xlu0 %v1940
    %v1942 = vpop.xlane.xlu0 %1941
    %v1943 = vsel %vm1070, %v995, 0.0
    %v1944 = vadd.f32 %v994, %v1943
    %1945 = vadd.xlane.f32.xlu0 %v1944
    %v1946 = vpop.xlane.xlu0 %1945
    %v1947 = vsel %vm1070, %v997, 0.0
    %v1948 = vadd.f32 %v996, %v1947
    %1949 = vadd.xlane.f32.xlu0 %v1948
    %v1950 = vpop.xlane.xlu0 %1949
    %v1951 = vsel %vm1070, %v999, 0.0
    %v1952 = vadd.f32 %v998, %v1951
    %1953 = vadd.xlane.f32.xlu0 %v1952
    %v1954 = vpop.xlane.xlu0 %1953
    %v1955 = vsel %vm1070, %v1001, 0.0
    %v1956 = vadd.f32 %v1000, %v1955
    %1957 = vadd.xlane.f32.xlu0 %v1956
    %v1958 = vpop.xlane.xlu0 %1957
    %v1959 = vsel %vm1070, %v1003, 0.0
    %v1960 = vadd.f32 %v1002, %v1959
    %1961 = vadd.xlane.f32.xlu0 %v1960
    %v1962 = vpop.xlane.xlu0 %1961
    %v1963 = vsel %vm1070, %v1005, 0.0
    %v1964 = vadd.f32 %v1004, %v1963
    %1965 = vadd.xlane.f32.xlu0 %v1964
    %v1966 = vpop.xlane.xlu0 %1965
    %v1967 = vsel %vm1070, %v1007, 0.0
    %v1968 = vadd.f32 %v1006, %v1967
    %1969 = vadd.xlane.f32.xlu0 %v1968
    %v1970 = vpop.xlane.xlu0 %1969
    %v1971 = vsel %vm1070, %v1009, 0.0
    %v1972 = vadd.f32 %v1008, %v1971
    %1973 = vadd.xlane.f32.xlu0 %v1972
    %v1974 = vpop.xlane.xlu0 %1973
    %v1975 = vsel %vm1070, %v1011, 0.0
    %v1976 = vadd.f32 %v1010, %v1975
    %1977 = vadd.xlane.f32.xlu0 %v1976
    %v1978 = vpop.xlane.xlu0 %1977
    %v1979 = vsel %vm1070, %v1013, 0.0
    %v1980 = vadd.f32 %v1012, %v1979
    %1981 = vadd.xlane.f32.xlu0 %v1980
    %v1982 = vpop.xlane.xlu0 %1981
    %v1983 = vsel %vm1070, %v1015, 0.0
    %v1984 = vadd.f32 %v1014, %v1983
    %1985 = vadd.xlane.f32.xlu0 %v1984
    %v1986 = vpop.xlane.xlu0 %1985
    %v1987 = vsel %vm1070, %v1017, 0.0
    %v1988 = vadd.f32 %v1016, %v1987
    %1989 = vadd.xlane.f32.xlu0 %v1988
    %v1990 = vpop.xlane.xlu0 %1989
    %v1991 = vsel %vm1070, %v1019, 0.0
    %v1992 = vadd.f32 %v1018, %v1991
    %1993 = vadd.xlane.f32.xlu0 %v1992
    %v1994 = vpop.xlane.xlu0 %1993
    %v1995 = vsel %vm1070, %v1021, 0.0
    %v1996 = vadd.f32 %v1020, %v1995
    %1997 = vadd.xlane.f32.xlu0 %v1996
    %v1998 = vpop.xlane.xlu0 %1997
    %v1999 = vsel %vm1070, %v1023, 0.0
    %v2000 = vadd.f32 %v1022, %v1999
    %2001 = vadd.xlane.f32.xlu0 %v2000
    %v2002 = vpop.xlane.xlu0 %2001
    %v2003 = vsel %vm1070, %v1025, 0.0
    %v2004 = vadd.f32 %v1024, %v2003
    %2005 = vadd.xlane.f32.xlu0 %v2004
    %v2006 = vpop.xlane.xlu0 %2005
    %v2007 = vsel %vm1070, %v1027, 0.0
    %v2008 = vadd.f32 %v1026, %v2007
    %2009 = vadd.xlane.f32.xlu0 %v2008
    %v2010 = vpop.xlane.xlu0 %2009
    %v2011 = vsel %vm1070, %v1029, 0.0
    %v2012 = vadd.f32 %v1028, %v2011
    %2013 = vadd.xlane.f32.xlu0 %v2012
    %v2014 = vpop.xlane.xlu0 %2013
    %v2015 = vsel %vm1070, %v1031, 0.0
    %v2016 = vadd.f32 %v1030, %v2015
    %2017 = vadd.xlane.f32.xlu0 %v2016
    %v2018 = vpop.xlane.xlu0 %2017
    %v2019 = vsel %vm1070, %v1033, 0.0
    %v2020 = vadd.f32 %v1032, %v2019
    %2021 = vadd.xlane.f32.xlu0 %v2020
    %v2022 = vpop.xlane.xlu0 %2021
    %v2023 = vsel %vm1070, %v1035, 0.0
    %v2024 = vadd.f32 %v1034, %v2023
    %2025 = vadd.xlane.f32.xlu0 %v2024
    %v2026 = vpop.xlane.xlu0 %2025
    %v2027 = vsel %vm1070, %v1037, 0.0
    %v2028 = vadd.f32 %v1036, %v2027
    %2029 = vadd.xlane.f32.xlu0 %v2028
    %v2030 = vpop.xlane.xlu0 %2029
    %v2031 = vsel %vm1070, %v1039, 0.0
    %v2032 = vadd.f32 %v1038, %v2031
    %2033 = vadd.xlane.f32.xlu0 %v2032
    %v2034 = vpop.xlane.xlu0 %2033
    %v2035 = vsel %vm1070, %v1041, 0.0
    %v2036 = vadd.f32 %v1040, %v2035
    %2037 = vadd.xlane.f32.xlu0 %v2036
    %v2038 = vpop.xlane.xlu0 %2037
    %v2039 = vsel %vm1070, %v1043, 0.0
    %v2040 = vadd.f32 %v1042, %v2039
    %2041 = vadd.xlane.f32.xlu0 %v2040
    %v2042 = vpop.xlane.xlu0 %2041
    %v2043 = vsel %vm1070, %v1045, 0.0
    %v2044 = vadd.f32 %v1044, %v2043
    %2045 = vadd.xlane.f32.xlu0 %v2044
    %v2046 = vpop.xlane.xlu0 %2045
    %v2047 = vsel %vm1070, %v1047, 0.0
    %v2048 = vadd.f32 %v1046, %v2047
    %2049 = vadd.xlane.f32.xlu0 %v2048
    %v2050 = vpop.xlane.xlu0 %2049
    %v2051 = vsel %vm1070, %v1049, 0.0
    %v2052 = vadd.f32 %v1048, %v2051
    %2053 = vadd.xlane.f32.xlu0 %v2052
    %v2054 = vpop.xlane.xlu0 %2053
    %v2055 = vsel %vm1070, %v1051, 0.0
    %v2056 = vadd.f32 %v1050, %v2055
    %2057 = vadd.xlane.f32.xlu0 %v2056
    %v2058 = vpop.xlane.xlu0 %2057
    %v2059 = vsel %vm1070, %v1053, 0.0
    %v2060 = vadd.f32 %v1052, %v2059
    %2061 = vadd.xlane.f32.xlu0 %v2060
    %v2062 = vpop.xlane.xlu0 %2061
    %v2063 = vsel %vm1070, %v1055, 0.0
    %v2064 = vadd.f32 %v1054, %v2063
    %2065 = vadd.xlane.f32.xlu0 %v2064
    %v2066 = vpop.xlane.xlu0 %2065
    %v2067 = vsel %vm1070, %v1057, 0.0
    %v2068 = vadd.f32 %v1056, %v2067
    %2069 = vadd.xlane.f32.xlu0 %v2068
    %v2070 = vpop.xlane.xlu0 %2069
    %v2071 = vsel %vm1070, %v1059, 0.0
    %v2072 = vadd.f32 %v1058, %v2071
    %2073 = vadd.xlane.f32.xlu0 %v2072
    %v2074 = vpop.xlane.xlu0 %2073
    %v2075 = vsel %vm1070, %v1061, 0.0
    %v2076 = vadd.f32 %v1060, %v2075
    %2077 = vadd.xlane.f32.xlu0 %v2076
    %v2078 = vpop.xlane.xlu0 %2077
    %v2079 = vsel %vm1070, %v1063, 0.0
    %v2080 = vadd.f32 %v1062, %v2079
    %2081 = vadd.xlane.f32.xlu0 %v2080
    %v2082 = vpop.xlane.xlu0 %2081
    %v2083 = vsel %vm1070, %v1065, 0.0
    %v2084 = vadd.f32 %v1064, %v2083
    %2085 = vadd.xlane.f32.xlu0 %v2084
    %v2086 = vpop.xlane.xlu0 %2085
    %v2087 = vsel %vm1070, %v1067, 0.0
    %v2088 = vadd.f32 %v1066, %v2087
    %2089 = vadd.xlane.f32.xlu0 %v2088
    %v2090 = vpop.xlane.xlu0 %2089
    %v2091 = vsel %vm1070, %v1069, 0.0
    %v2092 = vadd.f32 %v1068, %v2091
    %2093 = vadd.xlane.f32.xlu0 %v2092
    %v2094 = vpop.xlane.xlu0 %2093
    %s2095 = sld [smem:[#allocation2]]
    %v2096 = vstv %s2095
    %v2097 = vadd.f32 %v1074, %v2096
    %v2098 = vadd.f32 %v1078, %v2096
    %v2099 = vadd.f32 %v1082, %v2096
    %v2100 = vadd.f32 %v1086, %v2096
    %v2101 = vadd.f32 %v1090, %v2096
    %v2102 = vadd.f32 %v1094, %v2096
    %v2103 = vadd.f32 %v1098, %v2096
    %v2104 = vadd.f32 %v1102, %v2096
    %v2105 = vadd.f32 %v1106, %v2096
    %v2106 = vadd.f32 %v1110, %v2096
    %v2107 = vadd.f32 %v1114, %v2096
    %v2108 = vadd.f32 %v1118, %v2096
    %v2109 = vadd.f32 %v1122, %v2096
    %v2110 = vadd.f32 %v1126, %v2096
    %v2111 = vadd.f32 %v1130, %v2096
    %v2112 = vadd.f32 %v1134, %v2096
    %v2113 = vadd.f32 %v1138, %v2096
    %v2114 = vadd.f32 %v1142, %v2096
    %v2115 = vadd.f32 %v1146, %v2096
    %v2116 = vadd.f32 %v1150, %v2096
    %v2117 = vadd.f32 %v1154, %v2096
    %v2118 = vadd.f32 %v1158, %v2096
    %v2119 = vadd.f32 %v1162, %v2096
    %v2120 = vadd.f32 %v1166, %v2096
    %v2121 = vadd.f32 %v1170, %v2096
    %v2122 = vadd.f32 %v1174, %v2096
    %v2123 = vadd.f32 %v1178, %v2096
    %v2124 = vadd.f32 %v1182, %v2096
    %v2125 = vadd.f32 %v1186, %v2096
    %v2126 = vadd.f32 %v1190, %v2096
    %v2127 = vadd.f32 %v1194, %v2096
    %v2128 = vadd.f32 %v1198, %v2096
    %v2129 = vadd.f32 %v1202, %v2096
    %v2130 = vadd.f32 %v1206, %v2096
    %v2131 = vadd.f32 %v1210, %v2096
    %v2132 = vadd.f32 %v1214, %v2096
    %v2133 = vadd.f32 %v1218, %v2096
    %v2134 = vadd.f32 %v1222, %v2096
    %v2135 = vadd.f32 %v1226, %v2096
    %v2136 = vadd.f32 %v1230, %v2096
    %v2137 = vadd.f32 %v1234, %v2096
    %v2138 = vadd.f32 %v1238, %v2096
    %v2139 = vadd.f32 %v1242, %v2096
    %v2140 = vadd.f32 %v1246, %v2096
    %v2141 = vadd.f32 %v1250, %v2096
    %v2142 = vadd.f32 %v1254, %v2096
    %v2143 = vadd.f32 %v1258, %v2096
    %v2144 = vadd.f32 %v1262, %v2096
    %v2145 = vadd.f32 %v1266, %v2096
    %v2146 = vadd.f32 %v1270, %v2096
    %v2147 = vadd.f32 %v1274, %v2096
    %v2148 = vadd.f32 %v1278, %v2096
    %v2149 = vadd.f32 %v1282, %v2096
    %v2150 = vadd.f32 %v1286, %v2096
    %v2151 = vadd.f32 %v1290, %v2096
    %v2152 = vadd.f32 %v1294, %v2096
    %v2153 = vadd.f32 %v1298, %v2096
    %v2154 = vadd.f32 %v1302, %v2096
    %v2155 = vadd.f32 %v1306, %v2096
    %v2156 = vadd.f32 %v1310, %v2096
    %v2157 = vadd.f32 %v1314, %v2096
    %v2158 = vadd.f32 %v1318, %v2096
    %v2159 = vadd.f32 %v1322, %v2096
    %v2160 = vadd.f32 %v1326, %v2096
    %v2161 = vadd.f32 %v1330, %v2096
    %v2162 = vadd.f32 %v1334, %v2096
    %v2163 = vadd.f32 %v1338, %v2096
    %v2164 = vadd.f32 %v1342, %v2096
    %v2165 = vadd.f32 %v1346, %v2096
    %v2166 = vadd.f32 %v1350, %v2096
    %v2167 = vadd.f32 %v1354, %v2096
    %v2168 = vadd.f32 %v1358, %v2096
    %v2169 = vadd.f32 %v1362, %v2096
    %v2170 = vadd.f32 %v1366, %v2096
    %v2171 = vadd.f32 %v1370, %v2096
    %v2172 = vadd.f32 %v1374, %v2096
    %v2173 = vadd.f32 %v1378, %v2096
    %v2174 = vadd.f32 %v1382, %v2096
    %v2175 = vadd.f32 %v1386, %v2096
    %v2176 = vadd.f32 %v1390, %v2096
    %v2177 = vadd.f32 %v1394, %v2096
    %v2178 = vadd.f32 %v1398, %v2096
    %v2179 = vadd.f32 %v1402, %v2096
    %v2180 = vadd.f32 %v1406, %v2096
    %v2181 = vadd.f32 %v1410, %v2096
    %v2182 = vadd.f32 %v1414, %v2096
    %v2183 = vadd.f32 %v1418, %v2096
    %v2184 = vadd.f32 %v1422, %v2096
    %v2185 = vadd.f32 %v1426, %v2096
    %v2186 = vadd.f32 %v1430, %v2096
    %v2187 = vadd.f32 %v1434, %v2096
    %v2188 = vadd.f32 %v1438, %v2096
    %v2189 = vadd.f32 %v1442, %v2096
    %v2190 = vadd.f32 %v1446, %v2096
    %v2191 = vadd.f32 %v1450, %v2096
    %v2192 = vadd.f32 %v1454, %v2096
    %v2193 = vadd.f32 %v1458, %v2096
    %v2194 = vadd.f32 %v1462, %v2096
    %v2195 = vadd.f32 %v1466, %v2096
    %v2196 = vadd.f32 %v1470, %v2096
    %v2197 = vadd.f32 %v1474, %v2096
    %v2198 = vadd.f32 %v1478, %v2096
    %v2199 = vadd.f32 %v1482, %v2096
    %v2200 = vadd.f32 %v1486, %v2096
    %v2201 = vadd.f32 %v1490, %v2096
    %v2202 = vadd.f32 %v1494, %v2096
    %v2203 = vadd.f32 %v1498, %v2096
    %v2204 = vadd.f32 %v1502, %v2096
    %v2205 = vadd.f32 %v1506, %v2096
    %v2206 = vadd.f32 %v1510, %v2096
    %v2207 = vadd.f32 %v1514, %v2096
    %v2208 = vadd.f32 %v1518, %v2096
    %v2209 = vadd.f32 %v1522, %v2096
    %v2210 = vadd.f32 %v1526, %v2096
    %v2211 = vadd.f32 %v1530, %v2096
    %v2212 = vadd.f32 %v1534, %v2096
    %v2213 = vadd.f32 %v1538, %v2096
    %v2214 = vadd.f32 %v1542, %v2096
    %v2215 = vadd.f32 %v1546, %v2096
    %v2216 = vadd.f32 %v1550, %v2096
    %v2217 = vadd.f32 %v1554, %v2096
    %v2218 = vadd.f32 %v1558, %v2096
    %v2219 = vadd.f32 %v1562, %v2096
    %v2220 = vadd.f32 %v1566, %v2096
    %v2221 = vadd.f32 %v1570, %v2096
    %v2222 = vadd.f32 %v1574, %v2096
    %v2223 = vadd.f32 %v1578, %v2096
    %v2224 = vadd.f32 %v1582, %v2096
    %v2225 = vadd.f32 %v1586, %v2096
    %v2226 = vadd.f32 %v1590, %v2096
    %v2227 = vadd.f32 %v1594, %v2096
    %v2228 = vadd.f32 %v1598, %v2096
    %v2229 = vadd.f32 %v1602, %v2096
    %v2230 = vadd.f32 %v1606, %v2096
    %v2231 = vadd.f32 %v1610, %v2096
    %v2232 = vadd.f32 %v1614, %v2096
    %v2233 = vadd.f32 %v1618, %v2096
    %v2234 = vadd.f32 %v1622, %v2096
    %v2235 = vadd.f32 %v1626, %v2096
    %v2236 = vadd.f32 %v1630, %v2096
    %v2237 = vadd.f32 %v1634, %v2096
    %v2238 = vadd.f32 %v1638, %v2096
    %v2239 = vadd.f32 %v1642, %v2096
    %v2240 = vadd.f32 %v1646, %v2096
    %v2241 = vadd.f32 %v1650, %v2096
    %v2242 = vadd.f32 %v1654, %v2096
    %v2243 = vadd.f32 %v1658, %v2096
    %v2244 = vadd.f32 %v1662, %v2096
    %v2245 = vadd.f32 %v1666, %v2096
    %v2246 = vadd.f32 %v1670, %v2096
    %v2247 = vadd.f32 %v1674, %v2096
    %v2248 = vadd.f32 %v1678, %v2096
    %v2249 = vadd.f32 %v1682, %v2096
    %v2250 = vadd.f32 %v1686, %v2096
    %v2251 = vadd.f32 %v1690, %v2096
    %v2252 = vadd.f32 %v1694, %v2096
    %v2253 = vadd.f32 %v1698, %v2096
    %v2254 = vadd.f32 %v1702, %v2096
    %v2255 = vadd.f32 %v1706, %v2096
    %v2256 = vadd.f32 %v1710, %v2096
    %v2257 = vadd.f32 %v1714, %v2096
    %v2258 = vadd.f32 %v1718, %v2096
    %v2259 = vadd.f32 %v1722, %v2096
    %v2260 = vadd.f32 %v1726, %v2096
    %v2261 = vadd.f32 %v1730, %v2096
    %v2262 = vadd.f32 %v1734, %v2096
    %v2263 = vadd.f32 %v1738, %v2096
    %v2264 = vadd.f32 %v1742, %v2096
    %v2265 = vadd.f32 %v1746, %v2096
    %v2266 = vadd.f32 %v1750, %v2096
    %v2267 = vadd.f32 %v1754, %v2096
    %v2268 = vadd.f32 %v1758, %v2096
    %v2269 = vadd.f32 %v1762, %v2096
    %v2270 = vadd.f32 %v1766, %v2096
    %v2271 = vadd.f32 %v1770, %v2096
    %v2272 = vadd.f32 %v1774, %v2096
    %v2273 = vadd.f32 %v1778, %v2096
    %v2274 = vadd.f32 %v1782, %v2096
    %v2275 = vadd.f32 %v1786, %v2096
    %v2276 = vadd.f32 %v1790, %v2096
    %v2277 = vadd.f32 %v1794, %v2096
    %v2278 = vadd.f32 %v1798, %v2096
    %v2279 = vadd.f32 %v1802, %v2096
    %v2280 = vadd.f32 %v1806, %v2096
    %v2281 = vadd.f32 %v1810, %v2096
    %v2282 = vadd.f32 %v1814, %v2096
    %v2283 = vadd.f32 %v1818, %v2096
    %v2284 = vadd.f32 %v1822, %v2096
    %v2285 = vadd.f32 %v1826, %v2096
    %v2286 = vadd.f32 %v1830, %v2096
    %v2287 = vadd.f32 %v1834, %v2096
    %v2288 = vadd.f32 %v1838, %v2096
    %v2289 = vadd.f32 %v1842, %v2096
    %v2290 = vadd.f32 %v1846, %v2096
    %v2291 = vadd.f32 %v1850, %v2096
    %v2292 = vadd.f32 %v1854, %v2096
    %v2293 = vadd.f32 %v1858, %v2096
    %v2294 = vadd.f32 %v1862, %v2096
    %v2295 = vadd.f32 %v1866, %v2096
    %v2296 = vadd.f32 %v1870, %v2096
    %v2297 = vadd.f32 %v1874, %v2096
    %v2298 = vadd.f32 %v1878, %v2096
    %v2299 = vadd.f32 %v1882, %v2096
    %v2300 = vadd.f32 %v1886, %v2096
    %v2301 = vadd.f32 %v1890, %v2096
    %v2302 = vadd.f32 %v1894, %v2096
    %v2303 = vadd.f32 %v1898, %v2096
    %v2304 = vadd.f32 %v1902, %v2096
    %v2305 = vadd.f32 %v1906, %v2096
    %v2306 = vadd.f32 %v1910, %v2096
    %v2307 = vadd.f32 %v1914, %v2096
    %v2308 = vadd.f32 %v1918, %v2096
    %v2309 = vadd.f32 %v1922, %v2096
    %v2310 = vadd.f32 %v1926, %v2096
    %v2311 = vadd.f32 %v1930, %v2096
    %v2312 = vadd.f32 %v1934, %v2096
    %v2313 = vadd.f32 %v1938, %v2096
    %v2314 = vadd.f32 %v1942, %v2096
    %v2315 = vadd.f32 %v1946, %v2096
    %v2316 = vadd.f32 %v1950, %v2096
    %v2317 = vadd.f32 %v1954, %v2096
    %v2318 = vadd.f32 %v1958, %v2096
    %v2319 = vadd.f32 %v1962, %v2096
    %v2320 = vadd.f32 %v1966, %v2096
    %v2321 = vadd.f32 %v1970, %v2096
    %v2322 = vadd.f32 %v1974, %v2096
    %v2323 = vadd.f32 %v1978, %v2096
    %v2324 = vadd.f32 %v1982, %v2096
    %v2325 = vadd.f32 %v1986, %v2096
    %v2326 = vadd.f32 %v1990, %v2096
    %v2327 = vadd.f32 %v1994, %v2096
    %v2328 = vadd.f32 %v1998, %v2096
    %v2329 = vadd.f32 %v2002, %v2096
    %v2330 = vadd.f32 %v2006, %v2096
    %v2331 = vadd.f32 %v2010, %v2096
    %v2332 = vadd.f32 %v2014, %v2096
    %v2333 = vadd.f32 %v2018, %v2096
    %v2334 = vadd.f32 %v2022, %v2096
    %v2335 = vadd.f32 %v2026, %v2096
    %v2336 = vadd.f32 %v2030, %v2096
    %v2337 = vadd.f32 %v2034, %v2096
    %v2338 = vadd.f32 %v2038, %v2096
    %v2339 = vadd.f32 %v2042, %v2096
    %v2340 = vadd.f32 %v2046, %v2096
    %v2341 = vadd.f32 %v2050, %v2096
    %v2342 = vadd.f32 %v2054, %v2096
    %v2343 = vadd.f32 %v2058, %v2096
    %v2344 = vadd.f32 %v2062, %v2096
    %v2345 = vadd.f32 %v2066, %v2096
    %v2346 = vadd.f32 %v2070, %v2096
    %v2347 = vadd.f32 %v2074, %v2096
    %v2348 = vadd.f32 %v2078, %v2096
    %v2349 = vadd.f32 %v2082, %v2096
    %v2350 = vadd.f32 %v2086, %v2096
    %v2351 = vadd.f32 %v2090, %v2096
    %v2352 = vadd.f32 %v2094, %v2096
    %v2353 = vmax.f32 %v2097, 0.0
    %v2354 = vmax.f32 %v2098, 0.0
    %v2355 = vmax.f32 %v2099, 0.0
    %v2356 = vmax.f32 %v2100, 0.0
    %v2357 = vmax.f32 %v2101, 0.0
    %v2358 = vmax.f32 %v2102, 0.0
    %v2359 = vmax.f32 %v2103, 0.0
    %v2360 = vmax.f32 %v2104, 0.0
    %v2361 = vmax.f32 %v2105, 0.0
    %v2362 = vmax.f32 %v2106, 0.0
    %v2363 = vmax.f32 %v2107, 0.0
    %v2364 = vmax.f32 %v2108, 0.0
    %v2365 = vmax.f32 %v2109, 0.0
    %v2366 = vmax.f32 %v2110, 0.0
    %v2367 = vmax.f32 %v2111, 0.0
    %v2368 = vmax.f32 %v2112, 0.0
    %v2369 = vmax.f32 %v2113, 0.0
    %v2370 = vmax.f32 %v2114, 0.0
    %v2371 = vmax.f32 %v2115, 0.0
    %v2372 = vmax.f32 %v2116, 0.0
    %v2373 = vmax.f32 %v2117, 0.0
    %v2374 = vmax.f32 %v2118, 0.0
    %v2375 = vmax.f32 %v2119, 0.0
    %v2376 = vmax.f32 %v2120, 0.0
    %v2377 = vmax.f32 %v2121, 0.0
    %v2378 = vmax.f32 %v2122, 0.0
    %v2379 = vmax.f32 %v2123, 0.0
    %v2380 = vmax.f32 %v2124, 0.0
    %v2381 = vmax.f32 %v2125, 0.0
    %v2382 = vmax.f32 %v2126, 0.0
    %v2383 = vmax.f32 %v2127, 0.0
    %v2384 = vmax.f32 %v2128, 0.0
    %v2385 = vmax.f32 %v2129, 0.0
    %v2386 = vmax.f32 %v2130, 0.0
    %v2387 = vmax.f32 %v2131, 0.0
    %v2388 = vmax.f32 %v2132, 0.0
    %v2389 = vmax.f32 %v2133, 0.0
    %v2390 = vmax.f32 %v2134, 0.0
    %v2391 = vmax.f32 %v2135, 0.0
    %v2392 = vmax.f32 %v2136, 0.0
    %v2393 = vmax.f32 %v2137, 0.0
    %v2394 = vmax.f32 %v2138, 0.0
    %v2395 = vmax.f32 %v2139, 0.0
    %v2396 = vmax.f32 %v2140, 0.0
    %v2397 = vmax.f32 %v2141, 0.0
    %v2398 = vmax.f32 %v2142, 0.0
    %v2399 = vmax.f32 %v2143, 0.0
    %v2400 = vmax.f32 %v2144, 0.0
    %v2401 = vmax.f32 %v2145, 0.0
    %v2402 = vmax.f32 %v2146, 0.0
    %v2403 = vmax.f32 %v2147, 0.0
    %v2404 = vmax.f32 %v2148, 0.0
    %v2405 = vmax.f32 %v2149, 0.0
    %v2406 = vmax.f32 %v2150, 0.0
    %v2407 = vmax.f32 %v2151, 0.0
    %v2408 = vmax.f32 %v2152, 0.0
    %v2409 = vmax.f32 %v2153, 0.0
    %v2410 = vmax.f32 %v2154, 0.0
    %v2411 = vmax.f32 %v2155, 0.0
    %v2412 = vmax.f32 %v2156, 0.0
    %v2413 = vmax.f32 %v2157, 0.0
    %v2414 = vmax.f32 %v2158, 0.0
    %v2415 = vmax.f32 %v2159, 0.0
    %v2416 = vmax.f32 %v2160, 0.0
    %v2417 = vmax.f32 %v2161, 0.0
    %v2418 = vmax.f32 %v2162, 0.0
    %v2419 = vmax.f32 %v2163, 0.0
    %v2420 = vmax.f32 %v2164, 0.0
    %v2421 = vmax.f32 %v2165, 0.0
    %v2422 = vmax.f32 %v2166, 0.0
    %v2423 = vmax.f32 %v2167, 0.0
    %v2424 = vmax.f32 %v2168, 0.0
    %v2425 = vmax.f32 %v2169, 0.0
    %v2426 = vmax.f32 %v2170, 0.0
    %v2427 = vmax.f32 %v2171, 0.0
    %v2428 = vmax.f32 %v2172, 0.0
    %v2429 = vmax.f32 %v2173, 0.0
    %v2430 = vmax.f32 %v2174, 0.0
    %v2431 = vmax.f32 %v2175, 0.0
    %v2432 = vmax.f32 %v2176, 0.0
    %v2433 = vmax.f32 %v2177, 0.0
    %v2434 = vmax.f32 %v2178, 0.0
    %v2435 = vmax.f32 %v2179, 0.0
    %v2436 = vmax.f32 %v2180, 0.0
    %v2437 = vmax.f32 %v2181, 0.0
    %v2438 = vmax.f32 %v2182, 0.0
    %v2439 = vmax.f32 %v2183, 0.0
    %v2440 = vmax.f32 %v2184, 0.0
    %v2441 = vmax.f32 %v2185, 0.0
    %v2442 = vmax.f32 %v2186, 0.0
    %v2443 = vmax.f32 %v2187, 0.0
    %v2444 = vmax.f32 %v2188, 0.0
    %v2445 = vmax.f32 %v2189, 0.0
    %v2446 = vmax.f32 %v2190, 0.0
    %v2447 = vmax.f32 %v2191, 0.0
    %v2448 = vmax.f32 %v2192, 0.0
    %v2449 = vmax.f32 %v2193, 0.0
    %v2450 = vmax.f32 %v2194, 0.0
    %v2451 = vmax.f32 %v2195, 0.0
    %v2452 = vmax.f32 %v2196, 0.0
    %v2453 = vmax.f32 %v2197, 0.0
    %v2454 = vmax.f32 %v2198, 0.0
    %v2455 = vmax.f32 %v2199, 0.0
    %v2456 = vmax.f32 %v2200, 0.0
    %v2457 = vmax.f32 %v2201, 0.0
    %v2458 = vmax.f32 %v2202, 0.0
    %v2459 = vmax.f32 %v2203, 0.0
    %v2460 = vmax.f32 %v2204, 0.0
    %v2461 = vmax.f32 %v2205, 0.0
    %v2462 = vmax.f32 %v2206, 0.0
    %v2463 = vmax.f32 %v2207, 0.0
    %v2464 = vmax.f32 %v2208, 0.0
    %v2465 = vmax.f32 %v2209, 0.0
    %v2466 = vmax.f32 %v2210, 0.0
    %v2467 = vmax.f32 %v2211, 0.0
    %v2468 = vmax.f32 %v2212, 0.0
    %v2469 = vmax.f32 %v2213, 0.0
    %v2470 = vmax.f32 %v2214, 0.0
    %v2471 = vmax.f32 %v2215, 0.0
    %v2472 = vmax.f32 %v2216, 0.0
    %v2473 = vmax.f32 %v2217, 0.0
    %v2474 = vmax.f32 %v2218, 0.0
    %v2475 = vmax.f32 %v2219, 0.0
    %v2476 = vmax.f32 %v2220, 0.0
    %v2477 = vmax.f32 %v2221, 0.0
    %v2478 = vmax.f32 %v2222, 0.0
    %v2479 = vmax.f32 %v2223, 0.0
    %v2480 = vmax.f32 %v2224, 0.0
    %v2481 = vmax.f32 %v2225, 0.0
    %v2482 = vmax.f32 %v2226, 0.0
    %v2483 = vmax.f32 %v2227, 0.0
    %v2484 = vmax.f32 %v2228, 0.0
    %v2485 = vmax.f32 %v2229, 0.0
    %v2486 = vmax.f32 %v2230, 0.0
    %v2487 = vmax.f32 %v2231, 0.0
    %v2488 = vmax.f32 %v2232, 0.0
    %v2489 = vmax.f32 %v2233, 0.0
    %v2490 = vmax.f32 %v2234, 0.0
    %v2491 = vmax.f32 %v2235, 0.0
    %v2492 = vmax.f32 %v2236, 0.0
    %v2493 = vmax.f32 %v2237, 0.0
    %v2494 = vmax.f32 %v2238, 0.0
    %v2495 = vmax.f32 %v2239, 0.0
    %v2496 = vmax.f32 %v2240, 0.0
    %v2497 = vmax.f32 %v2241, 0.0
    %v2498 = vmax.f32 %v2242, 0.0
    %v2499 = vmax.f32 %v2243, 0.0
    %v2500 = vmax.f32 %v2244, 0.0
    %v2501 = vmax.f32 %v2245, 0.0
    %v2502 = vmax.f32 %v2246, 0.0
    %v2503 = vmax.f32 %v2247, 0.0
    %v2504 = vmax.f32 %v2248, 0.0
    %v2505 = vmax.f32 %v2249, 0.0
    %v2506 = vmax.f32 %v2250, 0.0
    %v2507 = vmax.f32 %v2251, 0.0
    %v2508 = vmax.f32 %v2252, 0.0
    %v2509 = vmax.f32 %v2253, 0.0
    %v2510 = vmax.f32 %v2254, 0.0
    %v2511 = vmax.f32 %v2255, 0.0
    %v2512 = vmax.f32 %v2256, 0.0
    %v2513 = vmax.f32 %v2257, 0.0
    %v2514 = vmax.f32 %v2258, 0.0
    %v2515 = vmax.f32 %v2259, 0.0
    %v2516 = vmax.f32 %v2260, 0.0
    %v2517 = vmax.f32 %v2261, 0.0
    %v2518 = vmax.f32 %v2262, 0.0
    %v2519 = vmax.f32 %v2263, 0.0
    %v2520 = vmax.f32 %v2264, 0.0
    %v2521 = vmax.f32 %v2265, 0.0
    %v2522 = vmax.f32 %v2266, 0.0
    %v2523 = vmax.f32 %v2267, 0.0
    %v2524 = vmax.f32 %v2268, 0.0
    %v2525 = vmax.f32 %v2269, 0.0
    %v2526 = vmax.f32 %v2270, 0.0
    %v2527 = vmax.f32 %v2271, 0.0
    %v2528 = vmax.f32 %v2272, 0.0
    %v2529 = vmax.f32 %v2273, 0.0
    %v2530 = vmax.f32 %v2274, 0.0
    %v2531 = vmax.f32 %v2275, 0.0
    %v2532 = vmax.f32 %v2276, 0.0
    %v2533 = vmax.f32 %v2277, 0.0
    %v2534 = vmax.f32 %v2278, 0.0
    %v2535 = vmax.f32 %v2279, 0.0
    %v2536 = vmax.f32 %v2280, 0.0
    %v2537 = vmax.f32 %v2281, 0.0
    %v2538 = vmax.f32 %v2282, 0.0
    %v2539 = vmax.f32 %v2283, 0.0
    %v2540 = vmax.f32 %v2284, 0.0
    %v2541 = vmax.f32 %v2285, 0.0
    %v2542 = vmax.f32 %v2286, 0.0
    %v2543 = vmax.f32 %v2287, 0.0
    %v2544 = vmax.f32 %v2288, 0.0
    %v2545 = vmax.f32 %v2289, 0.0
    %v2546 = vmax.f32 %v2290, 0.0
    %v2547 = vmax.f32 %v2291, 0.0
    %v2548 = vmax.f32 %v2292, 0.0
    %v2549 = vmax.f32 %v2293, 0.0
    %v2550 = vmax.f32 %v2294, 0.0
    %v2551 = vmax.f32 %v2295, 0.0
    %v2552 = vmax.f32 %v2296, 0.0
    %v2553 = vmax.f32 %v2297, 0.0
    %v2554 = vmax.f32 %v2298, 0.0
    %v2555 = vmax.f32 %v2299, 0.0
    %v2556 = vmax.f32 %v2300, 0.0
    %v2557 = vmax.f32 %v2301, 0.0
    %v2558 = vmax.f32 %v2302, 0.0
    %v2559 = vmax.f32 %v2303, 0.0
    %v2560 = vmax.f32 %v2304, 0.0
    %v2561 = vmax.f32 %v2305, 0.0
    %v2562 = vmax.f32 %v2306, 0.0
    %v2563 = vmax.f32 %v2307, 0.0
    %v2564 = vmax.f32 %v2308, 0.0
    %v2565 = vmax.f32 %v2309, 0.0
    %v2566 = vmax.f32 %v2310, 0.0
    %v2567 = vmax.f32 %v2311, 0.0
    %v2568 = vmax.f32 %v2312, 0.0
    %v2569 = vmax.f32 %v2313, 0.0
    %v2570 = vmax.f32 %v2314, 0.0
    %v2571 = vmax.f32 %v2315, 0.0
    %v2572 = vmax.f32 %v2316, 0.0
    %v2573 = vmax.f32 %v2317, 0.0
    %v2574 = vmax.f32 %v2318, 0.0
    %v2575 = vmax.f32 %v2319, 0.0
    %v2576 = vmax.f32 %v2320, 0.0
    %v2577 = vmax.f32 %v2321, 0.0
    %v2578 = vmax.f32 %v2322, 0.0
    %v2579 = vmax.f32 %v2323, 0.0
    %v2580 = vmax.f32 %v2324, 0.0
    %v2581 = vmax.f32 %v2325, 0.0
    %v2582 = vmax.f32 %v2326, 0.0
    %v2583 = vmax.f32 %v2327, 0.0
    %v2584 = vmax.f32 %v2328, 0.0
    %v2585 = vmax.f32 %v2329, 0.0
    %v2586 = vmax.f32 %v2330, 0.0
    %v2587 = vmax.f32 %v2331, 0.0
    %v2588 = vmax.f32 %v2332, 0.0
    %v2589 = vmax.f32 %v2333, 0.0
    %v2590 = vmax.f32 %v2334, 0.0
    %v2591 = vmax.f32 %v2335, 0.0
    %v2592 = vmax.f32 %v2336, 0.0
    %v2593 = vmax.f32 %v2337, 0.0
    %v2594 = vmax.f32 %v2338, 0.0
    %v2595 = vmax.f32 %v2339, 0.0
    %v2596 = vmax.f32 %v2340, 0.0
    %v2597 = vmax.f32 %v2341, 0.0
    %v2598 = vmax.f32 %v2342, 0.0
    %v2599 = vmax.f32 %v2343, 0.0
    %v2600 = vmax.f32 %v2344, 0.0
    %v2601 = vmax.f32 %v2345, 0.0
    %v2602 = vmax.f32 %v2346, 0.0
    %v2603 = vmax.f32 %v2347, 0.0
    %v2604 = vmax.f32 %v2348, 0.0
    %v2605 = vmax.f32 %v2349, 0.0
    %v2606 = vmax.f32 %v2350, 0.0
    %v2607 = vmax.f32 %v2351, 0.0
    %v2608 = vmax.f32 %v2352, 0.0
    %v2609 = vld [vmem:[%s3] sm:$0xff]
    %v2610 = vld [vmem:[%s3 + $0x8] sm:$0xff]
    %v2611 = vld [vmem:[%s3 + $0x10] sm:$0xff]
    %v2612 = vld [vmem:[%s3 + $0x18] sm:$0xff]
    %v2613 = vld [vmem:[%s3 + $0x20] sm:$0xff]
    %v2614 = vld [vmem:[%s3 + $0x28] sm:$0xff]
    %v2615 = vld [vmem:[%s3 + $0x30] sm:$0xff]
    %v2616 = vld [vmem:[%s3 + $0x38] sm:$0xff]
    %v2617 = vld [vmem:[%s3 + $0x40] sm:$0xff]
    %v2618 = vld [vmem:[%s3 + $0x48] sm:$0xff]
    %v2619 = vld [vmem:[%s3 + $0x50] sm:$0xff]
    %v2620 = vld [vmem:[%s3 + $0x58] sm:$0xff]
    %v2621 = vld [vmem:[%s3 + $0x60] sm:$0xff]
    %v2622 = vld [vmem:[%s3 + $0x68] sm:$0xff]
    %v2623 = vld [vmem:[%s3 + $0x70] sm:$0xff]
    %v2624 = vld [vmem:[%s3 + $0x78] sm:$0xff]
    %v2625 = vld [vmem:[%s3 + $0x80] sm:$0xff]
    %v2626 = vld [vmem:[%s3 + $0x88] sm:$0xff]
    %v2627 = vld [vmem:[%s3 + $0x90] sm:$0xff]
    %v2628 = vld [vmem:[%s3 + $0x98] sm:$0xff]
    %v2629 = vld [vmem:[%s3 + $0xa0] sm:$0xff]
    %v2630 = vld [vmem:[%s3 + $0xa8] sm:$0xff]
    %v2631 = vld [vmem:[%s3 + $0xb0] sm:$0xff]
    %v2632 = vld [vmem:[%s3 + $0xb8] sm:$0xff]
    %v2633 = vld [vmem:[%s3 + $0xc0] sm:$0xff]
    %v2634 = vld [vmem:[%s3 + $0xc8] sm:$0xff]
    %v2635 = vld [vmem:[%s3 + $0xd0] sm:$0xff]
    %v2636 = vld [vmem:[%s3 + $0xd8] sm:$0xff]
    %v2637 = vld [vmem:[%s3 + $0xe0] sm:$0xff]
    %v2638 = vld [vmem:[%s3 + $0xe8] sm:$0xff]
    %v2639 = vld [vmem:[%s3 + $0xf0] sm:$0xff]
    %v2640 = vld [vmem:[%s3 + $0xf8] sm:$0xff]
    %v2641 = vld [vmem:[%s3 + $0x100] sm:$0xff]
    %v2642 = vld [vmem:[%s3 + $0x108] sm:$0xff]
    %v2643 = vld [vmem:[%s3 + $0x110] sm:$0xff]
    %v2644 = vld [vmem:[%s3 + $0x118] sm:$0xff]
    %v2645 = vld [vmem:[%s3 + $0x120] sm:$0xff]
    %v2646 = vld [vmem:[%s3 + $0x128] sm:$0xff]
    %v2647 = vld [vmem:[%s3 + $0x130] sm:$0xff]
    %v2648 = vld [vmem:[%s3 + $0x138] sm:$0xff]
    %v2649 = vld [vmem:[%s3 + $0x140] sm:$0xff]
    %v2650 = vld [vmem:[%s3 + $0x148] sm:$0xff]
    %v2651 = vld [vmem:[%s3 + $0x150] sm:$0xff]
    %v2652 = vld [vmem:[%s3 + $0x158] sm:$0xff]
    %v2653 = vld [vmem:[%s3 + $0x160] sm:$0xff]
    %v2654 = vld [vmem:[%s3 + $0x168] sm:$0xff]
    %v2655 = vld [vmem:[%s3 + $0x170] sm:$0xff]
    %v2656 = vld [vmem:[%s3 + $0x178] sm:$0xff]
    %v2657 = vld [vmem:[%s3 + $0x180] sm:$0xff]
    %v2658 = vld [vmem:[%s3 + $0x188] sm:$0xff]
    %v2659 = vld [vmem:[%s3 + $0x190] sm:$0xff]
    %v2660 = vld [vmem:[%s3 + $0x198] sm:$0xff]
    %v2661 = vld [vmem:[%s3 + $0x1a0] sm:$0xff]
    %v2662 = vld [vmem:[%s3 + $0x1a8] sm:$0xff]
    %v2663 = vld [vmem:[%s3 + $0x1b0] sm:$0xff]
    %v2664 = vld [vmem:[%s3 + $0x1b8] sm:$0xff]
    %v2665 = vld [vmem:[%s3 + $0x1c0] sm:$0xff]
    %v2666 = vld [vmem:[%s3 + $0x1c8] sm:$0xff]
    %v2667 = vld [vmem:[%s3 + $0x1d0] sm:$0xff]
    %v2668 = vld [vmem:[%s3 + $0x1d8] sm:$0xff]
    %v2669 = vld [vmem:[%s3 + $0x1e0] sm:$0xff]
    %v2670 = vld [vmem:[%s3 + $0x1e8] sm:$0xff]
    %v2671 = vld [vmem:[%s3 + $0x1f0] sm:$0xff]
    %v2672 = vld [vmem:[%s3 + $0x1f8] sm:$0xff]
    %v2673 = vld [vmem:[%s4] sm:$0xf]
    %v2675 = vlaneseq
    %v2676 = vshrl.u32 %v2675, 7
    %v2677 = vsub.s32 0, %v2676
    %v2678 = vrot.slane %v2673, %v2677
    %v2679 = vlaneseq
    %v2680 = vshrl.u32 %v2679, 7
    %v2681 = vsub.s32 1, %v2680
    %v2682 = vrot.slane %v2673, %v2681
    %v2683 = vlaneseq
    %v2684 = vshrl.u32 %v2683, 7
    %v2685 = vsub.s32 2, %v2684
    %v2686 = vrot.slane %v2673, %v2685
    %v2687 = vlaneseq
    %v2688 = vshrl.u32 %v2687, 7
    %v2689 = vsub.s32 3, %v2688
    %v2690 = vrot.slane %v2673, %v2689
    %v2951 = vlaneseq
    %v2952 = vand.u32 %v2951, 127
    %v2953 = vlaneseq
    %v2954 = vshrl.u32 %v2953, 7
    %v2955 = vsub.s32 %v2952, %v2954
    %v2956 = vrot.slane %v2353, %v2955
    %v2957 = vadd.s32 %v2952, 4294967288
    %v2958 = vlaneseq
    %v2959 = vshrl.u32 %v2958, 7
    %v2960 = vsub.s32 %v2957, %v2959
    %v2961 = vrot.slane %v2354, %v2960
    %vm2962 = vcmask 130112
    %v2963 = vsel %vm2962, %v2961, %v2956
    %v2964 = vadd.s32 %v2952, 4294967280
    %v2965 = vlaneseq
    %v2966 = vshrl.u32 %v2965, 7
    %v2967 = vsub.s32 %v2964, %v2966
    %v2968 = vrot.slane %v2355, %v2967
    %vm2969 = vcmask 195712
    %v2970 = vsel %vm2969, %v2968, %v2963
    %v2971 = vadd.s32 %v2952, 4294967272
    %v2972 = vlaneseq
    %v2973 = vshrl.u32 %v2972, 7
    %v2974 = vsub.s32 %v2971, %v2973
    %v2975 = vrot.slane %v2356, %v2974
    %vm2976 = vcmask 261312
    %v2977 = vsel %vm2976, %v2975, %v2970
    %v2978 = vadd.s32 %v2952, 4294967264
    %v2979 = vlaneseq
    %v2980 = vshrl.u32 %v2979, 7
    %v2981 = vsub.s32 %v2978, %v2980
    %v2982 = vrot.slane %v2357, %v2981
    %vm2983 = vcmask 326912
    %v2984 = vsel %vm2983, %v2982, %v2977
    %v2985 = vadd.s32 %v2952, 4294967256
    %v2986 = vlaneseq
    %v2987 = vshrl.u32 %v2986, 7
    %v2988 = vsub.s32 %v2985, %v2987
    %v2989 = vrot.slane %v2358, %v2988
    %vm2990 = vcmask 392512
    %v2991 = vsel %vm2990, %v2989, %v2984
    %v2992 = vadd.s32 %v2952, 4294967248
    %v2993 = vlaneseq
    %v2994 = vshrl.u32 %v2993, 7
    %v2995 = vsub.s32 %v2992, %v2994
    %v2996 = vrot.slane %v2359, %v2995
    %vm2997 = vcmask 458112
    %v2998 = vsel %vm2997, %v2996, %v2991
    %v2999 = vadd.s32 %v2952, 4294967240
    %v3000 = vlaneseq
    %v3001 = vshrl.u32 %v3000, 7
    %v3002 = vsub.s32 %v2999, %v3001
    %v3003 = vrot.slane %v2360, %v3002
    %vm3004 = vcmask 523712
    %v3005 = vsel %vm3004, %v3003, %v2998
    %v3006 = vadd.s32 %v2952, 4294967232
    %v3007 = vlaneseq
    %v3008 = vshrl.u32 %v3007, 7
    %v3009 = vsub.s32 %v3006, %v3008
    %v3010 = vrot.slane %v2361, %v3009
    %vm3011 = vcmask 589312
    %v3012 = vsel %vm3011, %v3010, %v3005
    %v3013 = vadd.s32 %v2952, 4294967224
    %v3014 = vlaneseq
    %v3015 = vshrl.u32 %v3014, 7
    %v3016 = vsub.s32 %v3013, %v3015
    %v3017 = vrot.slane %v2362, %v3016
    %vm3018 = vcmask 654912
    %v3019 = vsel %vm3018, %v3017, %v3012
    %v3020 = vadd.s32 %v2952, 4294967216
    %v3021 = vlaneseq
    %v3022 = vshrl.u32 %v3021, 7
    %v3023 = vsub.s32 %v3020, %v3022
    %v3024 = vrot.slane %v2363, %v3023
    %vm3025 = vcmask 720512
    %v3026 = vsel %vm3025, %v3024, %v3019
    %v3027 = vadd.s32 %v2952, 4294967208
    %v3028 = vlaneseq
    %v3029 = vshrl.u32 %v3028, 7
    %v3030 = vsub.s32 %v3027, %v3029
    %v3031 = vrot.slane %v2364, %v3030
    %vm3032 = vcmask 786112
    %v3033 = vsel %vm3032, %v3031, %v3026
    %v3034 = vadd.s32 %v2952, 4294967200
    %v3035 = vlaneseq
    %v3036 = vshrl.u32 %v3035, 7
    %v3037 = vsub.s32 %v3034, %v3036
    %v3038 = vrot.slane %v2365, %v3037
    %vm3039 = vcmask 851712
    %v3040 = vsel %vm3039, %v3038, %v3033
    %v3041 = vadd.s32 %v2952, 4294967192
    %v3042 = vlaneseq
    %v3043 = vshrl.u32 %v3042, 7
    %v3044 = vsub.s32 %v3041, %v3043
    %v3045 = vrot.slane %v2366, %v3044
    %vm3046 = vcmask 917312
    %v3047 = vsel %vm3046, %v3045, %v3040
    %v3048 = vadd.s32 %v2952, 4294967184
    %v3049 = vlaneseq
    %v3050 = vshrl.u32 %v3049, 7
    %v3051 = vsub.s32 %v3048, %v3050
    %v3052 = vrot.slane %v2367, %v3051
    %vm3053 = vcmask 982912
    %v3054 = vsel %vm3053, %v3052, %v3047
    %v3055 = vadd.s32 %v2952, 4294967176
    %v3056 = vlaneseq
    %v3057 = vshrl.u32 %v3056, 7
    %v3058 = vsub.s32 %v3055, %v3057
    %v3059 = vrot.slane %v2368, %v3058
    %vm3060 = vcmask 1048512
    %v3061 = vsel %vm3060, %v3059, %v3054
    %v3062 = vlaneseq
    %v3063 = vshrl.u32 %v3062, 7
    %v3064 = vsub.s32 %v2952, %v3063
    %v3065 = vrot.slane %v2369, %v3064
    %v3066 = vlaneseq
    %v3067 = vshrl.u32 %v3066, 7
    %v3068 = vsub.s32 %v2957, %v3067
    %v3069 = vrot.slane %v2370, %v3068
    %v3070 = vsel %vm2962, %v3069, %v3065
    %v3071 = vlaneseq
    %v3072 = vshrl.u32 %v3071, 7
    %v3073 = vsub.s32 %v2964, %v3072
    %v3074 = vrot.slane %v2371, %v3073
    %v3075 = vsel %vm2969, %v3074, %v3070
    %v3076 = vlaneseq
    %v3077 = vshrl.u32 %v3076, 7
    %v3078 = vsub.s32 %v2971, %v3077
    %v3079 = vrot.slane %v2372, %v3078
    %v3080 = vsel %vm2976, %v3079, %v3075
    %v3081 = vlaneseq
    %v3082 = vshrl.u32 %v3081, 7
    %v3083 = vsub.s32 %v2978, %v3082
    %v3084 = vrot.slane %v2373, %v3083
    %v3085 = vsel %vm2983, %v3084, %v3080
    %v3086 = vlaneseq
    %v3087 = vshrl.u32 %v3086, 7
    %v3088 = vsub.s32 %v2985, %v3087
    %v3089 = vrot.slane %v2374, %v3088
    %v3090 = vsel %vm2990, %v3089, %v3085
    %v3091 = vlaneseq
    %v3092 = vshrl.u32 %v3091, 7
    %v3093 = vsub.s32 %v2992, %v3092
    %v3094 = vrot.slane %v2375, %v3093
    %v3095 = vsel %vm2997, %v3094, %v3090
    %v3096 = vlaneseq
    %v3097 = vshrl.u32 %v3096, 7
    %v3098 = vsub.s32 %v2999, %v3097
    %v3099 = vrot.slane %v2376, %v3098
    %v3100 = vsel %vm3004, %v3099, %v3095
    %v3101 = vlaneseq
    %v3102 = vshrl.u32 %v3101, 7
    %v3103 = vsub.s32 %v3006, %v3102
    %v3104 = vrot.slane %v2377, %v3103
    %v3105 = vsel %vm3011, %v3104, %v3100
    %v3106 = vlaneseq
    %v3107 = vshrl.u32 %v3106, 7
    %v3108 = vsub.s32 %v3013, %v3107
    %v3109 = vrot.slane %v2378, %v3108
    %v3110 = vsel %vm3018, %v3109, %v3105
    %v3111 = vlaneseq
    %v3112 = vshrl.u32 %v3111, 7
    %v3113 = vsub.s32 %v3020, %v3112
    %v3114 = vrot.slane %v2379, %v3113
    %v3115 = vsel %vm3025, %v3114, %v3110
    %v3116 = vlaneseq
    %v3117 = vshrl.u32 %v3116, 7
    %v3118 = vsub.s32 %v3027, %v3117
    %v3119 = vrot.slane %v2380, %v3118
    %v3120 = vsel %vm3032, %v3119, %v3115
    %v3121 = vlaneseq
    %v3122 = vshrl.u32 %v3121, 7
    %v3123 = vsub.s32 %v3034, %v3122
    %v3124 = vrot.slane %v2381, %v3123
    %v3125 = vsel %vm3039, %v3124, %v3120
    %v3126 = vlaneseq
    %v3127 = vshrl.u32 %v3126, 7
    %v3128 = vsub.s32 %v3041, %v3127
    %v3129 = vrot.slane %v2382, %v3128
    %v3130 = vsel %vm3046, %v3129, %v3125
    %v3131 = vlaneseq
    %v3132 = vshrl.u32 %v3131, 7
    %v3133 = vsub.s32 %v3048, %v3132
    %v3134 = vrot.slane %v2383, %v3133
    %v3135 = vsel %vm3053, %v3134, %v3130
    %v3136 = vlaneseq
    %v3137 = vshrl.u32 %v3136, 7
    %v3138 = vsub.s32 %v3055, %v3137
    %v3139 = vrot.slane %v2384, %v3138
    %v3140 = vsel %vm3060, %v3139, %v3135
    %v3141 = vlaneseq
    %v3142 = vshrl.u32 %v3141, 7
    %v3143 = vsub.s32 %v2952, %v3142
    %v3144 = vrot.slane %v2385, %v3143
    %v3145 = vlaneseq
    %v3146 = vshrl.u32 %v3145, 7
    %v3147 = vsub.s32 %v2957, %v3146
    %v3148 = vrot.slane %v2386, %v3147
    %v3149 = vsel %vm2962, %v3148, %v3144
    %v3150 = vlaneseq
    %v3151 = vshrl.u32 %v3150, 7
    %v3152 = vsub.s32 %v2964, %v3151
    %v3153 = vrot.slane %v2387, %v3152
    %v3154 = vsel %vm2969, %v3153, %v3149
    %v3155 = vlaneseq
    %v3156 = vshrl.u32 %v3155, 7
    %v3157 = vsub.s32 %v2971, %v3156
    %v3158 = vrot.slane %v2388, %v3157
    %v3159 = vsel %vm2976, %v3158, %v3154
    %v3160 = vlaneseq
    %v3161 = vshrl.u32 %v3160, 7
    %v3162 = vsub.s32 %v2978, %v3161
    %v3163 = vrot.slane %v2389, %v3162
    %v3164 = vsel %vm2983, %v3163, %v3159
    %v3165 = vlaneseq
    %v3166 = vshrl.u32 %v3165, 7
    %v3167 = vsub.s32 %v2985, %v3166
    %v3168 = vrot.slane %v2390, %v3167
    %v3169 = vsel %vm2990, %v3168, %v3164
    %v3170 = vlaneseq
    %v3171 = vshrl.u32 %v3170, 7
    %v3172 = vsub.s32 %v2992, %v3171
    %v3173 = vrot.slane %v2391, %v3172
    %v3174 = vsel %vm2997, %v3173, %v3169
    %v3175 = vlaneseq
    %v3176 = vshrl.u32 %v3175, 7
    %v3177 = vsub.s32 %v2999, %v3176
    %v3178 = vrot.slane %v2392, %v3177
    %v3179 = vsel %vm3004, %v3178, %v3174
    %v3180 = vlaneseq
    %v3181 = vshrl.u32 %v3180, 7
    %v3182 = vsub.s32 %v3006, %v3181
    %v3183 = vrot.slane %v2393, %v3182
    %v3184 = vsel %vm3011, %v3183, %v3179
    %v3185 = vlaneseq
    %v3186 = vshrl.u32 %v3185, 7
    %v3187 = vsub.s32 %v3013, %v3186
    %v3188 = vrot.slane %v2394, %v3187
    %v3189 = vsel %vm3018, %v3188, %v3184
    %v3190 = vlaneseq
    %v3191 = vshrl.u32 %v3190, 7
    %v3192 = vsub.s32 %v3020, %v3191
    %v3193 = vrot.slane %v2395, %v3192
    %v3194 = vsel %vm3025, %v3193, %v3189
    %v3195 = vlaneseq
    %v3196 = vshrl.u32 %v3195, 7
    %v3197 = vsub.s32 %v3027, %v3196
    %v3198 = vrot.slane %v2396, %v3197
    %v3199 = vsel %vm3032, %v3198, %v3194
    %v3200 = vlaneseq
    %v3201 = vshrl.u32 %v3200, 7
    %v3202 = vsub.s32 %v3034, %v3201
    %v3203 = vrot.slane %v2397, %v3202
    %v3204 = vsel %vm3039, %v3203, %v3199
    %v3205 = vlaneseq
    %v3206 = vshrl.u32 %v3205, 7
    %v3207 = vsub.s32 %v3041, %v3206
    %v3208 = vrot.slane %v2398, %v3207
    %v3209 = vsel %vm3046, %v3208, %v3204
    %v3210 = vlaneseq
    %v3211 = vshrl.u32 %v3210, 7
    %v3212 = vsub.s32 %v3048, %v3211
    %v3213 = vrot.slane %v2399, %v3212
    %v3214 = vsel %vm3053, %v3213, %v3209
    %v3215 = vlaneseq
    %v3216 = vshrl.u32 %v3215, 7
    %v3217 = vsub.s32 %v3055, %v3216
    %v3218 = vrot.slane %v2400, %v3217
    %v3219 = vsel %vm3060, %v3218, %v3214
    %v3220 = vlaneseq
    %v3221 = vshrl.u32 %v3220, 7
    %v3222 = vsub.s32 %v2952, %v3221
    %v3223 = vrot.slane %v2401, %v3222
    %v3224 = vlaneseq
    %v3225 = vshrl.u32 %v3224, 7
    %v3226 = vsub.s32 %v2957, %v3225
    %v3227 = vrot.slane %v2402, %v3226
    %v3228 = vsel %vm2962, %v3227, %v3223
    %v3229 = vlaneseq
    %v3230 = vshrl.u32 %v3229, 7
    %v3231 = vsub.s32 %v2964, %v3230
    %v3232 = vrot.slane %v2403, %v3231
    %v3233 = vsel %vm2969, %v3232, %v3228
    %v3234 = vlaneseq
    %v3235 = vshrl.u32 %v3234, 7
    %v3236 = vsub.s32 %v2971, %v3235
    %v3237 = vrot.slane %v2404, %v3236
    %v3238 = vsel %vm2976, %v3237, %v3233
    %v3239 = vlaneseq
    %v3240 = vshrl.u32 %v3239, 7
    %v3241 = vsub.s32 %v2978, %v3240
    %v3242 = vrot.slane %v2405, %v3241
    %v3243 = vsel %vm2983, %v3242, %v3238
    %v3244 = vlaneseq
    %v3245 = vshrl.u32 %v3244, 7
    %v3246 = vsub.s32 %v2985, %v3245
    %v3247 = vrot.slane %v2406, %v3246
    %v3248 = vsel %vm2990, %v3247, %v3243
    %v3249 = vlaneseq
    %v3250 = vshrl.u32 %v3249, 7
    %v3251 = vsub.s32 %v2992, %v3250
    %v3252 = vrot.slane %v2407, %v3251
    %v3253 = vsel %vm2997, %v3252, %v3248
    %v3254 = vlaneseq
    %v3255 = vshrl.u32 %v3254, 7
    %v3256 = vsub.s32 %v2999, %v3255
    %v3257 = vrot.slane %v2408, %v3256
    %v3258 = vsel %vm3004, %v3257, %v3253
    %v3259 = vlaneseq
    %v3260 = vshrl.u32 %v3259, 7
    %v3261 = vsub.s32 %v3006, %v3260
    %v3262 = vrot.slane %v2409, %v3261
    %v3263 = vsel %vm3011, %v3262, %v3258
    %v3264 = vlaneseq
    %v3265 = vshrl.u32 %v3264, 7
    %v3266 = vsub.s32 %v3013, %v3265
    %v3267 = vrot.slane %v2410, %v3266
    %v3268 = vsel %vm3018, %v3267, %v3263
    %v3269 = vlaneseq
    %v3270 = vshrl.u32 %v3269, 7
    %v3271 = vsub.s32 %v3020, %v3270
    %v3272 = vrot.slane %v2411, %v3271
    %v3273 = vsel %vm3025, %v3272, %v3268
    %v3274 = vlaneseq
    %v3275 = vshrl.u32 %v3274, 7
    %v3276 = vsub.s32 %v3027, %v3275
    %v3277 = vrot.slane %v2412, %v3276
    %v3278 = vsel %vm3032, %v3277, %v3273
    %v3279 = vlaneseq
    %v3280 = vshrl.u32 %v3279, 7
    %v3281 = vsub.s32 %v3034, %v3280
    %v3282 = vrot.slane %v2413, %v3281
    %v3283 = vsel %vm3039, %v3282, %v3278
    %v3284 = vlaneseq
    %v3285 = vshrl.u32 %v3284, 7
    %v3286 = vsub.s32 %v3041, %v3285
    %v3287 = vrot.slane %v2414, %v3286
    %v3288 = vsel %vm3046, %v3287, %v3283
    %v3289 = vlaneseq
    %v3290 = vshrl.u32 %v3289, 7
    %v3291 = vsub.s32 %v3048, %v3290
    %v3292 = vrot.slane %v2415, %v3291
    %v3293 = vsel %vm3053, %v3292, %v3288
    %v3294 = vlaneseq
    %v3295 = vshrl.u32 %v3294, 7
    %v3296 = vsub.s32 %v3055, %v3295
    %v3297 = vrot.slane %v2416, %v3296
    %v3298 = vsel %vm3060, %v3297, %v3293
    %v3299 = vlaneseq
    %v3300 = vshrl.u32 %v3299, 7
    %v3301 = vsub.s32 %v2952, %v3300
    %v3302 = vrot.slane %v2417, %v3301
    %v3303 = vlaneseq
    %v3304 = vshrl.u32 %v3303, 7
    %v3305 = vsub.s32 %v2957, %v3304
    %v3306 = vrot.slane %v2418, %v3305
    %v3307 = vsel %vm2962, %v3306, %v3302
    %v3308 = vlaneseq
    %v3309 = vshrl.u32 %v3308, 7
    %v3310 = vsub.s32 %v2964, %v3309
    %v3311 = vrot.slane %v2419, %v3310
    %v3312 = vsel %vm2969, %v3311, %v3307
    %v3313 = vlaneseq
    %v3314 = vshrl.u32 %v3313, 7
    %v3315 = vsub.s32 %v2971, %v3314
    %v3316 = vrot.slane %v2420, %v3315
    %v3317 = vsel %vm2976, %v3316, %v3312
    %v3318 = vlaneseq
    %v3319 = vshrl.u32 %v3318, 7
    %v3320 = vsub.s32 %v2978, %v3319
    %v3321 = vrot.slane %v2421, %v3320
    %v3322 = vsel %vm2983, %v3321, %v3317
    %v3323 = vlaneseq
    %v3324 = vshrl.u32 %v3323, 7
    %v3325 = vsub.s32 %v2985, %v3324
    %v3326 = vrot.slane %v2422, %v3325
    %v3327 = vsel %vm2990, %v3326, %v3322
    %v3328 = vlaneseq
    %v3329 = vshrl.u32 %v3328, 7
    %v3330 = vsub.s32 %v2992, %v3329
    %v3331 = vrot.slane %v2423, %v3330
    %v3332 = vsel %vm2997, %v3331, %v3327
    %v3333 = vlaneseq
    %v3334 = vshrl.u32 %v3333, 7
    %v3335 = vsub.s32 %v2999, %v3334
    %v3336 = vrot.slane %v2424, %v3335
    %v3337 = vsel %vm3004, %v3336, %v3332
    %v3338 = vlaneseq
    %v3339 = vshrl.u32 %v3338, 7
    %v3340 = vsub.s32 %v3006, %v3339
    %v3341 = vrot.slane %v2425, %v3340
    %v3342 = vsel %vm3011, %v3341, %v3337
    %v3343 = vlaneseq
    %v3344 = vshrl.u32 %v3343, 7
    %v3345 = vsub.s32 %v3013, %v3344
    %v3346 = vrot.slane %v2426, %v3345
    %v3347 = vsel %vm3018, %v3346, %v3342
    %v3348 = vlaneseq
    %v3349 = vshrl.u32 %v3348, 7
    %v3350 = vsub.s32 %v3020, %v3349
    %v3351 = vrot.slane %v2427, %v3350
    %v3352 = vsel %vm3025, %v3351, %v3347
    %v3353 = vlaneseq
    %v3354 = vshrl.u32 %v3353, 7
    %v3355 = vsub.s32 %v3027, %v3354
    %v3356 = vrot.slane %v2428, %v3355
    %v3357 = vsel %vm3032, %v3356, %v3352
    %v3358 = vlaneseq
    %v3359 = vshrl.u32 %v3358, 7
    %v3360 = vsub.s32 %v3034, %v3359
    %v3361 = vrot.slane %v2429, %v3360
    %v3362 = vsel %vm3039, %v3361, %v3357
    %v3363 = vlaneseq
    %v3364 = vshrl.u32 %v3363, 7
    %v3365 = vsub.s32 %v3041, %v3364
    %v3366 = vrot.slane %v2430, %v3365
    %v3367 = vsel %vm3046, %v3366, %v3362
    %v3368 = vlaneseq
    %v3369 = vshrl.u32 %v3368, 7
    %v3370 = vsub.s32 %v3048, %v3369
    %v3371 = vrot.slane %v2431, %v3370
    %v3372 = vsel %vm3053, %v3371, %v3367
    %v3373 = vlaneseq
    %v3374 = vshrl.u32 %v3373, 7
    %v3375 = vsub.s32 %v3055, %v3374
    %v3376 = vrot.slane %v2432, %v3375
    %v3377 = vsel %vm3060, %v3376, %v3372
    %v3378 = vlaneseq
    %v3379 = vshrl.u32 %v3378, 7
    %v3380 = vsub.s32 %v2952, %v3379
    %v3381 = vrot.slane %v2433, %v3380
    %v3382 = vlaneseq
    %v3383 = vshrl.u32 %v3382, 7
    %v3384 = vsub.s32 %v2957, %v3383
    %v3385 = vrot.slane %v2434, %v3384
    %v3386 = vsel %vm2962, %v3385, %v3381
    %v3387 = vlaneseq
    %v3388 = vshrl.u32 %v3387, 7
    %v3389 = vsub.s32 %v2964, %v3388
    %v3390 = vrot.slane %v2435, %v3389
    %v3391 = vsel %vm2969, %v3390, %v3386
    %v3392 = vlaneseq
    %v3393 = vshrl.u32 %v3392, 7
    %v3394 = vsub.s32 %v2971, %v3393
    %v3395 = vrot.slane %v2436, %v3394
    %v3396 = vsel %vm2976, %v3395, %v3391
    %v3397 = vlaneseq
    %v3398 = vshrl.u32 %v3397, 7
    %v3399 = vsub.s32 %v2978, %v3398
    %v3400 = vrot.slane %v2437, %v3399
    %v3401 = vsel %vm2983, %v3400, %v3396
    %v3402 = vlaneseq
    %v3403 = vshrl.u32 %v3402, 7
    %v3404 = vsub.s32 %v2985, %v3403
    %v3405 = vrot.slane %v2438, %v3404
    %v3406 = vsel %vm2990, %v3405, %v3401
    %v3407 = vlaneseq
    %v3408 = vshrl.u32 %v3407, 7
    %v3409 = vsub.s32 %v2992, %v3408
    %v3410 = vrot.slane %v2439, %v3409
    %v3411 = vsel %vm2997, %v3410, %v3406
    %v3412 = vlaneseq
    %v3413 = vshrl.u32 %v3412, 7
    %v3414 = vsub.s32 %v2999, %v3413
    %v3415 = vrot.slane %v2440, %v3414
    %v3416 = vsel %vm3004, %v3415, %v3411
    %v3417 = vlaneseq
    %v3418 = vshrl.u32 %v3417, 7
    %v3419 = vsub.s32 %v3006, %v3418
    %v3420 = vrot.slane %v2441, %v3419
    %v3421 = vsel %vm3011, %v3420, %v3416
    %v3422 = vlaneseq
    %v3423 = vshrl.u32 %v3422, 7
    %v3424 = vsub.s32 %v3013, %v3423
    %v3425 = vrot.slane %v2442, %v3424
    %v3426 = vsel %vm3018, %v3425, %v3421
    %v3427 = vlaneseq
    %v3428 = vshrl.u32 %v3427, 7
    %v3429 = vsub.s32 %v3020, %v3428
    %v3430 = vrot.slane %v2443, %v3429
    %v3431 = vsel %vm3025, %v3430, %v3426
    %v3432 = vlaneseq
    %v3433 = vshrl.u32 %v3432, 7
    %v3434 = vsub.s32 %v3027, %v3433
    %v3435 = vrot.slane %v2444, %v3434
    %v3436 = vsel %vm3032, %v3435, %v3431
    %v3437 = vlaneseq
    %v3438 = vshrl.u32 %v3437, 7
    %v3439 = vsub.s32 %v3034, %v3438
    %v3440 = vrot.slane %v2445, %v3439
    %v3441 = vsel %vm3039, %v3440, %v3436
    %v3442 = vlaneseq
    %v3443 = vshrl.u32 %v3442, 7
    %v3444 = vsub.s32 %v3041, %v3443
    %v3445 = vrot.slane %v2446, %v3444
    %v3446 = vsel %vm3046, %v3445, %v3441
    %v3447 = vlaneseq
    %v3448 = vshrl.u32 %v3447, 7
    %v3449 = vsub.s32 %v3048, %v3448
    %v3450 = vrot.slane %v2447, %v3449
    %v3451 = vsel %vm3053, %v3450, %v3446
    %v3452 = vlaneseq
    %v3453 = vshrl.u32 %v3452, 7
    %v3454 = vsub.s32 %v3055, %v3453
    %v3455 = vrot.slane %v2448, %v3454
    %v3456 = vsel %vm3060, %v3455, %v3451
    %v3457 = vlaneseq
    %v3458 = vshrl.u32 %v3457, 7
    %v3459 = vsub.s32 %v2952, %v3458
    %v3460 = vrot.slane %v2449, %v3459
    %v3461 = vlaneseq
    %v3462 = vshrl.u32 %v3461, 7
    %v3463 = vsub.s32 %v2957, %v3462
    %v3464 = vrot.slane %v2450, %v3463
    %v3465 = vsel %vm2962, %v3464, %v3460
    %v3466 = vlaneseq
    %v3467 = vshrl.u32 %v3466, 7
    %v3468 = vsub.s32 %v2964, %v3467
    %v3469 = vrot.slane %v2451, %v3468
    %v3470 = vsel %vm2969, %v3469, %v3465
    %v3471 = vlaneseq
    %v3472 = vshrl.u32 %v3471, 7
    %v3473 = vsub.s32 %v2971, %v3472
    %v3474 = vrot.slane %v2452, %v3473
    %v3475 = vsel %vm2976, %v3474, %v3470
    %v3476 = vlaneseq
    %v3477 = vshrl.u32 %v3476, 7
    %v3478 = vsub.s32 %v2978, %v3477
    %v3479 = vrot.slane %v2453, %v3478
    %v3480 = vsel %vm2983, %v3479, %v3475
    %v3481 = vlaneseq
    %v3482 = vshrl.u32 %v3481, 7
    %v3483 = vsub.s32 %v2985, %v3482
    %v3484 = vrot.slane %v2454, %v3483
    %v3485 = vsel %vm2990, %v3484, %v3480
    %v3486 = vlaneseq
    %v3487 = vshrl.u32 %v3486, 7
    %v3488 = vsub.s32 %v2992, %v3487
    %v3489 = vrot.slane %v2455, %v3488
    %v3490 = vsel %vm2997, %v3489, %v3485
    %v3491 = vlaneseq
    %v3492 = vshrl.u32 %v3491, 7
    %v3493 = vsub.s32 %v2999, %v3492
    %v3494 = vrot.slane %v2456, %v3493
    %v3495 = vsel %vm3004, %v3494, %v3490
    %v3496 = vlaneseq
    %v3497 = vshrl.u32 %v3496, 7
    %v3498 = vsub.s32 %v3006, %v3497
    %v3499 = vrot.slane %v2457, %v3498
    %v3500 = vsel %vm3011, %v3499, %v3495
    %v3501 = vlaneseq
    %v3502 = vshrl.u32 %v3501, 7
    %v3503 = vsub.s32 %v3013, %v3502
    %v3504 = vrot.slane %v2458, %v3503
    %v3505 = vsel %vm3018, %v3504, %v3500
    %v3506 = vlaneseq
    %v3507 = vshrl.u32 %v3506, 7
    %v3508 = vsub.s32 %v3020, %v3507
    %v3509 = vrot.slane %v2459, %v3508
    %v3510 = vsel %vm3025, %v3509, %v3505
    %v3511 = vlaneseq
    %v3512 = vshrl.u32 %v3511, 7
    %v3513 = vsub.s32 %v3027, %v3512
    %v3514 = vrot.slane %v2460, %v3513
    %v3515 = vsel %vm3032, %v3514, %v3510
    %v3516 = vlaneseq
    %v3517 = vshrl.u32 %v3516, 7
    %v3518 = vsub.s32 %v3034, %v3517
    %v3519 = vrot.slane %v2461, %v3518
    %v3520 = vsel %vm3039, %v3519, %v3515
    %v3521 = vlaneseq
    %v3522 = vshrl.u32 %v3521, 7
    %v3523 = vsub.s32 %v3041, %v3522
    %v3524 = vrot.slane %v2462, %v3523
    %v3525 = vsel %vm3046, %v3524, %v3520
    %v3526 = vlaneseq
    %v3527 = vshrl.u32 %v3526, 7
    %v3528 = vsub.s32 %v3048, %v3527
    %v3529 = vrot.slane %v2463, %v3528
    %v3530 = vsel %vm3053, %v3529, %v3525
    %v3531 = vlaneseq
    %v3532 = vshrl.u32 %v3531, 7
    %v3533 = vsub.s32 %v3055, %v3532
    %v3534 = vrot.slane %v2464, %v3533
    %v3535 = vsel %vm3060, %v3534, %v3530
    %v3536 = vlaneseq
    %v3537 = vshrl.u32 %v3536, 7
    %v3538 = vsub.s32 %v2952, %v3537
    %v3539 = vrot.slane %v2465, %v3538
    %v3540 = vlaneseq
    %v3541 = vshrl.u32 %v3540, 7
    %v3542 = vsub.s32 %v2957, %v3541
    %v3543 = vrot.slane %v2466, %v3542
    %v3544 = vsel %vm2962, %v3543, %v3539
    %v3545 = vlaneseq
    %v3546 = vshrl.u32 %v3545, 7
    %v3547 = vsub.s32 %v2964, %v3546
    %v3548 = vrot.slane %v2467, %v3547
    %v3549 = vsel %vm2969, %v3548, %v3544
    %v3550 = vlaneseq
    %v3551 = vshrl.u32 %v3550, 7
    %v3552 = vsub.s32 %v2971, %v3551
    %v3553 = vrot.slane %v2468, %v3552
    %v3554 = vsel %vm2976, %v3553, %v3549
    %v3555 = vlaneseq
    %v3556 = vshrl.u32 %v3555, 7
    %v3557 = vsub.s32 %v2978, %v3556
    %v3558 = vrot.slane %v2469, %v3557
    %v3559 = vsel %vm2983, %v3558, %v3554
    %v3560 = vlaneseq
    %v3561 = vshrl.u32 %v3560, 7
    %v3562 = vsub.s32 %v2985, %v3561
    %v3563 = vrot.slane %v2470, %v3562
    %v3564 = vsel %vm2990, %v3563, %v3559
    %v3565 = vlaneseq
    %v3566 = vshrl.u32 %v3565, 7
    %v3567 = vsub.s32 %v2992, %v3566
    %v3568 = vrot.slane %v2471, %v3567
    %v3569 = vsel %vm2997, %v3568, %v3564
    %v3570 = vlaneseq
    %v3571 = vshrl.u32 %v3570, 7
    %v3572 = vsub.s32 %v2999, %v3571
    %v3573 = vrot.slane %v2472, %v3572
    %v3574 = vsel %vm3004, %v3573, %v3569
    %v3575 = vlaneseq
    %v3576 = vshrl.u32 %v3575, 7
    %v3577 = vsub.s32 %v3006, %v3576
    %v3578 = vrot.slane %v2473, %v3577
    %v3579 = vsel %vm3011, %v3578, %v3574
    %v3580 = vlaneseq
    %v3581 = vshrl.u32 %v3580, 7
    %v3582 = vsub.s32 %v3013, %v3581
    %v3583 = vrot.slane %v2474, %v3582
    %v3584 = vsel %vm3018, %v3583, %v3579
    %v3585 = vlaneseq
    %v3586 = vshrl.u32 %v3585, 7
    %v3587 = vsub.s32 %v3020, %v3586
    %v3588 = vrot.slane %v2475, %v3587
    %v3589 = vsel %vm3025, %v3588, %v3584
    %v3590 = vlaneseq
    %v3591 = vshrl.u32 %v3590, 7
    %v3592 = vsub.s32 %v3027, %v3591
    %v3593 = vrot.slane %v2476, %v3592
    %v3594 = vsel %vm3032, %v3593, %v3589
    %v3595 = vlaneseq
    %v3596 = vshrl.u32 %v3595, 7
    %v3597 = vsub.s32 %v3034, %v3596
    %v3598 = vrot.slane %v2477, %v3597
    %v3599 = vsel %vm3039, %v3598, %v3594
    %v3600 = vlaneseq
    %v3601 = vshrl.u32 %v3600, 7
    %v3602 = vsub.s32 %v3041, %v3601
    %v3603 = vrot.slane %v2478, %v3602
    %v3604 = vsel %vm3046, %v3603, %v3599
    %v3605 = vlaneseq
    %v3606 = vshrl.u32 %v3605, 7
    %v3607 = vsub.s32 %v3048, %v3606
    %v3608 = vrot.slane %v2479, %v3607
    %v3609 = vsel %vm3053, %v3608, %v3604
    %v3610 = vlaneseq
    %v3611 = vshrl.u32 %v3610, 7
    %v3612 = vsub.s32 %v3055, %v3611
    %v3613 = vrot.slane %v2480, %v3612
    %v3614 = vsel %vm3060, %v3613, %v3609
    %v3615 = vlaneseq
    %v3616 = vshrl.u32 %v3615, 7
    %v3617 = vsub.s32 %v2952, %v3616
    %v3618 = vrot.slane %v2481, %v3617
    %v3619 = vlaneseq
    %v3620 = vshrl.u32 %v3619, 7
    %v3621 = vsub.s32 %v2957, %v3620
    %v3622 = vrot.slane %v2482, %v3621
    %v3623 = vsel %vm2962, %v3622, %v3618
    %v3624 = vlaneseq
    %v3625 = vshrl.u32 %v3624, 7
    %v3626 = vsub.s32 %v2964, %v3625
    %v3627 = vrot.slane %v2483, %v3626
    %v3628 = vsel %vm2969, %v3627, %v3623
    %v3629 = vlaneseq
    %v3630 = vshrl.u32 %v3629, 7
    %v3631 = vsub.s32 %v2971, %v3630
    %v3632 = vrot.slane %v2484, %v3631
    %v3633 = vsel %vm2976, %v3632, %v3628
    %v3634 = vlaneseq
    %v3635 = vshrl.u32 %v3634, 7
    %v3636 = vsub.s32 %v2978, %v3635
    %v3637 = vrot.slane %v2485, %v3636
    %v3638 = vsel %vm2983, %v3637, %v3633
    %v3639 = vlaneseq
    %v3640 = vshrl.u32 %v3639, 7
    %v3641 = vsub.s32 %v2985, %v3640
    %v3642 = vrot.slane %v2486, %v3641
    %v3643 = vsel %vm2990, %v3642, %v3638
    %v3644 = vlaneseq
    %v3645 = vshrl.u32 %v3644, 7
    %v3646 = vsub.s32 %v2992, %v3645
    %v3647 = vrot.slane %v2487, %v3646
    %v3648 = vsel %vm2997, %v3647, %v3643
    %v3649 = vlaneseq
    %v3650 = vshrl.u32 %v3649, 7
    %v3651 = vsub.s32 %v2999, %v3650
    %v3652 = vrot.slane %v2488, %v3651
    %v3653 = vsel %vm3004, %v3652, %v3648
    %v3654 = vlaneseq
    %v3655 = vshrl.u32 %v3654, 7
    %v3656 = vsub.s32 %v3006, %v3655
    %v3657 = vrot.slane %v2489, %v3656
    %v3658 = vsel %vm3011, %v3657, %v3653
    %v3659 = vlaneseq
    %v3660 = vshrl.u32 %v3659, 7
    %v3661 = vsub.s32 %v3013, %v3660
    %v3662 = vrot.slane %v2490, %v3661
    %v3663 = vsel %vm3018, %v3662, %v3658
    %v3664 = vlaneseq
    %v3665 = vshrl.u32 %v3664, 7
    %v3666 = vsub.s32 %v3020, %v3665
    %v3667 = vrot.slane %v2491, %v3666
    %v3668 = vsel %vm3025, %v3667, %v3663
    %v3669 = vlaneseq
    %v3670 = vshrl.u32 %v3669, 7
    %v3671 = vsub.s32 %v3027, %v3670
    %v3672 = vrot.slane %v2492, %v3671
    %v3673 = vsel %vm3032, %v3672, %v3668
    %v3674 = vlaneseq
    %v3675 = vshrl.u32 %v3674, 7
    %v3676 = vsub.s32 %v3034, %v3675
    %v3677 = vrot.slane %v2493, %v3676
    %v3678 = vsel %vm3039, %v3677, %v3673
    %v3679 = vlaneseq
    %v3680 = vshrl.u32 %v3679, 7
    %v3681 = vsub.s32 %v3041, %v3680
    %v3682 = vrot.slane %v2494, %v3681
    %v3683 = vsel %vm3046, %v3682, %v3678
    %v3684 = vlaneseq
    %v3685 = vshrl.u32 %v3684, 7
    %v3686 = vsub.s32 %v3048, %v3685
    %v3687 = vrot.slane %v2495, %v3686
    %v3688 = vsel %vm3053, %v3687, %v3683
    %v3689 = vlaneseq
    %v3690 = vshrl.u32 %v3689, 7
    %v3691 = vsub.s32 %v3055, %v3690
    %v3692 = vrot.slane %v2496, %v3691
    %v3693 = vsel %vm3060, %v3692, %v3688
    %v3694 = vlaneseq
    %v3695 = vshrl.u32 %v3694, 7
    %v3696 = vsub.s32 %v2952, %v3695
    %v3697 = vrot.slane %v2497, %v3696
    %v3698 = vlaneseq
    %v3699 = vshrl.u32 %v3698, 7
    %v3700 = vsub.s32 %v2957, %v3699
    %v3701 = vrot.slane %v2498, %v3700
    %v3702 = vsel %vm2962, %v3701, %v3697
    %v3703 = vlaneseq
    %v3704 = vshrl.u32 %v3703, 7
    %v3705 = vsub.s32 %v2964, %v3704
    %v3706 = vrot.slane %v2499, %v3705
    %v3707 = vsel %vm2969, %v3706, %v3702
    %v3708 = vlaneseq
    %v3709 = vshrl.u32 %v3708, 7
    %v3710 = vsub.s32 %v2971, %v3709
    %v3711 = vrot.slane %v2500, %v3710
    %v3712 = vsel %vm2976, %v3711, %v3707
    %v3713 = vlaneseq
    %v3714 = vshrl.u32 %v3713, 7
    %v3715 = vsub.s32 %v2978, %v3714
    %v3716 = vrot.slane %v2501, %v3715
    %v3717 = vsel %vm2983, %v3716, %v3712
    %v3718 = vlaneseq
    %v3719 = vshrl.u32 %v3718, 7
    %v3720 = vsub.s32 %v2985, %v3719
    %v3721 = vrot.slane %v2502, %v3720
    %v3722 = vsel %vm2990, %v3721, %v3717
    %v3723 = vlaneseq
    %v3724 = vshrl.u32 %v3723, 7
    %v3725 = vsub.s32 %v2992, %v3724
    %v3726 = vrot.slane %v2503, %v3725
    %v3727 = vsel %vm2997, %v3726, %v3722
    %v3728 = vlaneseq
    %v3729 = vshrl.u32 %v3728, 7
    %v3730 = vsub.s32 %v2999, %v3729
    %v3731 = vrot.slane %v2504, %v3730
    %v3732 = vsel %vm3004, %v3731, %v3727
    %v3733 = vlaneseq
    %v3734 = vshrl.u32 %v3733, 7
    %v3735 = vsub.s32 %v3006, %v3734
    %v3736 = vrot.slane %v2505, %v3735
    %v3737 = vsel %vm3011, %v3736, %v3732
    %v3738 = vlaneseq
    %v3739 = vshrl.u32 %v3738, 7
    %v3740 = vsub.s32 %v3013, %v3739
    %v3741 = vrot.slane %v2506, %v3740
    %v3742 = vsel %vm3018, %v3741, %v3737
    %v3743 = vlaneseq
    %v3744 = vshrl.u32 %v3743, 7
    %v3745 = vsub.s32 %v3020, %v3744
    %v3746 = vrot.slane %v2507, %v3745
    %v3747 = vsel %vm3025, %v3746, %v3742
    %v3748 = vlaneseq
    %v3749 = vshrl.u32 %v3748, 7
    %v3750 = vsub.s32 %v3027, %v3749
    %v3751 = vrot.slane %v2508, %v3750
    %v3752 = vsel %vm3032, %v3751, %v3747
    %v3753 = vlaneseq
    %v3754 = vshrl.u32 %v3753, 7
    %v3755 = vsub.s32 %v3034, %v3754
    %v3756 = vrot.slane %v2509, %v3755
    %v3757 = vsel %vm3039, %v3756, %v3752
    %v3758 = vlaneseq
    %v3759 = vshrl.u32 %v3758, 7
    %v3760 = vsub.s32 %v3041, %v3759
    %v3761 = vrot.slane %v2510, %v3760
    %v3762 = vsel %vm3046, %v3761, %v3757
    %v3763 = vlaneseq
    %v3764 = vshrl.u32 %v3763, 7
    %v3765 = vsub.s32 %v3048, %v3764
    %v3766 = vrot.slane %v2511, %v3765
    %v3767 = vsel %vm3053, %v3766, %v3762
    %v3768 = vlaneseq
    %v3769 = vshrl.u32 %v3768, 7
    %v3770 = vsub.s32 %v3055, %v3769
    %v3771 = vrot.slane %v2512, %v3770
    %v3772 = vsel %vm3060, %v3771, %v3767
    %v3773 = vlaneseq
    %v3774 = vshrl.u32 %v3773, 7
    %v3775 = vsub.s32 %v2952, %v3774
    %v3776 = vrot.slane %v2513, %v3775
    %v3777 = vlaneseq
    %v3778 = vshrl.u32 %v3777, 7
    %v3779 = vsub.s32 %v2957, %v3778
    %v3780 = vrot.slane %v2514, %v3779
    %v3781 = vsel %vm2962, %v3780, %v3776
    %v3782 = vlaneseq
    %v3783 = vshrl.u32 %v3782, 7
    %v3784 = vsub.s32 %v2964, %v3783
    %v3785 = vrot.slane %v2515, %v3784
    %v3786 = vsel %vm2969, %v3785, %v3781
    %v3787 = vlaneseq
    %v3788 = vshrl.u32 %v3787, 7
    %v3789 = vsub.s32 %v2971, %v3788
    %v3790 = vrot.slane %v2516, %v3789
    %v3791 = vsel %vm2976, %v3790, %v3786
    %v3792 = vlaneseq
    %v3793 = vshrl.u32 %v3792, 7
    %v3794 = vsub.s32 %v2978, %v3793
    %v3795 = vrot.slane %v2517, %v3794
    %v3796 = vsel %vm2983, %v3795, %v3791
    %v3797 = vlaneseq
    %v3798 = vshrl.u32 %v3797, 7
    %v3799 = vsub.s32 %v2985, %v3798
    %v3800 = vrot.slane %v2518, %v3799
    %v3801 = vsel %vm2990, %v3800, %v3796
    %v3802 = vlaneseq
    %v3803 = vshrl.u32 %v3802, 7
    %v3804 = vsub.s32 %v2992, %v3803
    %v3805 = vrot.slane %v2519, %v3804
    %v3806 = vsel %vm2997, %v3805, %v3801
    %v3807 = vlaneseq
    %v3808 = vshrl.u32 %v3807, 7
    %v3809 = vsub.s32 %v2999, %v3808
    %v3810 = vrot.slane %v2520, %v3809
    %v3811 = vsel %vm3004, %v3810, %v3806
    %v3812 = vlaneseq
    %v3813 = vshrl.u32 %v3812, 7
    %v3814 = vsub.s32 %v3006, %v3813
    %v3815 = vrot.slane %v2521, %v3814
    %v3816 = vsel %vm3011, %v3815, %v3811
    %v3817 = vlaneseq
    %v3818 = vshrl.u32 %v3817, 7
    %v3819 = vsub.s32 %v3013, %v3818
    %v3820 = vrot.slane %v2522, %v3819
    %v3821 = vsel %vm3018, %v3820, %v3816
    %v3822 = vlaneseq
    %v3823 = vshrl.u32 %v3822, 7
    %v3824 = vsub.s32 %v3020, %v3823
    %v3825 = vrot.slane %v2523, %v3824
    %v3826 = vsel %vm3025, %v3825, %v3821
    %v3827 = vlaneseq
    %v3828 = vshrl.u32 %v3827, 7
    %v3829 = vsub.s32 %v3027, %v3828
    %v3830 = vrot.slane %v2524, %v3829
    %v3831 = vsel %vm3032, %v3830, %v3826
    %v3832 = vlaneseq
    %v3833 = vshrl.u32 %v3832, 7
    %v3834 = vsub.s32 %v3034, %v3833
    %v3835 = vrot.slane %v2525, %v3834
    %v3836 = vsel %vm3039, %v3835, %v3831
    %v3837 = vlaneseq
    %v3838 = vshrl.u32 %v3837, 7
    %v3839 = vsub.s32 %v3041, %v3838
    %v3840 = vrot.slane %v2526, %v3839
    %v3841 = vsel %vm3046, %v3840, %v3836
    %v3842 = vlaneseq
    %v3843 = vshrl.u32 %v3842, 7
    %v3844 = vsub.s32 %v3048, %v3843
    %v3845 = vrot.slane %v2527, %v3844
    %v3846 = vsel %vm3053, %v3845, %v3841
    %v3847 = vlaneseq
    %v3848 = vshrl.u32 %v3847, 7
    %v3849 = vsub.s32 %v3055, %v3848
    %v3850 = vrot.slane %v2528, %v3849
    %v3851 = vsel %vm3060, %v3850, %v3846
    %v3852 = vlaneseq
    %v3853 = vshrl.u32 %v3852, 7
    %v3854 = vsub.s32 %v2952, %v3853
    %v3855 = vrot.slane %v2529, %v3854
    %v3856 = vlaneseq
    %v3857 = vshrl.u32 %v3856, 7
    %v3858 = vsub.s32 %v2957, %v3857
    %v3859 = vrot.slane %v2530, %v3858
    %v3860 = vsel %vm2962, %v3859, %v3855
    %v3861 = vlaneseq
    %v3862 = vshrl.u32 %v3861, 7
    %v3863 = vsub.s32 %v2964, %v3862
    %v3864 = vrot.slane %v2531, %v3863
    %v3865 = vsel %vm2969, %v3864, %v3860
    %v3866 = vlaneseq
    %v3867 = vshrl.u32 %v3866, 7
    %v3868 = vsub.s32 %v2971, %v3867
    %v3869 = vrot.slane %v2532, %v3868
    %v3870 = vsel %vm2976, %v3869, %v3865
    %v3871 = vlaneseq
    %v3872 = vshrl.u32 %v3871, 7
    %v3873 = vsub.s32 %v2978, %v3872
    %v3874 = vrot.slane %v2533, %v3873
    %v3875 = vsel %vm2983, %v3874, %v3870
    %v3876 = vlaneseq
    %v3877 = vshrl.u32 %v3876, 7
    %v3878 = vsub.s32 %v2985, %v3877
    %v3879 = vrot.slane %v2534, %v3878
    %v3880 = vsel %vm2990, %v3879, %v3875
    %v3881 = vlaneseq
    %v3882 = vshrl.u32 %v3881, 7
    %v3883 = vsub.s32 %v2992, %v3882
    %v3884 = vrot.slane %v2535, %v3883
    %v3885 = vsel %vm2997, %v3884, %v3880
    %v3886 = vlaneseq
    %v3887 = vshrl.u32 %v3886, 7
    %v3888 = vsub.s32 %v2999, %v3887
    %v3889 = vrot.slane %v2536, %v3888
    %v3890 = vsel %vm3004, %v3889, %v3885
    %v3891 = vlaneseq
    %v3892 = vshrl.u32 %v3891, 7
    %v3893 = vsub.s32 %v3006, %v3892
    %v3894 = vrot.slane %v2537, %v3893
    %v3895 = vsel %vm3011, %v3894, %v3890
    %v3896 = vlaneseq
    %v3897 = vshrl.u32 %v3896, 7
    %v3898 = vsub.s32 %v3013, %v3897
    %v3899 = vrot.slane %v2538, %v3898
    %v3900 = vsel %vm3018, %v3899, %v3895
    %v3901 = vlaneseq
    %v3902 = vshrl.u32 %v3901, 7
    %v3903 = vsub.s32 %v3020, %v3902
    %v3904 = vrot.slane %v2539, %v3903
    %v3905 = vsel %vm3025, %v3904, %v3900
    %v3906 = vlaneseq
    %v3907 = vshrl.u32 %v3906, 7
    %v3908 = vsub.s32 %v3027, %v3907
    %v3909 = vrot.slane %v2540, %v3908
    %v3910 = vsel %vm3032, %v3909, %v3905
    %v3911 = vlaneseq
    %v3912 = vshrl.u32 %v3911, 7
    %v3913 = vsub.s32 %v3034, %v3912
    %v3914 = vrot.slane %v2541, %v3913
    %v3915 = vsel %vm3039, %v3914, %v3910
    %v3916 = vlaneseq
    %v3917 = vshrl.u32 %v3916, 7
    %v3918 = vsub.s32 %v3041, %v3917
    %v3919 = vrot.slane %v2542, %v3918
    %v3920 = vsel %vm3046, %v3919, %v3915
    %v3921 = vlaneseq
    %v3922 = vshrl.u32 %v3921, 7
    %v3923 = vsub.s32 %v3048, %v3922
    %v3924 = vrot.slane %v2543, %v3923
    %v3925 = vsel %vm3053, %v3924, %v3920
    %v3926 = vlaneseq
    %v3927 = vshrl.u32 %v3926, 7
    %v3928 = vsub.s32 %v3055, %v3927
    %v3929 = vrot.slane %v2544, %v3928
    %v3930 = vsel %vm3060, %v3929, %v3925
    %v3931 = vlaneseq
    %v3932 = vshrl.u32 %v3931, 7
    %v3933 = vsub.s32 %v2952, %v3932
    %v3934 = vrot.slane %v2545, %v3933
    %v3935 = vlaneseq
    %v3936 = vshrl.u32 %v3935, 7
    %v3937 = vsub.s32 %v2957, %v3936
    %v3938 = vrot.slane %v2546, %v3937
    %v3939 = vsel %vm2962, %v3938, %v3934
    %v3940 = vlaneseq
    %v3941 = vshrl.u32 %v3940, 7
    %v3942 = vsub.s32 %v2964, %v3941
    %v3943 = vrot.slane %v2547, %v3942
    %v3944 = vsel %vm2969, %v3943, %v3939
    %v3945 = vlaneseq
    %v3946 = vshrl.u32 %v3945, 7
    %v3947 = vsub.s32 %v2971, %v3946
    %v3948 = vrot.slane %v2548, %v3947
    %v3949 = vsel %vm2976, %v3948, %v3944
    %v3950 = vlaneseq
    %v3951 = vshrl.u32 %v3950, 7
    %v3952 = vsub.s32 %v2978, %v3951
    %v3953 = vrot.slane %v2549, %v3952
    %v3954 = vsel %vm2983, %v3953, %v3949
    %v3955 = vlaneseq
    %v3956 = vshrl.u32 %v3955, 7
    %v3957 = vsub.s32 %v2985, %v3956
    %v3958 = vrot.slane %v2550, %v3957
    %v3959 = vsel %vm2990, %v3958, %v3954
    %v3960 = vlaneseq
    %v3961 = vshrl.u32 %v3960, 7
    %v3962 = vsub.s32 %v2992, %v3961
    %v3963 = vrot.slane %v2551, %v3962
    %v3964 = vsel %vm2997, %v3963, %v3959
    %v3965 = vlaneseq
    %v3966 = vshrl.u32 %v3965, 7
    %v3967 = vsub.s32 %v2999, %v3966
    %v3968 = vrot.slane %v2552, %v3967
    %v3969 = vsel %vm3004, %v3968, %v3964
    %v3970 = vlaneseq
    %v3971 = vshrl.u32 %v3970, 7
    %v3972 = vsub.s32 %v3006, %v3971
    %v3973 = vrot.slane %v2553, %v3972
    %v3974 = vsel %vm3011, %v3973, %v3969
    %v3975 = vlaneseq
    %v3976 = vshrl.u32 %v3975, 7
    %v3977 = vsub.s32 %v3013, %v3976
    %v3978 = vrot.slane %v2554, %v3977
    %v3979 = vsel %vm3018, %v3978, %v3974
    %v3980 = vlaneseq
    %v3981 = vshrl.u32 %v3980, 7
    %v3982 = vsub.s32 %v3020, %v3981
    %v3983 = vrot.slane %v2555, %v3982
    %v3984 = vsel %vm3025, %v3983, %v3979
    %v3985 = vlaneseq
    %v3986 = vshrl.u32 %v3985, 7
    %v3987 = vsub.s32 %v3027, %v3986
    %v3988 = vrot.slane %v2556, %v3987
    %v3989 = vsel %vm3032, %v3988, %v3984
    %v3990 = vlaneseq
    %v3991 = vshrl.u32 %v3990, 7
    %v3992 = vsub.s32 %v3034, %v3991
    %v3993 = vrot.slane %v2557, %v3992
    %v3994 = vsel %vm3039, %v3993, %v3989
    %v3995 = vlaneseq
    %v3996 = vshrl.u32 %v3995, 7
    %v3997 = vsub.s32 %v3041, %v3996
    %v3998 = vrot.slane %v2558, %v3997
    %v3999 = vsel %vm3046, %v3998, %v3994
    %v4000 = vlaneseq
    %v4001 = vshrl.u32 %v4000, 7
    %v4002 = vsub.s32 %v3048, %v4001
    %v4003 = vrot.slane %v2559, %v4002
    %v4004 = vsel %vm3053, %v4003, %v3999
    %v4005 = vlaneseq
    %v4006 = vshrl.u32 %v4005, 7
    %v4007 = vsub.s32 %v3055, %v4006
    %v4008 = vrot.slane %v2560, %v4007
    %v4009 = vsel %vm3060, %v4008, %v4004
    %v4010 = vlaneseq
    %v4011 = vshrl.u32 %v4010, 7
    %v4012 = vsub.s32 %v2952, %v4011
    %v4013 = vrot.slane %v2561, %v4012
    %v4014 = vlaneseq
    %v4015 = vshrl.u32 %v4014, 7
    %v4016 = vsub.s32 %v2957, %v4015
    %v4017 = vrot.slane %v2562, %v4016
    %v4018 = vsel %vm2962, %v4017, %v4013
    %v4019 = vlaneseq
    %v4020 = vshrl.u32 %v4019, 7
    %v4021 = vsub.s32 %v2964, %v4020
    %v4022 = vrot.slane %v2563, %v4021
    %v4023 = vsel %vm2969, %v4022, %v4018
    %v4024 = vlaneseq
    %v4025 = vshrl.u32 %v4024, 7
    %v4026 = vsub.s32 %v2971, %v4025
    %v4027 = vrot.slane %v2564, %v4026
    %v4028 = vsel %vm2976, %v4027, %v4023
    %v4029 = vlaneseq
    %v4030 = vshrl.u32 %v4029, 7
    %v4031 = vsub.s32 %v2978, %v4030
    %v4032 = vrot.slane %v2565, %v4031
    %v4033 = vsel %vm2983, %v4032, %v4028
    %v4034 = vlaneseq
    %v4035 = vshrl.u32 %v4034, 7
    %v4036 = vsub.s32 %v2985, %v4035
    %v4037 = vrot.slane %v2566, %v4036
    %v4038 = vsel %vm2990, %v4037, %v4033
    %v4039 = vlaneseq
    %v4040 = vshrl.u32 %v4039, 7
    %v4041 = vsub.s32 %v2992, %v4040
    %v4042 = vrot.slane %v2567, %v4041
    %v4043 = vsel %vm2997, %v4042, %v4038
    %v4044 = vlaneseq
    %v4045 = vshrl.u32 %v4044, 7
    %v4046 = vsub.s32 %v2999, %v4045
    %v4047 = vrot.slane %v2568, %v4046
    %v4048 = vsel %vm3004, %v4047, %v4043
    %v4049 = vlaneseq
    %v4050 = vshrl.u32 %v4049, 7
    %v4051 = vsub.s32 %v3006, %v4050
    %v4052 = vrot.slane %v2569, %v4051
    %v4053 = vsel %vm3011, %v4052, %v4048
    %v4054 = vlaneseq
    %v4055 = vshrl.u32 %v4054, 7
    %v4056 = vsub.s32 %v3013, %v4055
    %v4057 = vrot.slane %v2570, %v4056
    %v4058 = vsel %vm3018, %v4057, %v4053
    %v4059 = vlaneseq
    %v4060 = vshrl.u32 %v4059, 7
    %v4061 = vsub.s32 %v3020, %v4060
    %v4062 = vrot.slane %v2571, %v4061
    %v4063 = vsel %vm3025, %v4062, %v4058
    %v4064 = vlaneseq
    %v4065 = vshrl.u32 %v4064, 7
    %v4066 = vsub.s32 %v3027, %v4065
    %v4067 = vrot.slane %v2572, %v4066
    %v4068 = vsel %vm3032, %v4067, %v4063
    %v4069 = vlaneseq
    %v4070 = vshrl.u32 %v4069, 7
    %v4071 = vsub.s32 %v3034, %v4070
    %v4072 = vrot.slane %v2573, %v4071
    %v4073 = vsel %vm3039, %v4072, %v4068
    %v4074 = vlaneseq
    %v4075 = vshrl.u32 %v4074, 7
    %v4076 = vsub.s32 %v3041, %v4075
    %v4077 = vrot.slane %v2574, %v4076
    %v4078 = vsel %vm3046, %v4077, %v4073
    %v4079 = vlaneseq
    %v4080 = vshrl.u32 %v4079, 7
    %v4081 = vsub.s32 %v3048, %v4080
    %v4082 = vrot.slane %v2575, %v4081
    %v4083 = vsel %vm3053, %v4082, %v4078
    %v4084 = vlaneseq
    %v4085 = vshrl.u32 %v4084, 7
    %v4086 = vsub.s32 %v3055, %v4085
    %v4087 = vrot.slane %v2576, %v4086
    %v4088 = vsel %vm3060, %v4087, %v4083
    %v4089 = vlaneseq
    %v4090 = vshrl.u32 %v4089, 7
    %v4091 = vsub.s32 %v2952, %v4090
    %v4092 = vrot.slane %v2577, %v4091
    %v4093 = vlaneseq
    %v4094 = vshrl.u32 %v4093, 7
    %v4095 = vsub.s32 %v2957, %v4094
    %v4096 = vrot.slane %v2578, %v4095
    %v4097 = vsel %vm2962, %v4096, %v4092
    %v4098 = vlaneseq
    %v4099 = vshrl.u32 %v4098, 7
    %v4100 = vsub.s32 %v2964, %v4099
    %v4101 = vrot.slane %v2579, %v4100
    %v4102 = vsel %vm2969, %v4101, %v4097
    %v4103 = vlaneseq
    %v4104 = vshrl.u32 %v4103, 7
    %v4105 = vsub.s32 %v2971, %v4104
    %v4106 = vrot.slane %v2580, %v4105
    %v4107 = vsel %vm2976, %v4106, %v4102
    %v4108 = vlaneseq
    %v4109 = vshrl.u32 %v4108, 7
    %v4110 = vsub.s32 %v2978, %v4109
    %v4111 = vrot.slane %v2581, %v4110
    %v4112 = vsel %vm2983, %v4111, %v4107
    %v4113 = vlaneseq
    %v4114 = vshrl.u32 %v4113, 7
    %v4115 = vsub.s32 %v2985, %v4114
    %v4116 = vrot.slane %v2582, %v4115
    %v4117 = vsel %vm2990, %v4116, %v4112
    %v4118 = vlaneseq
    %v4119 = vshrl.u32 %v4118, 7
    %v4120 = vsub.s32 %v2992, %v4119
    %v4121 = vrot.slane %v2583, %v4120
    %v4122 = vsel %vm2997, %v4121, %v4117
    %v4123 = vlaneseq
    %v4124 = vshrl.u32 %v4123, 7
    %v4125 = vsub.s32 %v2999, %v4124
    %v4126 = vrot.slane %v2584, %v4125
    %v4127 = vsel %vm3004, %v4126, %v4122
    %v4128 = vlaneseq
    %v4129 = vshrl.u32 %v4128, 7
    %v4130 = vsub.s32 %v3006, %v4129
    %v4131 = vrot.slane %v2585, %v4130
    %v4132 = vsel %vm3011, %v4131, %v4127
    %v4133 = vlaneseq
    %v4134 = vshrl.u32 %v4133, 7
    %v4135 = vsub.s32 %v3013, %v4134
    %v4136 = vrot.slane %v2586, %v4135
    %v4137 = vsel %vm3018, %v4136, %v4132
    %v4138 = vlaneseq
    %v4139 = vshrl.u32 %v4138, 7
    %v4140 = vsub.s32 %v3020, %v4139
    %v4141 = vrot.slane %v2587, %v4140
    %v4142 = vsel %vm3025, %v4141, %v4137
    %v4143 = vlaneseq
    %v4144 = vshrl.u32 %v4143, 7
    %v4145 = vsub.s32 %v3027, %v4144
    %v4146 = vrot.slane %v2588, %v4145
    %v4147 = vsel %vm3032, %v4146, %v4142
    %v4148 = vlaneseq
    %v4149 = vshrl.u32 %v4148, 7
    %v4150 = vsub.s32 %v3034, %v4149
    %v4151 = vrot.slane %v2589, %v4150
    %v4152 = vsel %vm3039, %v4151, %v4147
    %v4153 = vlaneseq
    %v4154 = vshrl.u32 %v4153, 7
    %v4155 = vsub.s32 %v3041, %v4154
    %v4156 = vrot.slane %v2590, %v4155
    %v4157 = vsel %vm3046, %v4156, %v4152
    %v4158 = vlaneseq
    %v4159 = vshrl.u32 %v4158, 7
    %v4160 = vsub.s32 %v3048, %v4159
    %v4161 = vrot.slane %v2591, %v4160
    %v4162 = vsel %vm3053, %v4161, %v4157
    %v4163 = vlaneseq
    %v4164 = vshrl.u32 %v4163, 7
    %v4165 = vsub.s32 %v3055, %v4164
    %v4166 = vrot.slane %v2592, %v4165
    %v4167 = vsel %vm3060, %v4166, %v4162
    %v4168 = vlaneseq
    %v4169 = vshrl.u32 %v4168, 7
    %v4170 = vsub.s32 %v2952, %v4169
    %v4171 = vrot.slane %v2593, %v4170
    %v4172 = vlaneseq
    %v4173 = vshrl.u32 %v4172, 7
    %v4174 = vsub.s32 %v2957, %v4173
    %v4175 = vrot.slane %v2594, %v4174
    %v4176 = vsel %vm2962, %v4175, %v4171
    %v4177 = vlaneseq
    %v4178 = vshrl.u32 %v4177, 7
    %v4179 = vsub.s32 %v2964, %v4178
    %v4180 = vrot.slane %v2595, %v4179
    %v4181 = vsel %vm2969, %v4180, %v4176
    %v4182 = vlaneseq
    %v4183 = vshrl.u32 %v4182, 7
    %v4184 = vsub.s32 %v2971, %v4183
    %v4185 = vrot.slane %v2596, %v4184
    %v4186 = vsel %vm2976, %v4185, %v4181
    %v4187 = vlaneseq
    %v4188 = vshrl.u32 %v4187, 7
    %v4189 = vsub.s32 %v2978, %v4188
    %v4190 = vrot.slane %v2597, %v4189
    %v4191 = vsel %vm2983, %v4190, %v4186
    %v4192 = vlaneseq
    %v4193 = vshrl.u32 %v4192, 7
    %v4194 = vsub.s32 %v2985, %v4193
    %v4195 = vrot.slane %v2598, %v4194
    %v4196 = vsel %vm2990, %v4195, %v4191
    %v4197 = vlaneseq
    %v4198 = vshrl.u32 %v4197, 7
    %v4199 = vsub.s32 %v2992, %v4198
    %v4200 = vrot.slane %v2599, %v4199
    %v4201 = vsel %vm2997, %v4200, %v4196
    %v4202 = vlaneseq
    %v4203 = vshrl.u32 %v4202, 7
    %v4204 = vsub.s32 %v2999, %v4203
    %v4205 = vrot.slane %v2600, %v4204
    %v4206 = vsel %vm3004, %v4205, %v4201
    %v4207 = vlaneseq
    %v4208 = vshrl.u32 %v4207, 7
    %v4209 = vsub.s32 %v3006, %v4208
    %v4210 = vrot.slane %v2601, %v4209
    %v4211 = vsel %vm3011, %v4210, %v4206
    %v4212 = vlaneseq
    %v4213 = vshrl.u32 %v4212, 7
    %v4214 = vsub.s32 %v3013, %v4213
    %v4215 = vrot.slane %v2602, %v4214
    %v4216 = vsel %vm3018, %v4215, %v4211
    %v4217 = vlaneseq
    %v4218 = vshrl.u32 %v4217, 7
    %v4219 = vsub.s32 %v3020, %v4218
    %v4220 = vrot.slane %v2603, %v4219
    %v4221 = vsel %vm3025, %v4220, %v4216
    %v4222 = vlaneseq
    %v4223 = vshrl.u32 %v4222, 7
    %v4224 = vsub.s32 %v3027, %v4223
    %v4225 = vrot.slane %v2604, %v4224
    %v4226 = vsel %vm3032, %v4225, %v4221
    %v4227 = vlaneseq
    %v4228 = vshrl.u32 %v4227, 7
    %v4229 = vsub.s32 %v3034, %v4228
    %v4230 = vrot.slane %v2605, %v4229
    %v4231 = vsel %vm3039, %v4230, %v4226
    %v4232 = vlaneseq
    %v4233 = vshrl.u32 %v4232, 7
    %v4234 = vsub.s32 %v3041, %v4233
    %v4235 = vrot.slane %v2606, %v4234
    %v4236 = vsel %vm3046, %v4235, %v4231
    %v4237 = vlaneseq
    %v4238 = vshrl.u32 %v4237, 7
    %v4239 = vsub.s32 %v3048, %v4238
    %v4240 = vrot.slane %v2607, %v4239
    %v4241 = vsel %vm3053, %v4240, %v4236
    %v4242 = vlaneseq
    %v4243 = vshrl.u32 %v4242, 7
    %v4244 = vsub.s32 %v3055, %v4243
    %v4245 = vrot.slane %v2608, %v4244
    %v4246 = vsel %vm3060, %v4245, %v4241
    %vm4247 = vcmask 1041409
    %v4248 = vsel %vm4247, %v3140, %v3061
    %vm4249 = vcmask 1042434
    %v4250 = vsel %vm4249, %v3219, %v4248
    %vm4251 = vcmask 1043459
    %v4252 = vsel %vm4251, %v3298, %v4250
    %vm4253 = vcmask 1044484
    %v4254 = vsel %vm4253, %v3377, %v4252
    %vm4255 = vcmask 1045509
    %v4256 = vsel %vm4255, %v3456, %v4254
    %vm4257 = vcmask 1046534
    %v4258 = vsel %vm4257, %v3535, %v4256
    %vm4259 = vcmask 1047559
    %v4260 = vsel %vm4259, %v3614, %v4258
    %v4261 = vsel %vm4247, %v3772, %v3693
    %v4262 = vsel %vm4249, %v3851, %v4261
    %v4263 = vsel %vm4251, %v3930, %v4262
    %v4264 = vsel %vm4253, %v4009, %v4263
    %v4265 = vsel %vm4255, %v4088, %v4264
    %v4266 = vsel %vm4257, %v4167, %v4265
    %v4267 = vsel %vm4259, %v4246, %v4266
    %4270 = vmatprep.subr.mxu0 %v2610
    %4271 = vmatpush1.msra.mxu0 %v2609
    %4272 = vmatprep.subr.mxu0 %v2614
    %4273 = vmatpush1.msra.mxu0 %v2613
    %4274 = vmatprep.subr.mxu0 %v2618
    %4275 = vmatpush1.msra.mxu0 %v2617
    %4276 = vmatprep.subr.mxu0 %v2622
    %4277 = vmatpush1.msra.mxu0 %v2621
    %4278 = vmatprep.subr.mxu0 %v2626
    %4279 = vmatpush1.msra.mxu0 %v2625
    %4280 = vmatprep.subr.mxu0 %v2630
    %4281 = vmatpush1.msra.mxu0 %v2629
    %4282 = vmatprep.subr.mxu0 %v2634
    %4283 = vmatpush1.msra.mxu0 %v2633
    %4284 = vmatprep.subr.mxu0 %v2638
    %4285 = vmatpush1.msra.mxu0 %v2637
    %4286 = vmatprep.subr.mxu0 %v2642
    %4287 = vmatpush1.msra.mxu0 %v2641
    %4288 = vmatprep.subr.mxu0 %v2646
    %4289 = vmatpush1.msra.mxu0 %v2645
    %4290 = vmatprep.subr.mxu0 %v2650
    %4291 = vmatpush1.msra.mxu0 %v2649
    %4292 = vmatprep.subr.mxu0 %v2654
    %4293 = vmatpush1.msra.mxu0 %v2653
    %4294 = vmatprep.subr.mxu0 %v2658
    %4295 = vmatpush1.msra.mxu0 %v2657
    %4296 = vmatprep.subr.mxu0 %v2662
    %4297 = vmatpush1.msra.mxu0 %v2661
    %4298 = vmatprep.subr.mxu0 %v2666
    %4299 = vmatpush1.msra.mxu0 %v2665
    %4300 = vmatprep.subr.mxu0 %v2670
    %4301 = vmatpush1.msra.mxu0 %v2669
    %4302 = vmatprep.subr.mxu0 0.0
    %4303 = vmatpush1.msra.mxu0 0.0
    %4304 = vmatprep.subr.mxu0 0.0
    %4305 = vmatpush1.msra.mxu0 0.0
    %4306 = vmatprep.subr.mxu0 0.0
    %4307 = vmatpush1.msra.mxu0 0.0
    %4308 = vmatprep.subr.mxu0 0.0
    %4309 = vmatpush1.msra.mxu0 0.0
    %4310 = vmatprep.subr.mxu0 0.0
    %4311 = vmatpush1.msra.mxu0 0.0
    %4312 = vmatprep.subr.mxu0 0.0
    %4313 = vmatpush1.msra.mxu0 0.0
    %4314 = vmatprep.subr.mxu0 0.0
    %4315 = vmatpush1.msra.mxu0 0.0
    %4316 = vmatprep.subr.mxu0 0.0
    %4317 = vmatpush1.msra.mxu0 0.0
    %4318 = vmatprep.subr.mxu0 0.0
    %4319 = vmatpush1.msra.mxu0 0.0
    %4320 = vmatprep.subr.mxu0 0.0
    %4321 = vmatpush1.msra.mxu0 0.0
    %4322 = vmatprep.subr.mxu0 0.0
    %4323 = vmatpush1.msra.mxu0 0.0
    %4324 = vmatprep.subr.mxu0 0.0
    %4325 = vmatpush1.msra.mxu0 0.0
    %4326 = vmatprep.subr.mxu0 0.0
    %4327 = vmatpush1.msra.mxu0 0.0
    %4328 = vmatprep.subr.mxu0 0.0
    %4329 = vmatpush1.msra.mxu0 0.0
    %4330 = vmatprep.subr.mxu0 0.0
    %4331 = vmatpush1.msra.mxu0 0.0
    %4332 = vmatprep.subr.mxu0 0.0
    %4333 = vmatpush1.msra.mxu0 0.0
    %4334 = vmatprep.mubr.f32.mxu0 0.0
    %4335 = vmatmul.mubr.f32.gmra.mrb[0].mxu0 %v4260
    %v4336 = vpop.f32.mrb[0].mxu0
    %v4337 = vadd.f32 %v2678, %v4336
    %v4338 = vpop.f32.mrb[0].mxu0
    %v4339 = vadd.f32 %v2682, %v4338
    %4340 = vmatprep.mubr.f32.mxu0 0.0
    %4341 = vmatmul.mubr.f32.gmra.mrb[0].mxu0 %v4267
    %v4342 = vpop.f32.mrb[0].mxu0
    %v4343 = vadd.f32 %v2678, %v4342
    %v4344 = vpop.f32.mrb[0].mxu0
    %v4345 = vadd.f32 %v2682, %v4344
    %4346 = vdwg.mxu0
    %4347 = vmatprep.subr.mxu0 %v2612
    %4348 = vmatpush1.msra.mxu0 %v2611
    %4349 = vmatprep.subr.mxu0 %v2616
    %4350 = vmatpush1.msra.mxu0 %v2615
    %4351 = vmatprep.subr.mxu0 %v2620
    %4352 = vmatpush1.msra.mxu0 %v2619
    %4353 = vmatprep.subr.mxu0 %v2624
    %4354 = vmatpush1.msra.mxu0 %v2623
    %4355 = vmatprep.subr.mxu0 %v2628
    %4356 = vmatpush1.msra.mxu0 %v2627
    %4357 = vmatprep.subr.mxu0 %v2632
    %4358 = vmatpush1.msra.mxu0 %v2631
    %4359 = vmatprep.subr.mxu0 %v2636
    %4360 = vmatpush1.msra.mxu0 %v2635
    %4361 = vmatprep.subr.mxu0 %v2640
    %4362 = vmatpush1.msra.mxu0 %v2639
    %4363 = vmatprep.subr.mxu0 %v2644
    %4364 = vmatpush1.msra.mxu0 %v2643
    %4365 = vmatprep.subr.mxu0 %v2648
    %4366 = vmatpush1.msra.mxu0 %v2647
    %4367 = vmatprep.subr.mxu0 %v2652
    %4368 = vmatpush1.msra.mxu0 %v2651
    %4369 = vmatprep.subr.mxu0 %v2656
    %4370 = vmatpush1.msra.mxu0 %v2655
    %4371 = vmatprep.subr.mxu0 %v2660
    %4372 = vmatpush1.msra.mxu0 %v2659
    %4373 = vmatprep.subr.mxu0 %v2664
    %4374 = vmatpush1.msra.mxu0 %v2663
    %4375 = vmatprep.subr.mxu0 %v2668
    %4376 = vmatpush1.msra.mxu0 %v2667
    %4377 = vmatprep.subr.mxu0 %v2672
    %4378 = vmatpush1.msra.mxu0 %v2671
    %4379 = vmatprep.subr.mxu0 0.0
    %4380 = vmatpush1.msra.mxu0 0.0
    %4381 = vmatprep.subr.mxu0 0.0
    %4382 = vmatpush1.msra.mxu0 0.0
    %4383 = vmatprep.subr.mxu0 0.0
    %4384 = vmatpush1.msra.mxu0 0.0
    %4385 = vmatprep.subr.mxu0 0.0
    %4386 = vmatpush1.msra.mxu0 0.0
    %4387 = vmatprep.subr.mxu0 0.0
    %4388 = vmatpush1.msra.mxu0 0.0
    %4389 = vmatprep.subr.mxu0 0.0
    %4390 = vmatpush1.msra.mxu0 0.0
    %4391 = vmatprep.subr.mxu0 0.0
    %4392 = vmatpush1.msra.mxu0 0.0
    %4393 = vmatprep.subr.mxu0 0.0
    %4394 = vmatpush1.msra.mxu0 0.0
    %4395 = vmatprep.subr.mxu0 0.0
    %4396 = vmatpush1.msra.mxu0 0.0
    %4397 = vmatprep.subr.mxu0 0.0
    %4398 = vmatpush1.msra.mxu0 0.0
    %4399 = vmatprep.subr.mxu0 0.0
    %4400 = vmatpush1.msra.mxu0 0.0
    %4401 = vmatprep.subr.mxu0 0.0
    %4402 = vmatpush1.msra.mxu0 0.0
    %4403 = vmatprep.subr.mxu0 0.0
    %4404 = vmatpush1.msra.mxu0 0.0
    %4405 = vmatprep.subr.mxu0 0.0
    %4406 = vmatpush1.msra.mxu0 0.0
    %4407 = vmatprep.subr.mxu0 0.0
    %4408 = vmatpush1.msra.mxu0 0.0
    %4409 = vmatprep.subr.mxu0 0.0
    %4410 = vmatpush1.msra.mxu0 0.0
    %4411 = vmatprep.mubr.f32.mxu0 0.0
    %4412 = vmatmul.mubr.f32.gmra.mrb[0].mxu0 %v4260
    %v4413 = vpop.f32.mrb[0].mxu0
    %v4414 = vadd.f32 %v2686, %v4413
    %v4415 = vpop.f32.mrb[0].mxu0
    %v4416 = vadd.f32 %v2690, %v4415
    %4417 = vmatprep.mubr.f32.mxu0 0.0
    %4418 = vmatmul.mubr.f32.gmra.mrb[0].mxu0 %v4267
    %v4419 = vpop.f32.mrb[0].mxu0
    %v4420 = vadd.f32 %v2686, %v4419
    %v4421 = vpop.f32.mrb[0].mxu0
    %v4422 = vadd.f32 %v2690, %v4421
    %4423 = vdwg.mxu0
    %v4424 = vmax.f32 %v4337, 0.0
    %v4425 = vmax.f32 %v4339, 0.0
    %v4426 = vmax.f32 %v4414, 0.0
    %v4427 = vmax.f32 %v4416, 0.0
    %v4428 = vmax.f32 %v4343, 0.0
    %v4429 = vmax.f32 %v4345, 0.0
    %v4430 = vmax.f32 %v4420, 0.0
    %v4431 = vmax.f32 %v4422, 0.0
    %v4432 = vld [vmem:[%s5] sm:$0xff]
    %v4433 = vld [vmem:[%s5 + $0x8] sm:$0xff]
    %v4434 = vld [vmem:[%s5 + $0x10] sm:$0xff]
    %v4435 = vld [vmem:[%s5 + $0x18] sm:$0xff]
    %v4436 = vld [vmem:[%s5 + $0x20] sm:$0xff]
    %v4437 = vld [vmem:[%s5 + $0x28] sm:$0xff]
    %v4438 = vld [vmem:[%s5 + $0x30] sm:$0xff]
    %v4439 = vld [vmem:[%s5 + $0x38] sm:$0xff]
    %v4440 = vld [vmem:[%s5 + $0x40] sm:$0xff]
    %v4441 = vld [vmem:[%s5 + $0x48] sm:$0xff]
    %v4442 = vld [vmem:[%s5 + $0x50] sm:$0xff]
    %v4443 = vld [vmem:[%s5 + $0x58] sm:$0xff]
    %v4444 = vld [vmem:[%s5 + $0x60] sm:$0xff]
    %v4445 = vld [vmem:[%s5 + $0x68] sm:$0xff]
    %v4446 = vld [vmem:[%s5 + $0x70] sm:$0xff]
    %v4447 = vld [vmem:[%s5 + $0x78] sm:$0xff]
    %v4448 = vld [vmem:[%s5 + $0x80] sm:$0xff]
    %v4449 = vld [vmem:[%s5 + $0x88] sm:$0xff]
    %v4450 = vld [vmem:[%s5 + $0x90] sm:$0xff]
    %v4451 = vld [vmem:[%s5 + $0x98] sm:$0xff]
    %v4452 = vld [vmem:[%s5 + $0xa0] sm:$0xff]
    %v4453 = vld [vmem:[%s5 + $0xa8] sm:$0xff]
    %v4454 = vld [vmem:[%s5 + $0xb0] sm:$0xff]
    %v4455 = vld [vmem:[%s5 + $0xb8] sm:$0xff]
    %v4456 = vld [vmem:[%s5 + $0xc0] sm:$0xff]
    %v4457 = vld [vmem:[%s5 + $0xc8] sm:$0xff]
    %v4458 = vld [vmem:[%s5 + $0xd0] sm:$0xff]
    %v4459 = vld [vmem:[%s5 + $0xd8] sm:$0xff]
    %v4460 = vld [vmem:[%s5 + $0xe0] sm:$0xff]
    %v4461 = vld [vmem:[%s5 + $0xe8] sm:$0xff]
    %v4462 = vld [vmem:[%s5 + $0xf0] sm:$0xff]
    %v4463 = vld [vmem:[%s5 + $0xf8] sm:$0xff]
    %v4464 = vld [vmem:[%s5 + $0x100] sm:$0xff]
    %v4465 = vld [vmem:[%s5 + $0x108] sm:$0xff]
    %v4466 = vld [vmem:[%s5 + $0x110] sm:$0xff]
    %v4467 = vld [vmem:[%s5 + $0x118] sm:$0xff]
    %v4468 = vld [vmem:[%s5 + $0x120] sm:$0xff]
    %v4469 = vld [vmem:[%s5 + $0x128] sm:$0xff]
    %v4470 = vld [vmem:[%s5 + $0x130] sm:$0xff]
    %v4471 = vld [vmem:[%s5 + $0x138] sm:$0xff]
    %v4472 = vld [vmem:[%s5 + $0x140] sm:$0xff]
    %v4473 = vld [vmem:[%s5 + $0x148] sm:$0xff]
    %v4474 = vld [vmem:[%s5 + $0x150] sm:$0xff]
    %v4475 = vld [vmem:[%s5 + $0x158] sm:$0xff]
    %v4476 = vld [vmem:[%s5 + $0x160] sm:$0xff]
    %v4477 = vld [vmem:[%s5 + $0x168] sm:$0xff]
    %v4478 = vld [vmem:[%s5 + $0x170] sm:$0xff]
    %v4479 = vld [vmem:[%s5 + $0x178] sm:$0xff]
    %v4480 = vld [vmem:[%s5 + $0x180] sm:$0xff]
    %v4481 = vld [vmem:[%s5 + $0x188] sm:$0xff]
    %v4482 = vld [vmem:[%s5 + $0x190] sm:$0xff]
    %v4483 = vld [vmem:[%s5 + $0x198] sm:$0xff]
    %v4484 = vld [vmem:[%s5 + $0x1a0] sm:$0xff]
    %v4485 = vld [vmem:[%s5 + $0x1a8] sm:$0xff]
    %v4486 = vld [vmem:[%s5 + $0x1b0] sm:$0xff]
    %v4487 = vld [vmem:[%s5 + $0x1b8] sm:$0xff]
    %v4488 = vld [vmem:[%s5 + $0x1c0] sm:$0xff]
    %v4489 = vld [vmem:[%s5 + $0x1c8] sm:$0xff]
    %v4490 = vld [vmem:[%s5 + $0x1d0] sm:$0xff]
    %v4491 = vld [vmem:[%s5 + $0x1d8] sm:$0xff]
    %v4492 = vld [vmem:[%s5 + $0x1e0] sm:$0xff]
    %v4493 = vld [vmem:[%s5 + $0x1e8] sm:$0xff]
    %v4494 = vld [vmem:[%s5 + $0x1f0] sm:$0xff]
    %v4495 = vld [vmem:[%s5 + $0x1f8] sm:$0xff]
    %v4496 = vld [vmem:[%s6] sm:$0x1]
    %v4498 = vlaneseq
    %v4499 = vshrl.u32 %v4498, 7
    %v4500 = vsub.s32 0, %v4499
    %v4501 = vrot.slane %v4496, %v4500
    %4503 = vmatprep.subr.mxu0 0.0
    %4504 = vmatpush1.msra.mxu0 %v4432
    %4505 = vmatprep.subr.mxu0 0.0
    %4506 = vmatpush1.msra.mxu0 %v4433
    %4507 = vmatprep.subr.mxu0 0.0
    %4508 = vmatpush1.msra.mxu0 %v4434
    %4509 = vmatprep.subr.mxu0 0.0
    %4510 = vmatpush1.msra.mxu0 %v4435
    %4511 = vmatprep.subr.mxu0 0.0
    %4512 = vmatpush1.msra.mxu0 %v4436
    %4513 = vmatprep.subr.mxu0 0.0
    %4514 = vmatpush1.msra.mxu0 %v4437
    %4515 = vmatprep.subr.mxu0 0.0
    %4516 = vmatpush1.msra.mxu0 %v4438
    %4517 = vmatprep.subr.mxu0 0.0
    %4518 = vmatpush1.msra.mxu0 %v4439
    %4519 = vmatprep.subr.mxu0 0.0
    %4520 = vmatpush1.msra.mxu0 %v4440
    %4521 = vmatprep.subr.mxu0 0.0
    %4522 = vmatpush1.msra.mxu0 %v4441
    %4523 = vmatprep.subr.mxu0 0.0
    %4524 = vmatpush1.msra.mxu0 %v4442
    %4525 = vmatprep.subr.mxu0 0.0
    %4526 = vmatpush1.msra.mxu0 %v4443
    %4527 = vmatprep.subr.mxu0 0.0
    %4528 = vmatpush1.msra.mxu0 %v4444
    %4529 = vmatprep.subr.mxu0 0.0
    %4530 = vmatpush1.msra.mxu0 %v4445
    %4531 = vmatprep.subr.mxu0 0.0
    %4532 = vmatpush1.msra.mxu0 %v4446
    %4533 = vmatprep.subr.mxu0 0.0
    %4534 = vmatpush1.msra.mxu0 %v4447
    %4535 = vmatprep.subr.mxu0 0.0
    %4536 = vmatpush1.msra.mxu0 %v4448
    %4537 = vmatprep.subr.mxu0 0.0
    %4538 = vmatpush1.msra.mxu0 %v4449
    %4539 = vmatprep.subr.mxu0 0.0
    %4540 = vmatpush1.msra.mxu0 %v4450
    %4541 = vmatprep.subr.mxu0 0.0
    %4542 = vmatpush1.msra.mxu0 %v4451
    %4543 = vmatprep.subr.mxu0 0.0
    %4544 = vmatpush1.msra.mxu0 %v4452
    %4545 = vmatprep.subr.mxu0 0.0
    %4546 = vmatpush1.msra.mxu0 %v4453
    %4547 = vmatprep.subr.mxu0 0.0
    %4548 = vmatpush1.msra.mxu0 %v4454
    %4549 = vmatprep.subr.mxu0 0.0
    %4550 = vmatpush1.msra.mxu0 %v4455
    %4551 = vmatprep.subr.mxu0 0.0
    %4552 = vmatpush1.msra.mxu0 %v4456
    %4553 = vmatprep.subr.mxu0 0.0
    %4554 = vmatpush1.msra.mxu0 %v4457
    %4555 = vmatprep.subr.mxu0 0.0
    %4556 = vmatpush1.msra.mxu0 %v4458
    %4557 = vmatprep.subr.mxu0 0.0
    %4558 = vmatpush1.msra.mxu0 %v4459
    %4559 = vmatprep.subr.mxu0 0.0
    %4560 = vmatpush1.msra.mxu0 %v4460
    %4561 = vmatprep.subr.mxu0 0.0
    %4562 = vmatpush1.msra.mxu0 %v4461
    %4563 = vmatprep.subr.mxu0 0.0
    %4564 = vmatpush1.msra.mxu0 %v4462
    %4565 = vmatprep.subr.mxu0 0.0
    %4566 = vmatpush1.msra.mxu0 %v4463
    %4567 = vmatprep.mubr.f32.mxu0 %v4425
    %4568 = vmatmul.mubr.f32.gmra.mrb[0].mxu0 %v4424
    %v4569 = vpop.f32.mrb[0].mxu0
    %v4570 = vadd.f32 %v4501, %v4569
    %v4571 = vpop.f32.mrb[0].mxu0
    %4572 = vmatprep.mubr.f32.mxu0 %v4429
    %4573 = vmatmul.mubr.f32.gmra.mrb[0].mxu0 %v4428
    %v4574 = vpop.f32.mrb[0].mxu0
    %v4575 = vadd.f32 %v4501, %v4574
    %v4576 = vpop.f32.mrb[0].mxu0
    %4577 = vdwg.mxu0
    %4578 = vmatprep.subr.mxu0 0.0
    %4579 = vmatpush1.msra.mxu0 %v4464
    %4580 = vmatprep.subr.mxu0 0.0
    %4581 = vmatpush1.msra.mxu0 %v4465
    %4582 = vmatprep.subr.mxu0 0.0
    %4583 = vmatpush1.msra.mxu0 %v4466
    %4584 = vmatprep.subr.mxu0 0.0
    %4585 = vmatpush1.msra.mxu0 %v4467
    %4586 = vmatprep.subr.mxu0 0.0
    %4587 = vmatpush1.msra.mxu0 %v4468
    %4588 = vmatprep.subr.mxu0 0.0
    %4589 = vmatpush1.msra.mxu0 %v4469
    %4590 = vmatprep.subr.mxu0 0.0
    %4591 = vmatpush1.msra.mxu0 %v4470
    %4592 = vmatprep.subr.mxu0 0.0
    %4593 = vmatpush1.msra.mxu0 %v4471
    %4594 = vmatprep.subr.mxu0 0.0
    %4595 = vmatpush1.msra.mxu0 %v4472
    %4596 = vmatprep.subr.mxu0 0.0
    %4597 = vmatpush1.msra.mxu0 %v4473
    %4598 = vmatprep.subr.mxu0 0.0
    %4599 = vmatpush1.msra.mxu0 %v4474
    %4600 = vmatprep.subr.mxu0 0.0
    %4601 = vmatpush1.msra.mxu0 %v4475
    %4602 = vmatprep.subr.mxu0 0.0
    %4603 = vmatpush1.msra.mxu0 %v4476
    %4604 = vmatprep.subr.mxu0 0.0
    %4605 = vmatpush1.msra.mxu0 %v4477
    %4606 = vmatprep.subr.mxu0 0.0
    %4607 = vmatpush1.msra.mxu0 %v4478
    %4608 = vmatprep.subr.mxu0 0.0
    %4609 = vmatpush1.msra.mxu0 %v4479
    %4610 = vmatprep.subr.mxu0 0.0
    %4611 = vmatpush1.msra.mxu0 %v4480
    %4612 = vmatprep.subr.mxu0 0.0
    %4613 = vmatpush1.msra.mxu0 %v4481
    %4614 = vmatprep.subr.mxu0 0.0
    %4615 = vmatpush1.msra.mxu0 %v4482
    %4616 = vmatprep.subr.mxu0 0.0
    %4617 = vmatpush1.msra.mxu0 %v4483
    %4618 = vmatprep.subr.mxu0 0.0
    %4619 = vmatpush1.msra.mxu0 %v4484
    %4620 = vmatprep.subr.mxu0 0.0
    %4621 = vmatpush1.msra.mxu0 %v4485
    %4622 = vmatprep.subr.mxu0 0.0
    %4623 = vmatpush1.msra.mxu0 %v4486
    %4624 = vmatprep.subr.mxu0 0.0
    %4625 = vmatpush1.msra.mxu0 %v4487
    %4626 = vmatprep.subr.mxu0 0.0
    %4627 = vmatpush1.msra.mxu0 %v4488
    %4628 = vmatprep.subr.mxu0 0.0
    %4629 = vmatpush1.msra.mxu0 %v4489
    %4630 = vmatprep.subr.mxu0 0.0
    %4631 = vmatpush1.msra.mxu0 %v4490
    %4632 = vmatprep.subr.mxu0 0.0
    %4633 = vmatpush1.msra.mxu0 %v4491
    %4634 = vmatprep.subr.mxu0 0.0
    %4635 = vmatpush1.msra.mxu0 %v4492
    %4636 = vmatprep.subr.mxu0 0.0
    %4637 = vmatpush1.msra.mxu0 %v4493
    %4638 = vmatprep.subr.mxu0 0.0
    %4639 = vmatpush1.msra.mxu0 %v4494
    %4640 = vmatprep.subr.mxu0 0.0
    %4641 = vmatpush1.msra.mxu0 %v4495
    %4642 = vmatprep.mubr.f32.mxu0 %v4427
    %4643 = vmatmul.mubr.f32.gmra.mrb[0].mxu0 %v4426
    %v4644 = vpop.f32.mrb[0].mxu0
    %v4645 = vadd.f32 %v4570, %v4644
    %v4646 = vpop.f32.mrb[0].mxu0
    %4647 = vmatprep.mubr.f32.mxu0 %v4431
    %4648 = vmatmul.mubr.f32.gmra.mrb[0].mxu0 %v4430
    %v4649 = vpop.f32.mrb[0].mxu0
    %v4650 = vadd.f32 %v4575, %v4649
    %v4651 = vpop.f32.mrb[0].mxu0
    %4652 = vdwg.mxu0
    %v4653 = vmax.f32 %v4645, 0.0
    %v4654 = vmax.f32 %v4650, 0.0
    %v4655 = vld [vmem:[%s7] sm:$0xff]
    %v4656 = vld [vmem:[%s7 + $0x8] sm:$0xff]
    %v4657 = vld [vmem:[%s7 + $0x10] sm:$0xff]
    %v4658 = vld [vmem:[%s7 + $0x18] sm:$0xff]
    %v4659 = vld [vmem:[%s7 + $0x20] sm:$0xff]
    %v4660 = vld [vmem:[%s7 + $0x28] sm:$0xff]
    %v4661 = vld [vmem:[%s7 + $0x30] sm:$0xff]
    %v4662 = vld [vmem:[%s7 + $0x38] sm:$0xff]
    %v4663 = vld [vmem:[%s7 + $0x40] sm:$0xff]
    %v4664 = vld [vmem:[%s7 + $0x48] sm:$0xff]
    %v4665 = vld [vmem:[%s7 + $0x50] sm:$0xff]
    %v4666 = vld [vmem:[%s7 + $0x58] sm:$0xff]
    %v4667 = vld [vmem:[%s7 + $0x60] sm:$0xff]
    %v4668 = vld [vmem:[%s7 + $0x68] sm:$0xff]
    %v4669 = vld [vmem:[%s7 + $0x70] sm:$0xff]
    %v4670 = vld [vmem:[%s7 + $0x78] sm:$0xff]
    %v4671 = vld [vmem:[%s8] sm:$0x1]
    %v4673 = vlaneseq
    %v4674 = vshrl.u32 %v4673, 7
    %v4675 = vsub.s32 0, %v4674
    %v4676 = vrot.slane %v4671, %v4675
    %4678 = vmatprep.subr.mxu0 0.0
    %4679 = vmatpush1.msra.mxu0 %v4655
    %4680 = vmatprep.subr.mxu0 0.0
    %4681 = vmatpush1.msra.mxu0 %v4656
    %4682 = vmatprep.subr.mxu0 0.0
    %4683 = vmatpush1.msra.mxu0 %v4657
    %4684 = vmatprep.subr.mxu0 0.0
    %4685 = vmatpush1.msra.mxu0 %v4658
    %4686 = vmatprep.subr.mxu0 0.0
    %4687 = vmatpush1.msra.mxu0 %v4659
    %4688 = vmatprep.subr.mxu0 0.0
    %4689 = vmatpush1.msra.mxu0 %v4660
    %4690 = vmatprep.subr.mxu0 0.0
    %4691 = vmatpush1.msra.mxu0 %v4661
    %4692 = vmatprep.subr.mxu0 0.0
    %4693 = vmatpush1.msra.mxu0 %v4662
    %4694 = vmatprep.subr.mxu0 0.0
    %4695 = vmatpush1.msra.mxu0 %v4663
    %4696 = vmatprep.subr.mxu0 0.0
    %4697 = vmatpush1.msra.mxu0 %v4664
    %4698 = vmatprep.subr.mxu0 0.0
    %4699 = vmatpush1.msra.mxu0 %v4665
    %4700 = vmatprep.subr.mxu0 0.0
    %4701 = vmatpush1.msra.mxu0 %v4666
    %4702 = vmatprep.subr.mxu0 0.0
    %4703 = vmatpush1.msra.mxu0 %v4667
    %4704 = vmatprep.subr.mxu0 0.0
    %4705 = vmatpush1.msra.mxu0 %v4668
    %4706 = vmatprep.subr.mxu0 0.0
    %4707 = vmatpush1.msra.mxu0 %v4669
    %4708 = vmatprep.subr.mxu0 0.0
    %4709 = vmatpush1.msra.mxu0 %v4670
    %4710 = vmatprep.subr.mxu0 0.0
    %4711 = vmatpush1.msra.mxu0 0.0
    %4712 = vmatprep.subr.mxu0 0.0
    %4713 = vmatpush1.msra.mxu0 0.0
    %4714 = vmatprep.subr.mxu0 0.0
    %4715 = vmatpush1.msra.mxu0 0.0
    %4716 = vmatprep.subr.mxu0 0.0
    %4717 = vmatpush1.msra.mxu0 0.0
    %4718 = vmatprep.subr.mxu0 0.0
    %4719 = vmatpush1.msra.mxu0 0.0
    %4720 = vmatprep.subr.mxu0 0.0
    %4721 = vmatpush1.msra.mxu0 0.0
    %4722 = vmatprep.subr.mxu0 0.0
    %4723 = vmatpush1.msra.mxu0 0.0
    %4724 = vmatprep.subr.mxu0 0.0
    %4725 = vmatpush1.msra.mxu0 0.0
    %4726 = vmatprep.subr.mxu0 0.0
    %4727 = vmatpush1.msra.mxu0 0.0
    %4728 = vmatprep.subr.mxu0 0.0
    %4729 = vmatpush1.msra.mxu0 0.0
    %4730 = vmatprep.subr.mxu0 0.0
    %4731 = vmatpush1.msra.mxu0 0.0
    %4732 = vmatprep.subr.mxu0 0.0
    %4733 = vmatpush1.msra.mxu0 0.0
    %4734 = vmatprep.subr.mxu0 0.0
    %4735 = vmatpush1.msra.mxu0 0.0
    %4736 = vmatprep.subr.mxu0 0.0
    %4737 = vmatpush1.msra.mxu0 0.0
    %4738 = vmatprep.subr.mxu0 0.0
    %4739 = vmatpush1.msra.mxu0 0.0
    %4740 = vmatprep.subr.mxu0 0.0
    %4741 = vmatpush1.msra.mxu0 0.0
    %4742 = vmatprep.mubr.f32.mxu0 0.0
    %4743 = vmatmul.mubr.f32.gmra.mrb[0].mxu0 %v4653
    %v4744 = vpop.f32.mrb[0].mxu0
    %v4745 = vadd.f32 %v4676, %v4744
    %v4746 = vpop.f32.mrb[0].mxu0
    %4747 = vmatprep.mubr.f32.mxu0 0.0
    %4748 = vmatmul.mubr.f32.gmra.mrb[0].mxu0 %v4654
    %v4749 = vpop.f32.mrb[0].mxu0
    %v4750 = vadd.f32 %v4676, %v4749
    %v4751 = vpop.f32.mrb[0].mxu0
    %4752 = vdwg.mxu0
    %4753 = vst [vmem:[#allocation3] sm:$0xff] %v4745
    %4754 = vst [vmem:[#allocation3 + $0x8] sm:$0xff] %v4750
    // Predicated region
    $region38: #{tpu_custom_call.1} parent=1 // pred_check
      _
    $region39: #{tpu_custom_call.1} parent=1 // pred_check_branch
      %4756 = sbr.rel (0) target = $region41
    $region40: #{tpu_custom_call.1} parent=1 // pred_region
      %s4758 = ssub.s32 256, 256
      %4759 = vsyncadd [#allocation4], %s4758
      %s4760 = sshll.u32 [#allocation3], 4
      %s4761 = int_to_ptr.vmem [resolvable:$true] %s4760
      %4766 = dma.vmem_to_hbm [thread:$0]  %s4761, 256, %s9, [#allocation4], 128, 128, 8
    $region41: #{tpu_custom_call.1} parent=1 // pred_fallthru
      _
    // Predicated region
    $region42: #{tpu_custom_call.1} parent=1 // pred_check
      _
    $region43: #{tpu_custom_call.1} parent=1 // pred_check_branch
      %4768 = sbr.rel (0) target = $region45
    $region44: #{tpu_custom_call.1} parent=1 // pred_region
      %4769 = dma.done [#allocation4], 256
    $region45: #{tpu_custom_call.1} parent=1 // pred_fallthru
      _
    %4770 = vsyncpa [#allocation4], 1

</llo_original>
